<compile_context>
chip_gen: v6e
topology: v6e:2x2x1
jax: 0.10.0
libtpu: 0.0.40
codegen_flags: <defaults>
</compile_context>

<pallas_src>
import math

import jax
import jax.numpy as jnp
from jax.experimental import pallas as pl

# ----------------------------- hyper parameters ------------------------------
B = 2            # batch
S = 16           # token sequence length (BERT input)
V = 64           # vocab size
H = 32           # d_model / hidden size
NH = 4           # num heads
DH = H // NH     # head dim
DFF = 64         # feed-forward dim
BERT_LAYERS = 2  # synthetic "BERT" depth
ENC_BLOCKS = 2   # args.num_encoder_blocks
TYPE_DOC = 4     # args.type_doc_size
NSENT = 4        # number of sentences (len of clss / mask_cls)
MAXPOS = 32      # args.max_position_embeddings (<=512 branch)
NEG_INF = -1e9
SCALE = 1.0 / math.sqrt(DH)

# ------------------------ packed "tables" row offsets -------------------------
R_WORD = 0                     # word embeddings            (V rows)
R_TOK = R_WORD + V             # token-type embeddings      (2 rows)
R_DOC = R_TOK + 2              # doc-type embeddings        (TYPE_DOC rows)
R_POSB = R_DOC + TYPE_DOC      # BERT position embeddings   (S rows)
R_PE = R_POSB + S              # encoder sinusoidal PE      (NSENT rows)
R_EMB_G = R_PE + NSENT         # BERT embedding LN gamma
R_EMB_B = R_EMB_G + 1          # BERT embedding LN beta
R_NORM_G = R_EMB_B + 1         # post-BERT norm gamma (eps 1e-6)
R_NORM_B = R_NORM_G + 1
R_FIN_G = R_NORM_B + 1         # encoder final LN gamma (eps 1e-6)
R_FIN_B = R_FIN_G + 1
R_CLSW = R_FIN_B + 1           # classifier weight (as a (1,H) row)
R_CLSB = R_CLSW + 1            # classifier bias (broadcast into a row)
N_TABLE_ROWS = R_CLSB + 1      # 98


# ------------------- in-kernel building blocks (trace-time) ------------------
def _layernorm(x, g, b, eps):
    mu = jnp.mean(x, axis=-1, keepdims=True)
    var = jnp.mean(jnp.square(x - mu), axis=-1, keepdims=True)
    return (x - mu) * jax.lax.rsqrt(var + eps) * g + b


def _stack_rows(x, n):
    """Tile a 2-D value n times along the sublane (row) axis."""
    return jnp.concatenate([x] * n, axis=0)


def _head_mask(n_rows):
    """0/1 mask M[(h*n_rows + r), c] = 1 iff feature column c belongs to head h.

    Built only from iota + comparisons (no int division) so it lowers cleanly.
    """
    r = jax.lax.broadcasted_iota(jnp.int32, (NH * n_rows, H), 0)
    c = jax.lax.broadcasted_iota(jnp.int32, (NH * n_rows, H), 1)
    m = None
    for h in range(NH):
        mh = ((r >= h * n_rows) & (r < (h + 1) * n_rows) &
              (c >= h * DH) & (c < (h + 1) * DH))
        m = mh if m is None else (m | mh)
    return m.astype(jnp.float32)


def _attention(x, bias_rep, mq, mq_scaled, wqkv, bqkv, wo, bo, n_rows):
    """Packed multi-head attention: heads (and batch) stacked on sublanes.

    x: (n_rows, H) with n_rows = B*seq.  bias_rep: (NH*n_rows, n_rows) additive
    bias combining batch-block structure and the key padding mask.
    """
    qkv = jnp.dot(x, wqkv, preferred_element_type=jnp.float32) + bqkv   # (n, 3H)
    q = qkv[:, 0:H]
    k = qkv[:, H:2 * H]
    v = qkv[:, 2 * H:3 * H]
    # one MXU matmul for all heads / both batches: (NH*n, H) x (n, H)^T
    qh = _stack_rows(q, NH) * mq_scaled                                 # (NH*n, H)
    s = jax.lax.dot_general(qh, k, (((1,), (1,)), ((), ())),
                            preferred_element_type=jnp.float32) + bias_rep
    m = jnp.max(s, axis=-1, keepdims=True)
    e = jnp.exp(s - m)
    p = e * pl.reciprocal(jnp.sum(e, axis=-1, keepdims=True), approx=True)
    # one MXU matmul for P @ V, then mask to head-diagonal blocks and collapse
    o = jnp.dot(p, v, preferred_element_type=jnp.float32) * mq          # (NH*n, H)
    acc = o[0:n_rows, :]
    for h in range(1, NH):
        acc = acc + o[h * n_rows:(h + 1) * n_rows, :]                   # (n, H)
    return jnp.dot(acc, wo, preferred_element_type=jnp.float32) + bo


def _block(x, bias_rep, mq, mq_scaled, wqkv_ref, wo_ref, w1_ref, w2_ref,
           vec_ref, l, act, eps, n_rows):
    """Post-LN transformer block (norm_first=False); dropout = identity.

    vec_ref[l] rows: 0 bqkv | 1 bo | 2 ln1_g | 3 ln1_b | 4 b1 | 5 b2 | 6 ln2_g | 7 ln2_b
    """
    vp = vec_ref[l]                                                     # (8, 3H)
    attn = _attention(x, bias_rep, mq, mq_scaled,
                      wqkv_ref[l], vp[0:1, :],
                      wo_ref[l], vp[1:2, 0:H], n_rows)
    x = _layernorm(x + attn, vp[2:3, 0:H], vp[3:4, 0:H], eps)
    h1 = jnp.dot(x, w1_ref[l], preferred_element_type=jnp.float32) + vp[4:5, 0:DFF]
    if act == "relu":
        h1 = jnp.maximum(h1, 0.0)
    else:
        # TODO(synk): HF BERT uses exact erf GELU; tanh approximation kept here.
        h1 = jax.nn.gelu(h1)
    h2 = jnp.dot(h1, w2_ref[l], preferred_element_type=jnp.float32) + vp[5:6, 0:H]
    return _layernorm(x + h2, vp[6:7, 0:H], vp[7:8, 0:H], eps)


# ------------------------------- fused kernel ---------------------------------
def _fused_kernel(ids_ref, tables_ref, bbias_ref, ebias_ref, mcls_ref,
                  bwqkv_ref, bwo_ref, bw1_ref, bw2_ref, bvec_ref,
                  ewqkv_ref, ewo_ref, ew1_ref, ew2_ref, evec_ref,
                  out_ref):
    f32 = jnp.float32

    # ---------- embeddings: one-hot matmuls, no XLA gathers ----------
    src = ids_ref[:, 0:1]                                   # (B*S, 1) int32
    seg = ids_ref[:, 1:2]
    doc = ids_ref[:, 2:3]
    col_ws = jax.lax.broadcasted_iota(jnp.int32, (B * S, V + 2), 1)
    # word one-hot in cols [0, V), token-type one-hot in cols [V, V+2)
    oh_ws = ((src == col_ws) | ((seg + V) == col_ws)).astype(f32)
    emb = jnp.dot(oh_ws, tables_ref[R_WORD:R_TOK + 2, :],
                  preferred_element_type=f32)               # word + tok emb
    col_d = jax.lax.broadcasted_iota(jnp.int32, (B * S, TYPE_DOC), 1)
    doc_emb = jnp.dot((doc == col_d).astype(f32),
                      tables_ref[R_DOC:R_DOC + TYPE_DOC, :],
                      preferred_element_type=f32)           # used after BERT
    pos = tables_ref[R_POSB:R_POSB + S, :]                  # (S, H)
    x = emb + _stack_rows(pos, B)                           # (B*S, H)
    x = _layernorm(x, tables_ref[R_EMB_G:R_EMB_G + 1, :],
                   tables_ref[R_EMB_B:R_EMB_B + 1, :], 1e-12)

    # ---------- BERT transformer layers ----------
    mq_b = _head_mask(B * S)                                # (NH*B*S, H)
    mqs_b = mq_b * SCALE
    bias_b = _stack_rows(bbias_ref[...], NH)                # (NH*B*S, B*S)
    for l in range(BERT_LAYERS):
        x = _block(x, bias_b, mq_b, mqs_b, bwqkv_ref, bwo_ref, bw1_ref,
                   bw2_ref, bvec_ref, l, "gelu", 1e-12, B * S)

    # ---------- top_vec = norm(top_vec + doc_type_embeddings) ----------
    x = _layernorm(x + doc_emb, tables_ref[R_NORM_G:R_NORM_G + 1, :],
                   tables_ref[R_NORM_B:R_NORM_B + 1, :], 1e-6)

    # ---------- sentence gather by clss (one-hot matmul) ----------
    clsidx = ids_ref[0:B * NSENT, 3:4]                      # flat b*S + clss
    sel = (clsidx == jax.lax.broadcasted_iota(
        jnp.int32, (B * NSENT, B * S), 1)).astype(f32)      # (B*NSENT, B*S)
    sents = jnp.dot(sel, x, preferred_element_type=f32)     # (B*NSENT, H)
    mcls = mcls_ref[...]                                    # (B*NSENT, 1)
    sents = sents * mcls
    pe = tables_ref[R_PE:R_PE + NSENT, :]                   # (NSENT, H)
    x = sents + _stack_rows(pe, B)

    # ---------- encoder blocks ----------
    mq_e = _head_mask(B * NSENT)
    mqs_e = mq_e * SCALE
    bias_e = _stack_rows(ebias_ref[...], NH)                # (NH*B*NSENT, B*NSENT)
    for l in range(ENC_BLOCKS):
        x = _block(x, bias_e, mq_e, mqs_e, ewqkv_ref, ewo_ref, ew1_ref,
                   ew2_ref, evec_ref, l, "relu", 1e-5, B * NSENT)
    x = _layernorm(x, tables_ref[R_FIN_G:R_FIN_G + 1, :],
                   tables_ref[R_FIN_B:R_FIN_B + 1, :], 1e-6)

    # ---------- classifier: VPU reduction (no N=1 MXU pass), sigmoid, mask ----
    w_row = tables_ref[R_CLSW:R_CLSW + 1, :]                # (1, H)
    b0 = tables_ref[R_CLSB:R_CLSB + 1, 0:1]                 # (1, 1)
    logits = jnp.sum(x * w_row, axis=-1, keepdims=True) + b0
    out_ref[...] = (jax.nn.sigmoid(logits) * mcls).astype(out_ref.dtype)


def fused_call(ids, tables, bbias, ebias, mcls, bert, enc):
    # grid=(): whole model lives in VMEM, single dispatch, no pipelining needed.
    return pl.pallas_call(
        _fused_kernel,
        out_shape=jax.ShapeDtypeStruct((B * NSENT, 1), jnp.float32),
    )(ids, tables, bbias, ebias, mcls,
      bert["wqkv"], bert["wo"], bert["w1"], bert["w2"], bert["vec"],
      enc["wqkv"], enc["wo"], enc["w1"], enc["w2"], enc["vec"])


# --------------------------------- forward ------------------------------------
@jax.jit
def forward(params, src, segs, docs, clss, mask_src, mask_cls):
    # --- tiny host-side prep: reshapes / iota masks only (one XLA fusion) ---
    clss_flat = (clss.astype(jnp.int32)
                 + jnp.arange(B, dtype=jnp.int32)[:, None] * S).reshape(B * NSENT, 1)
    clss_pad = jnp.concatenate(
        [clss_flat, jnp.zeros((B * S - B * NSENT, 1), jnp.int32)], axis=0)
    ids = jnp.concatenate(
        [src.reshape(B * S, 1), segs.reshape(B * S, 1),
         docs.reshape(B * S, 1), clss_pad], axis=1).astype(jnp.int32)

    mask_src_f = mask_src.astype(jnp.float32).reshape(B * S)
    rb = jnp.arange(B * S) // S
    bbias = jnp.where((rb[:, None] == rb[None, :]) & (mask_src_f[None, :] > 0.5),
                      0.0, NEG_INF).astype(jnp.float32)               # (B*S, B*S)

    mask_cls_f = mask_cls.astype(jnp.float32).reshape(B * NSENT)
    rc = jnp.arange(B * NSENT) // NSENT
    ebias = jnp.where((rc[:, None] == rc[None, :]) & (mask_cls_f[None, :] > 0.5),
                      0.0, NEG_INF).astype(jnp.float32)               # (B*NS, B*NS)
    mcls_rows = mask_cls_f.reshape(B * NSENT, 1)

    scores = fused_call(ids, params["tables"], bbias, ebias, mcls_rows,
                        params["bert"], params["enc"])                # (B*NSENT, 1)
    sent_scores = scores.reshape(B, NSENT)   # zero-cost bitcast reshape in XLA
    return sent_scores, mask_cls


# ------------------------------ parameter init --------------------------------
def sinusoidal_pe(max_len, d_model):
    pos = jnp.arange(max_len, dtype=jnp.float32)[:, None]
    i = jnp.arange(0, d_model, 2, dtype=jnp.float32)
    div = jnp.exp(-math.log(10000.0) * i / d_model)
    pe = jnp.zeros((max_len, d_model), jnp.float32)
    pe = pe.at[:, 0::2].set(jnp.sin(pos * div))
    pe = pe.at[:, 1::2].set(jnp.cos(pos * div))
    return pe  # (max_len, d_model)


def init_params(key):
    keys = iter(jax.random.split(key, 64))

    def w(shape, scale=0.05):
        return jax.random.normal(next(keys), shape, jnp.float32) * scale

    def zeros(shape):
        return jnp.zeros(shape, jnp.float32)

    def ones(shape):
        return jnp.ones(shape, jnp.float32)

    def pad_lane(v, width):
        return jnp.pad(v, ((0, 0), (0, width - v.shape[1])))

    def stage(n_layers):
        # per-layer 1-row params packed into one (L, 8, 3H) array
        rows = [
            zeros((n_layers, 3 * H)),   # 0: bqkv
            zeros((n_layers, H)),       # 1: bo
            ones((n_layers, H)),        # 2: ln1_g
            zeros((n_layers, H)),       # 3: ln1_b
            zeros((n_layers, DFF)),     # 4: b1
            zeros((n_layers, H)),       # 5: b2
            ones((n_layers, H)),        # 6: ln2_g
            zeros((n_layers, H)),       # 7: ln2_b
        ]
        vec = jnp.stack([pad_lane(r, 3 * H) for r in rows], axis=1)  # (L, 8, 3H)
        return dict(
            wqkv=w((n_layers, H, 3 * H)), wo=w((n_layers, H, H)),
            w1=w((n_layers, H, DFF)), w2=w((n_layers, DFF, H)), vec=vec)

    word_emb = w((V, H))
    tok_emb = w((2, H))
    doc_emb = w((TYPE_DOC, H))
    pos_bert = w((MAXPOS, H))[:S, :]
    pe_enc = sinusoidal_pe(MAXPOS, H)[:NSENT, :]
    cls_w = w((H, 1))
    cls_b = 0.0

    tables = jnp.concatenate([
        word_emb,                      # R_WORD
        tok_emb,                       # R_TOK
        doc_emb,                       # R_DOC
        pos_bert,                      # R_POSB
        pe_enc,                        # R_PE
        ones((1, H)), zeros((1, H)),   # R_EMB_G / R_EMB_B
        ones((1, H)), zeros((1, H)),   # R_NORM_G / R_NORM_B
        ones((1, H)), zeros((1, H)),   # R_FIN_G / R_FIN_B
        cls_w.T,                       # R_CLSW
        jnp.full((1, H), cls_b, jnp.float32),  # R_CLSB
    ], axis=0)
    assert tables.shape == (N_TABLE_ROWS, H)

    return dict(tables=tables,
                bert=stage(BERT_LAYERS),
                enc=stage(ENC_BLOCKS))


# ----------------------------------- main --------------------------------------
if __name__ == "__main__":
    key = jax.random.PRNGKey(0)
    kp, k1, k2, k3 = jax.random.split(key, 4)
    params = init_params(kp)

    src = jax.random.randint(k1, (B, S), 0, V, dtype=jnp.int32)
    segs = jax.random.randint(k2, (B, S), 0, 2, dtype=jnp.int32)
    docs = jax.random.randint(k3, (B, S), 0, TYPE_DOC, dtype=jnp.int32)
    clss = jnp.array([[0, 4, 8, 12], [0, 5, 10, 15]], dtype=jnp.int32)
    mask_src = jnp.array([[1.0] * 16, [1.0] * 12 + [0.0] * 4], dtype=jnp.float32)
    mask_cls = jnp.array([[1.0, 1.0, 1.0, 1.0], [1.0, 1.0, 1.0, 0.0]],
                         dtype=jnp.float32)

    sent_scores, out_mask = forward(params, src, segs, docs, clss,
                                    mask_src, mask_cls)
    sent_scores = jax.block_until_ready(sent_scores)
    assert sent_scores.shape == (B, NSENT)
    assert out_mask.shape == (B, NSENT)
    assert bool(jnp.all(jnp.isfinite(sent_scores)))
    print("KERNEL_OK")
</pallas_src>

<mosaic_0001>
module attributes {stable_mosaic.version = 11 : i64} {
  func.func @_fused_kernel(%arg0: memref<32x4xi32, #tpu.memory_space<vmem>>, %arg1: memref<98x32xf32, #tpu.memory_space<vmem>>, %arg2: memref<32x32xf32, #tpu.memory_space<vmem>>, %arg3: memref<8x8xf32, #tpu.memory_space<vmem>>, %arg4: memref<8x1xf32, #tpu.memory_space<vmem>>, %arg5: memref<2x32x96xf32, #tpu.memory_space<vmem>>, %arg6: memref<2x32x32xf32, #tpu.memory_space<vmem>>, %arg7: memref<2x32x64xf32, #tpu.memory_space<vmem>>, %arg8: memref<2x64x32xf32, #tpu.memory_space<vmem>>, %arg9: memref<2x8x96xf32, #tpu.memory_space<vmem>>, %arg10: memref<2x32x96xf32, #tpu.memory_space<vmem>>, %arg11: memref<2x32x32xf32, #tpu.memory_space<vmem>>, %arg12: memref<2x32x64xf32, #tpu.memory_space<vmem>>, %arg13: memref<2x64x32xf32, #tpu.memory_space<vmem>>, %arg14: memref<2x8x96xf32, #tpu.memory_space<vmem>>, %arg15: memref<8x1xf32, #tpu.memory_space<vmem>>) attributes {dimension_semantics = [], scalar_prefetch = 0 : i64, scratch_operands = 0 : i64, tpu.core_type = #tpu.core_type<tc>} {
    %c0 = arith.constant 0 : index
    %c0_0 = arith.constant 0 : index
    %0 = vector.load %arg0[%c0, %c0_0] : memref<32x4xi32, #tpu.memory_space<vmem>>, vector<32x1xi32>
    %c0_1 = arith.constant 0 : index
    %c1 = arith.constant 1 : index
    %1 = vector.load %arg0[%c0_1, %c1] : memref<32x4xi32, #tpu.memory_space<vmem>>, vector<32x1xi32>
    %c0_2 = arith.constant 0 : index
    %c2 = arith.constant 2 : index
    %2 = vector.load %arg0[%c0_2, %c2] : memref<32x4xi32, #tpu.memory_space<vmem>>, vector<32x1xi32>
    %3 = tpu.iota {dimensions = array<i32: 1>} : vector<32x66xi32>
    %4 = vector.broadcast %0 : vector<32x1xi32> to vector<32x66xi32>
    %5 = arith.cmpi eq, %4, %3 : vector<32x66xi32>
    %c64_i32 = arith.constant 64 : i32
    %6 = vector.broadcast %c64_i32 : i32 to vector<32x1xi32>
    %7 = arith.addi %1, %6 : vector<32x1xi32>
    %8 = vector.broadcast %7 : vector<32x1xi32> to vector<32x66xi32>
    %9 = arith.cmpi eq, %8, %3 : vector<32x66xi32>
    %10 = arith.ori %5, %9 : vector<32x66xi1>
    %11 = arith.extui %10 : vector<32x66xi1> to vector<32x66xi32>
    %12 = arith.sitofp %11 : vector<32x66xi32> to vector<32x66xf32>
    %c0_3 = arith.constant 0 : index
    %c0_4 = arith.constant 0 : index
    %13 = vector.load %arg1[%c0_3, %c0_4] : memref<98x32xf32, #tpu.memory_space<vmem>>, vector<66x32xf32>
    %cst = arith.constant dense<0.000000e+00> : vector<32x32xf32>
    %14 = tpu.matmul %12, %13, %cst {dimension_numbers = #tpu.dot_dimension_numbers<[1], [0], [0], [1], [0, 0, 1, 1], [], []>} : vector<32x66xf32>, vector<66x32xf32>, vector<32x32xf32> -> vector<32x32xf32>
    %15 = tpu.iota {dimensions = array<i32: 1>} : vector<32x4xi32>
    %16 = vector.broadcast %2 : vector<32x1xi32> to vector<32x4xi32>
    %17 = arith.cmpi eq, %16, %15 : vector<32x4xi32>
    %18 = arith.extui %17 : vector<32x4xi1> to vector<32x4xi32>
    %19 = arith.sitofp %18 : vector<32x4xi32> to vector<32x4xf32>
    %c66 = arith.constant 66 : index
    %c0_5 = arith.constant 0 : index
    %20 = vector.load %arg1[%c66, %c0_5] : memref<98x32xf32, #tpu.memory_space<vmem>>, vector<4x32xf32>
    %cst_6 = arith.constant dense<0.000000e+00> : vector<32x32xf32>
    %21 = tpu.matmul %19, %20, %cst_6 {dimension_numbers = #tpu.dot_dimension_numbers<[1], [0], [0], [1], [0, 0, 1, 1], [], []>} : vector<32x4xf32>, vector<4x32xf32>, vector<32x32xf32> -> vector<32x32xf32>
    %c70 = arith.constant 70 : index
    %c0_7 = arith.constant 0 : index
    %22 = vector.load %arg1[%c70, %c0_7] : memref<98x32xf32, #tpu.memory_space<vmem>>, vector<16x32xf32>
    %23 = tpu.concatenate %22, %22 in 0 : vector<16x32xf32>, vector<16x32xf32> -> vector<32x32xf32>
    %24 = arith.addf %14, %23 : vector<32x32xf32>
    %c90 = arith.constant 90 : index
    %c0_8 = arith.constant 0 : index
    %25 = vector.load %arg1[%c90, %c0_8] : memref<98x32xf32, #tpu.memory_space<vmem>>, vector<1x32xf32>
    %c91 = arith.constant 91 : index
    %c0_9 = arith.constant 0 : index
    %26 = vector.load %arg1[%c91, %c0_9] : memref<98x32xf32, #tpu.memory_space<vmem>>, vector<1x32xf32>
    %cst_10 = arith.constant dense<0.000000e+00> : vector<32xf32>
    %27 = vector.multi_reduction <add>, %24, %cst_10 [1] : vector<32x32xf32> to vector<32xf32>
    %28 = vector.shape_cast %27 : vector<32xf32> to vector<32x1xf32>
    %cst_11 = arith.constant 3.200000e+01 : f32
    %29 = vector.broadcast %cst_11 : f32 to vector<32x1xf32>
    %30 = arith.divf %28, %29 : vector<32x1xf32>
    %31 = vector.broadcast %30 : vector<32x1xf32> to vector<32x32xf32>
    %32 = arith.subf %24, %31 : vector<32x32xf32>
    %33 = arith.mulf %32, %32 : vector<32x32xf32>
    %cst_12 = arith.constant dense<0.000000e+00> : vector<32xf32>
    %34 = vector.multi_reduction <add>, %33, %cst_12 [1] : vector<32x32xf32> to vector<32xf32>
    %35 = vector.shape_cast %34 : vector<32xf32> to vector<32x1xf32>
    %cst_13 = arith.constant 3.200000e+01 : f32
    %36 = vector.broadcast %cst_13 : f32 to vector<32x1xf32>
    %37 = arith.divf %35, %36 : vector<32x1xf32>
    %38 = vector.broadcast %30 : vector<32x1xf32> to vector<32x32xf32>
    %39 = arith.subf %24, %38 : vector<32x32xf32>
    %cst_14 = arith.constant 9.99999996E-13 : f32
    %40 = vector.broadcast %cst_14 : f32 to vector<32x1xf32>
    %41 = arith.addf %37, %40 : vector<32x1xf32>
    %42 = math.rsqrt %41 : vector<32x1xf32>
    %43 = vector.broadcast %42 : vector<32x1xf32> to vector<32x32xf32>
    %44 = arith.mulf %39, %43 : vector<32x32xf32>
    %45 = vector.broadcast %25 : vector<1x32xf32> to vector<32x32xf32>
    %46 = arith.mulf %44, %45 : vector<32x32xf32>
    %47 = vector.broadcast %26 : vector<1x32xf32> to vector<32x32xf32>
    %48 = arith.addf %46, %47 : vector<32x32xf32>
    %49 = tpu.iota {dimensions = array<i32: 0>} : vector<128x32xi32>
    %50 = tpu.iota {dimensions = array<i32: 1>} : vector<128x32xi32>
    %c0_i32 = arith.constant 0 : i32
    %51 = vector.broadcast %c0_i32 : i32 to vector<128x32xi32>
    %52 = arith.cmpi sge, %49, %51 : vector<128x32xi32>
    %c32_i32 = arith.constant 32 : i32
    %53 = vector.broadcast %c32_i32 : i32 to vector<128x32xi32>
    %54 = arith.cmpi slt, %49, %53 : vector<128x32xi32>
    %55 = arith.andi %52, %54 : vector<128x32xi1>
    %c0_i32_15 = arith.constant 0 : i32
    %56 = vector.broadcast %c0_i32_15 : i32 to vector<128x32xi32>
    %57 = arith.cmpi sge, %50, %56 : vector<128x32xi32>
    %58 = arith.andi %55, %57 : vector<128x32xi1>
    %c8_i32 = arith.constant 8 : i32
    %59 = vector.broadcast %c8_i32 : i32 to vector<128x32xi32>
    %60 = arith.cmpi slt, %50, %59 : vector<128x32xi32>
    %61 = arith.andi %58, %60 : vector<128x32xi1>
    %c32_i32_16 = arith.constant 32 : i32
    %62 = vector.broadcast %c32_i32_16 : i32 to vector<128x32xi32>
    %63 = arith.cmpi sge, %49, %62 : vector<128x32xi32>
    %c64_i32_17 = arith.constant 64 : i32
    %64 = vector.broadcast %c64_i32_17 : i32 to vector<128x32xi32>
    %65 = arith.cmpi slt, %49, %64 : vector<128x32xi32>
    %66 = arith.andi %63, %65 : vector<128x32xi1>
    %c8_i32_18 = arith.constant 8 : i32
    %67 = vector.broadcast %c8_i32_18 : i32 to vector<128x32xi32>
    %68 = arith.cmpi sge, %50, %67 : vector<128x32xi32>
    %69 = arith.andi %66, %68 : vector<128x32xi1>
    %c16_i32 = arith.constant 16 : i32
    %70 = vector.broadcast %c16_i32 : i32 to vector<128x32xi32>
    %71 = arith.cmpi slt, %50, %70 : vector<128x32xi32>
    %72 = arith.andi %69, %71 : vector<128x32xi1>
    %73 = arith.ori %61, %72 : vector<128x32xi1>
    %c64_i32_19 = arith.constant 64 : i32
    %74 = vector.broadcast %c64_i32_19 : i32 to vector<128x32xi32>
    %75 = arith.cmpi sge, %49, %74 : vector<128x32xi32>
    %c96_i32 = arith.constant 96 : i32
    %76 = vector.broadcast %c96_i32 : i32 to vector<128x32xi32>
    %77 = arith.cmpi slt, %49, %76 : vector<128x32xi32>
    %78 = arith.andi %75, %77 : vector<128x32xi1>
    %c16_i32_20 = arith.constant 16 : i32
    %79 = vector.broadcast %c16_i32_20 : i32 to vector<128x32xi32>
    %80 = arith.cmpi sge, %50, %79 : vector<128x32xi32>
    %81 = arith.andi %78, %80 : vector<128x32xi1>
    %c24_i32 = arith.constant 24 : i32
    %82 = vector.broadcast %c24_i32 : i32 to vector<128x32xi32>
    %83 = arith.cmpi slt, %50, %82 : vector<128x32xi32>
    %84 = arith.andi %81, %83 : vector<128x32xi1>
    %85 = arith.ori %73, %84 : vector<128x32xi1>
    %c96_i32_21 = arith.constant 96 : i32
    %86 = vector.broadcast %c96_i32_21 : i32 to vector<128x32xi32>
    %87 = arith.cmpi sge, %49, %86 : vector<128x32xi32>
    %c128_i32 = arith.constant 128 : i32
    %88 = vector.broadcast %c128_i32 : i32 to vector<128x32xi32>
    %89 = arith.cmpi slt, %49, %88 : vector<128x32xi32>
    %90 = arith.andi %87, %89 : vector<128x32xi1>
    %c24_i32_22 = arith.constant 24 : i32
    %91 = vector.broadcast %c24_i32_22 : i32 to vector<128x32xi32>
    %92 = arith.cmpi sge, %50, %91 : vector<128x32xi32>
    %93 = arith.andi %90, %92 : vector<128x32xi1>
    %c32_i32_23 = arith.constant 32 : i32
    %94 = vector.broadcast %c32_i32_23 : i32 to vector<128x32xi32>
    %95 = arith.cmpi slt, %50, %94 : vector<128x32xi32>
    %96 = arith.andi %93, %95 : vector<128x32xi1>
    %97 = arith.ori %85, %96 : vector<128x32xi1>
    %98 = arith.extui %97 : vector<128x32xi1> to vector<128x32xi32>
    %99 = arith.sitofp %98 : vector<128x32xi32> to vector<128x32xf32>
    %cst_24 = arith.constant 0.353553385 : f32
    %100 = vector.broadcast %cst_24 : f32 to vector<128x32xf32>
    %101 = arith.mulf %99, %100 : vector<128x32xf32>
    %c0_25 = arith.constant 0 : index
    %c0_26 = arith.constant 0 : index
    %102 = vector.load %arg2[%c0_25, %c0_26] : memref<32x32xf32, #tpu.memory_space<vmem>>, vector<32x32xf32>
    %103 = tpu.concatenate %102, %102, %102, %102 in 0 : vector<32x32xf32>, vector<32x32xf32>, vector<32x32xf32>, vector<32x32xf32> -> vector<128x32xf32>
    %c0_27 = arith.constant 0 : index
    %c0_28 = arith.constant 0 : index
    %c0_29 = arith.constant 0 : index
    %104 = vector.load %arg9[%c0_27, %c0_28, %c0_29] : memref<2x8x96xf32, #tpu.memory_space<vmem>>, vector<1x8x96xf32>
    %105 = vector.shape_cast %104 : vector<1x8x96xf32> to vector<8x96xf32>
    %c0_30 = arith.constant 0 : index
    %c0_31 = arith.constant 0 : index
    %c0_32 = arith.constant 0 : index
    %106 = vector.load %arg5[%c0_30, %c0_31, %c0_32] : memref<2x32x96xf32, #tpu.memory_space<vmem>>, vector<1x32x96xf32>
    %107 = vector.shape_cast %106 : vector<1x32x96xf32> to vector<32x96xf32>
    %108 = vector.extract_strided_slice %105 {offsets = [0, 0], sizes = [1, 96], strides = [1, 1]} : vector<8x96xf32> to vector<1x96xf32>
    %c0_33 = arith.constant 0 : index
    %c0_34 = arith.constant 0 : index
    %c0_35 = arith.constant 0 : index
    %109 = vector.load %arg6[%c0_33, %c0_34, %c0_35] : memref<2x32x32xf32, #tpu.memory_space<vmem>>, vector<1x32x32xf32>
    %110 = vector.shape_cast %109 : vector<1x32x32xf32> to vector<32x32xf32>
    %111 = vector.extract_strided_slice %105 {offsets = [1, 0], sizes = [1, 32], strides = [1, 1]} : vector<8x96xf32> to vector<1x32xf32>
    %cst_36 = arith.constant dense<0.000000e+00> : vector<32x96xf32>
    %112 = tpu.matmul %48, %107, %cst_36 {dimension_numbers = #tpu.dot_dimension_numbers<[1], [0], [0], [1], [0, 0, 1, 1], [], []>} : vector<32x32xf32>, vector<32x96xf32>, vector<32x96xf32> -> vector<32x96xf32>
    %113 = vector.broadcast %108 : vector<1x96xf32> to vector<32x96xf32>
    %114 = arith.addf %112, %113 : vector<32x96xf32>
    %115 = vector.extract_strided_slice %114 {offsets = [0, 0], sizes = [32, 32], strides = [1, 1]} : vector<32x96xf32> to vector<32x32xf32>
    %116 = vector.extract_strided_slice %114 {offsets = [0, 32], sizes = [32, 32], strides = [1, 1]} : vector<32x96xf32> to vector<32x32xf32>
    %117 = vector.extract_strided_slice %114 {offsets = [0, 64], sizes = [32, 32], strides = [1, 1]} : vector<32x96xf32> to vector<32x32xf32>
    %118 = tpu.concatenate %115, %115, %115, %115 in 0 : vector<32x32xf32>, vector<32x32xf32>, vector<32x32xf32>, vector<32x32xf32> -> vector<128x32xf32>
    %119 = arith.mulf %118, %101 : vector<128x32xf32>
    %cst_37 = arith.constant dense<0.000000e+00> : vector<128x32xf32>
    %120 = tpu.matmul %119, %116, %cst_37 {dimension_numbers = #tpu.dot_dimension_numbers<[1], [1], [0], [0], [0, 0, 1, 0], [], []>} : vector<128x32xf32>, vector<32x32xf32>, vector<128x32xf32> -> vector<128x32xf32>
    %121 = arith.addf %120, %103 : vector<128x32xf32>
    %cst_38 = arith.constant dense<0xFF800000> : vector<128xf32>
    %122 = vector.multi_reduction <maximumf>, %121, %cst_38 [1] : vector<128x32xf32> to vector<128xf32>
    %123 = vector.shape_cast %122 : vector<128xf32> to vector<128x1xf32>
    %124 = vector.broadcast %123 : vector<128x1xf32> to vector<128x32xf32>
    %125 = arith.subf %121, %124 : vector<128x32xf32>
    %126 = math.exp %125 : vector<128x32xf32>
    %cst_39 = arith.constant dense<0.000000e+00> : vector<128xf32>
    %127 = vector.multi_reduction <add>, %126, %cst_39 [1] : vector<128x32xf32> to vector<128xf32>
    %128 = vector.shape_cast %127 : vector<128xf32> to vector<128x1xf32>
    %129 = tpu.reciprocal %128 {approx = true} : vector<128x1xf32> -> vector<128x1xf32>
    %130 = vector.broadcast %129 : vector<128x1xf32> to vector<128x32xf32>
    %131 = arith.mulf %126, %130 : vector<128x32xf32>
    %cst_40 = arith.constant dense<0.000000e+00> : vector<128x32xf32>
    %132 = tpu.matmul %131, %117, %cst_40 {dimension_numbers = #tpu.dot_dimension_numbers<[1], [0], [0], [1], [0, 0, 1, 1], [], []>} : vector<128x32xf32>, vector<32x32xf32>, vector<128x32xf32> -> vector<128x32xf32>
    %133 = arith.mulf %132, %99 : vector<128x32xf32>
    %134 = vector.extract_strided_slice %133 {offsets = [0, 0], sizes = [32, 32], strides = [1, 1]} : vector<128x32xf32> to vector<32x32xf32>
    %135 = vector.extract_strided_slice %133 {offsets = [32, 0], sizes = [32, 32], strides = [1, 1]} : vector<128x32xf32> to vector<32x32xf32>
    %136 = arith.addf %134, %135 : vector<32x32xf32>
    %137 = vector.extract_strided_slice %133 {offsets = [64, 0], sizes = [32, 32], strides = [1, 1]} : vector<128x32xf32> to vector<32x32xf32>
    %138 = arith.addf %136, %137 : vector<32x32xf32>
    %139 = vector.extract_strided_slice %133 {offsets = [96, 0], sizes = [32, 32], strides = [1, 1]} : vector<128x32xf32> to vector<32x32xf32>
    %140 = arith.addf %138, %139 : vector<32x32xf32>
    %cst_41 = arith.constant dense<0.000000e+00> : vector<32x32xf32>
    %141 = tpu.matmul %140, %110, %cst_41 {dimension_numbers = #tpu.dot_dimension_numbers<[1], [0], [0], [1], [0, 0, 1, 1], [], []>} : vector<32x32xf32>, vector<32x32xf32>, vector<32x32xf32> -> vector<32x32xf32>
    %142 = vector.broadcast %111 : vector<1x32xf32> to vector<32x32xf32>
    %143 = arith.addf %141, %142 : vector<32x32xf32>
    %144 = arith.addf %48, %143 : vector<32x32xf32>
    %145 = vector.extract_strided_slice %105 {offsets = [2, 0], sizes = [1, 32], strides = [1, 1]} : vector<8x96xf32> to vector<1x32xf32>
    %146 = vector.extract_strided_slice %105 {offsets = [3, 0], sizes = [1, 32], strides = [1, 1]} : vector<8x96xf32> to vector<1x32xf32>
    %cst_42 = arith.constant dense<0.000000e+00> : vector<32xf32>
    %147 = vector.multi_reduction <add>, %144, %cst_42 [1] : vector<32x32xf32> to vector<32xf32>
    %148 = vector.shape_cast %147 : vector<32xf32> to vector<32x1xf32>
    %cst_43 = arith.constant 3.200000e+01 : f32
    %149 = vector.broadcast %cst_43 : f32 to vector<32x1xf32>
    %150 = arith.divf %148, %149 : vector<32x1xf32>
    %151 = vector.broadcast %150 : vector<32x1xf32> to vector<32x32xf32>
    %152 = arith.subf %144, %151 : vector<32x32xf32>
    %153 = arith.mulf %152, %152 : vector<32x32xf32>
    %cst_44 = arith.constant dense<0.000000e+00> : vector<32xf32>
    %154 = vector.multi_reduction <add>, %153, %cst_44 [1] : vector<32x32xf32> to vector<32xf32>
    %155 = vector.shape_cast %154 : vector<32xf32> to vector<32x1xf32>
    %cst_45 = arith.constant 3.200000e+01 : f32
    %156 = vector.broadcast %cst_45 : f32 to vector<32x1xf32>
    %157 = arith.divf %155, %156 : vector<32x1xf32>
    %158 = vector.broadcast %150 : vector<32x1xf32> to vector<32x32xf32>
    %159 = arith.subf %144, %158 : vector<32x32xf32>
    %cst_46 = arith.constant 9.99999996E-13 : f32
    %160 = vector.broadcast %cst_46 : f32 to vector<32x1xf32>
    %161 = arith.addf %157, %160 : vector<32x1xf32>
    %162 = math.rsqrt %161 : vector<32x1xf32>
    %163 = vector.broadcast %162 : vector<32x1xf32> to vector<32x32xf32>
    %164 = arith.mulf %159, %163 : vector<32x32xf32>
    %165 = vector.broadcast %145 : vector<1x32xf32> to vector<32x32xf32>
    %166 = arith.mulf %164, %165 : vector<32x32xf32>
    %167 = vector.broadcast %146 : vector<1x32xf32> to vector<32x32xf32>
    %168 = arith.addf %166, %167 : vector<32x32xf32>
    %c0_47 = arith.constant 0 : index
    %c0_48 = arith.constant 0 : index
    %c0_49 = arith.constant 0 : index
    %169 = vector.load %arg7[%c0_47, %c0_48, %c0_49] : memref<2x32x64xf32, #tpu.memory_space<vmem>>, vector<1x32x64xf32>
    %170 = vector.shape_cast %169 : vector<1x32x64xf32> to vector<32x64xf32>
    %cst_50 = arith.constant dense<0.000000e+00> : vector<32x64xf32>
    %171 = tpu.matmul %168, %170, %cst_50 {dimension_numbers = #tpu.dot_dimension_numbers<[1], [0], [0], [1], [0, 0, 1, 1], [], []>} : vector<32x32xf32>, vector<32x64xf32>, vector<32x64xf32> -> vector<32x64xf32>
    %172 = vector.extract_strided_slice %105 {offsets = [4, 0], sizes = [1, 64], strides = [1, 1]} : vector<8x96xf32> to vector<1x64xf32>
    %173 = vector.broadcast %172 : vector<1x64xf32> to vector<32x64xf32>
    %174 = arith.addf %171, %173 : vector<32x64xf32>
    %175 = arith.mulf %174, %174 : vector<32x64xf32>
    %176 = arith.mulf %174, %175 : vector<32x64xf32>
    %cst_51 = arith.constant 4.471500e-02 : f32
    %177 = vector.broadcast %cst_51 : f32 to vector<32x64xf32>
    %178 = arith.mulf %177, %176 : vector<32x64xf32>
    %179 = arith.addf %174, %178 : vector<32x64xf32>
    %cst_52 = arith.constant 0.797884583 : f32
    %180 = vector.broadcast %cst_52 : f32 to vector<32x64xf32>
    %181 = arith.mulf %180, %179 : vector<32x64xf32>
    %182 = math.tanh %181 : vector<32x64xf32>
    %cst_53 = arith.constant 1.000000e+00 : f32
    %183 = vector.broadcast %cst_53 : f32 to vector<32x64xf32>
    %184 = arith.addf %183, %182 : vector<32x64xf32>
    %cst_54 = arith.constant 5.000000e-01 : f32
    %185 = vector.broadcast %cst_54 : f32 to vector<32x64xf32>
    %186 = arith.mulf %185, %184 : vector<32x64xf32>
    %187 = arith.mulf %174, %186 : vector<32x64xf32>
    %c0_55 = arith.constant 0 : index
    %c0_56 = arith.constant 0 : index
    %c0_57 = arith.constant 0 : index
    %188 = vector.load %arg8[%c0_55, %c0_56, %c0_57] : memref<2x64x32xf32, #tpu.memory_space<vmem>>, vector<1x64x32xf32>
    %189 = vector.shape_cast %188 : vector<1x64x32xf32> to vector<64x32xf32>
    %cst_58 = arith.constant dense<0.000000e+00> : vector<32x32xf32>
    %190 = tpu.matmul %187, %189, %cst_58 {dimension_numbers = #tpu.dot_dimension_numbers<[1], [0], [0], [1], [0, 0, 1, 1], [], []>} : vector<32x64xf32>, vector<64x32xf32>, vector<32x32xf32> -> vector<32x32xf32>
    %191 = vector.extract_strided_slice %105 {offsets = [5, 0], sizes = [1, 32], strides = [1, 1]} : vector<8x96xf32> to vector<1x32xf32>
    %192 = vector.broadcast %191 : vector<1x32xf32> to vector<32x32xf32>
    %193 = arith.addf %190, %192 : vector<32x32xf32>
    %194 = arith.addf %168, %193 : vector<32x32xf32>
    %195 = vector.extract_strided_slice %105 {offsets = [6, 0], sizes = [1, 32], strides = [1, 1]} : vector<8x96xf32> to vector<1x32xf32>
    %196 = vector.extract_strided_slice %105 {offsets = [7, 0], sizes = [1, 32], strides = [1, 1]} : vector<8x96xf32> to vector<1x32xf32>
    %cst_59 = arith.constant dense<0.000000e+00> : vector<32xf32>
    %197 = vector.multi_reduction <add>, %194, %cst_59 [1] : vector<32x32xf32> to vector<32xf32>
    %198 = vector.shape_cast %197 : vector<32xf32> to vector<32x1xf32>
    %cst_60 = arith.constant 3.200000e+01 : f32
    %199 = vector.broadcast %cst_60 : f32 to vector<32x1xf32>
    %200 = arith.divf %198, %199 : vector<32x1xf32>
    %201 = vector.broadcast %200 : vector<32x1xf32> to vector<32x32xf32>
    %202 = arith.subf %194, %201 : vector<32x32xf32>
    %203 = arith.mulf %202, %202 : vector<32x32xf32>
    %cst_61 = arith.constant dense<0.000000e+00> : vector<32xf32>
    %204 = vector.multi_reduction <add>, %203, %cst_61 [1] : vector<32x32xf32> to vector<32xf32>
    %205 = vector.shape_cast %204 : vector<32xf32> to vector<32x1xf32>
    %cst_62 = arith.constant 3.200000e+01 : f32
    %206 = vector.broadcast %cst_62 : f32 to vector<32x1xf32>
    %207 = arith.divf %205, %206 : vector<32x1xf32>
    %208 = vector.broadcast %200 : vector<32x1xf32> to vector<32x32xf32>
    %209 = arith.subf %194, %208 : vector<32x32xf32>
    %cst_63 = arith.constant 9.99999996E-13 : f32
    %210 = vector.broadcast %cst_63 : f32 to vector<32x1xf32>
    %211 = arith.addf %207, %210 : vector<32x1xf32>
    %212 = math.rsqrt %211 : vector<32x1xf32>
    %213 = vector.broadcast %212 : vector<32x1xf32> to vector<32x32xf32>
    %214 = arith.mulf %209, %213 : vector<32x32xf32>
    %215 = vector.broadcast %195 : vector<1x32xf32> to vector<32x32xf32>
    %216 = arith.mulf %214, %215 : vector<32x32xf32>
    %217 = vector.broadcast %196 : vector<1x32xf32> to vector<32x32xf32>
    %218 = arith.addf %216, %217 : vector<32x32xf32>
    %c1_64 = arith.constant 1 : index
    %c0_65 = arith.constant 0 : index
    %c0_66 = arith.constant 0 : index
    %219 = vector.load %arg9[%c1_64, %c0_65, %c0_66] : memref<2x8x96xf32, #tpu.memory_space<vmem>>, vector<1x8x96xf32>
    %220 = vector.shape_cast %219 : vector<1x8x96xf32> to vector<8x96xf32>
    %c1_67 = arith.constant 1 : index
    %c0_68 = arith.constant 0 : index
    %c0_69 = arith.constant 0 : index
    %221 = vector.load %arg5[%c1_67, %c0_68, %c0_69] : memref<2x32x96xf32, #tpu.memory_space<vmem>>, vector<1x32x96xf32>
    %222 = vector.shape_cast %221 : vector<1x32x96xf32> to vector<32x96xf32>
    %223 = vector.extract_strided_slice %220 {offsets = [0, 0], sizes = [1, 96], strides = [1, 1]} : vector<8x96xf32> to vector<1x96xf32>
    %c1_70 = arith.constant 1 : index
    %c0_71 = arith.constant 0 : index
    %c0_72 = arith.constant 0 : index
    %224 = vector.load %arg6[%c1_70, %c0_71, %c0_72] : memref<2x32x32xf32, #tpu.memory_space<vmem>>, vector<1x32x32xf32>
    %225 = vector.shape_cast %224 : vector<1x32x32xf32> to vector<32x32xf32>
    %226 = vector.extract_strided_slice %220 {offsets = [1, 0], sizes = [1, 32], strides = [1, 1]} : vector<8x96xf32> to vector<1x32xf32>
    %cst_73 = arith.constant dense<0.000000e+00> : vector<32x96xf32>
    %227 = tpu.matmul %218, %222, %cst_73 {dimension_numbers = #tpu.dot_dimension_numbers<[1], [0], [0], [1], [0, 0, 1, 1], [], []>} : vector<32x32xf32>, vector<32x96xf32>, vector<32x96xf32> -> vector<32x96xf32>
    %228 = vector.broadcast %223 : vector<1x96xf32> to vector<32x96xf32>
    %229 = arith.addf %227, %228 : vector<32x96xf32>
    %230 = vector.extract_strided_slice %229 {offsets = [0, 0], sizes = [32, 32], strides = [1, 1]} : vector<32x96xf32> to vector<32x32xf32>
    %231 = vector.extract_strided_slice %229 {offsets = [0, 32], sizes = [32, 32], strides = [1, 1]} : vector<32x96xf32> to vector<32x32xf32>
    %232 = vector.extract_strided_slice %229 {offsets = [0, 64], sizes = [32, 32], strides = [1, 1]} : vector<32x96xf32> to vector<32x32xf32>
    %233 = tpu.concatenate %230, %230, %230, %230 in 0 : vector<32x32xf32>, vector<32x32xf32>, vector<32x32xf32>, vector<32x32xf32> -> vector<128x32xf32>
    %234 = arith.mulf %233, %101 : vector<128x32xf32>
    %cst_74 = arith.constant dense<0.000000e+00> : vector<128x32xf32>
    %235 = tpu.matmul %234, %231, %cst_74 {dimension_numbers = #tpu.dot_dimension_numbers<[1], [1], [0], [0], [0, 0, 1, 0], [], []>} : vector<128x32xf32>, vector<32x32xf32>, vector<128x32xf32> -> vector<128x32xf32>
    %236 = arith.addf %235, %103 : vector<128x32xf32>
    %cst_75 = arith.constant dense<0xFF800000> : vector<128xf32>
    %237 = vector.multi_reduction <maximumf>, %236, %cst_75 [1] : vector<128x32xf32> to vector<128xf32>
    %238 = vector.shape_cast %237 : vector<128xf32> to vector<128x1xf32>
    %239 = vector.broadcast %238 : vector<128x1xf32> to vector<128x32xf32>
    %240 = arith.subf %236, %239 : vector<128x32xf32>
    %241 = math.exp %240 : vector<128x32xf32>
    %cst_76 = arith.constant dense<0.000000e+00> : vector<128xf32>
    %242 = vector.multi_reduction <add>, %241, %cst_76 [1] : vector<128x32xf32> to vector<128xf32>
    %243 = vector.shape_cast %242 : vector<128xf32> to vector<128x1xf32>
    %244 = tpu.reciprocal %243 {approx = true} : vector<128x1xf32> -> vector<128x1xf32>
    %245 = vector.broadcast %244 : vector<128x1xf32> to vector<128x32xf32>
    %246 = arith.mulf %241, %245 : vector<128x32xf32>
    %cst_77 = arith.constant dense<0.000000e+00> : vector<128x32xf32>
    %247 = tpu.matmul %246, %232, %cst_77 {dimension_numbers = #tpu.dot_dimension_numbers<[1], [0], [0], [1], [0, 0, 1, 1], [], []>} : vector<128x32xf32>, vector<32x32xf32>, vector<128x32xf32> -> vector<128x32xf32>
    %248 = arith.mulf %247, %99 : vector<128x32xf32>
    %249 = vector.extract_strided_slice %248 {offsets = [0, 0], sizes = [32, 32], strides = [1, 1]} : vector<128x32xf32> to vector<32x32xf32>
    %250 = vector.extract_strided_slice %248 {offsets = [32, 0], sizes = [32, 32], strides = [1, 1]} : vector<128x32xf32> to vector<32x32xf32>
    %251 = arith.addf %249, %250 : vector<32x32xf32>
    %252 = vector.extract_strided_slice %248 {offsets = [64, 0], sizes = [32, 32], strides = [1, 1]} : vector<128x32xf32> to vector<32x32xf32>
    %253 = arith.addf %251, %252 : vector<32x32xf32>
    %254 = vector.extract_strided_slice %248 {offsets = [96, 0], sizes = [32, 32], strides = [1, 1]} : vector<128x32xf32> to vector<32x32xf32>
    %255 = arith.addf %253, %254 : vector<32x32xf32>
    %cst_78 = arith.constant dense<0.000000e+00> : vector<32x32xf32>
    %256 = tpu.matmul %255, %225, %cst_78 {dimension_numbers = #tpu.dot_dimension_numbers<[1], [0], [0], [1], [0, 0, 1, 1], [], []>} : vector<32x32xf32>, vector<32x32xf32>, vector<32x32xf32> -> vector<32x32xf32>
    %257 = vector.broadcast %226 : vector<1x32xf32> to vector<32x32xf32>
    %258 = arith.addf %256, %257 : vector<32x32xf32>
    %259 = arith.addf %218, %258 : vector<32x32xf32>
    %260 = vector.extract_strided_slice %220 {offsets = [2, 0], sizes = [1, 32], strides = [1, 1]} : vector<8x96xf32> to vector<1x32xf32>
    %261 = vector.extract_strided_slice %220 {offsets = [3, 0], sizes = [1, 32], strides = [1, 1]} : vector<8x96xf32> to vector<1x32xf32>
    %cst_79 = arith.constant dense<0.000000e+00> : vector<32xf32>
    %262 = vector.multi_reduction <add>, %259, %cst_79 [1] : vector<32x32xf32> to vector<32xf32>
    %263 = vector.shape_cast %262 : vector<32xf32> to vector<32x1xf32>
    %cst_80 = arith.constant 3.200000e+01 : f32
    %264 = vector.broadcast %cst_80 : f32 to vector<32x1xf32>
    %265 = arith.divf %263, %264 : vector<32x1xf32>
    %266 = vector.broadcast %265 : vector<32x1xf32> to vector<32x32xf32>
    %267 = arith.subf %259, %266 : vector<32x32xf32>
    %268 = arith.mulf %267, %267 : vector<32x32xf32>
    %cst_81 = arith.constant dense<0.000000e+00> : vector<32xf32>
    %269 = vector.multi_reduction <add>, %268, %cst_81 [1] : vector<32x32xf32> to vector<32xf32>
    %270 = vector.shape_cast %269 : vector<32xf32> to vector<32x1xf32>
    %cst_82 = arith.constant 3.200000e+01 : f32
    %271 = vector.broadcast %cst_82 : f32 to vector<32x1xf32>
    %272 = arith.divf %270, %271 : vector<32x1xf32>
    %273 = vector.broadcast %265 : vector<32x1xf32> to vector<32x32xf32>
    %274 = arith.subf %259, %273 : vector<32x32xf32>
    %cst_83 = arith.constant 9.99999996E-13 : f32
    %275 = vector.broadcast %cst_83 : f32 to vector<32x1xf32>
    %276 = arith.addf %272, %275 : vector<32x1xf32>
    %277 = math.rsqrt %276 : vector<32x1xf32>
    %278 = vector.broadcast %277 : vector<32x1xf32> to vector<32x32xf32>
    %279 = arith.mulf %274, %278 : vector<32x32xf32>
    %280 = vector.broadcast %260 : vector<1x32xf32> to vector<32x32xf32>
    %281 = arith.mulf %279, %280 : vector<32x32xf32>
    %282 = vector.broadcast %261 : vector<1x32xf32> to vector<32x32xf32>
    %283 = arith.addf %281, %282 : vector<32x32xf32>
    %c1_84 = arith.constant 1 : index
    %c0_85 = arith.constant 0 : index
    %c0_86 = arith.constant 0 : index
    %284 = vector.load %arg7[%c1_84, %c0_85, %c0_86] : memref<2x32x64xf32, #tpu.memory_space<vmem>>, vector<1x32x64xf32>
    %285 = vector.shape_cast %284 : vector<1x32x64xf32> to vector<32x64xf32>
    %cst_87 = arith.constant dense<0.000000e+00> : vector<32x64xf32>
    %286 = tpu.matmul %283, %285, %cst_87 {dimension_numbers = #tpu.dot_dimension_numbers<[1], [0], [0], [1], [0, 0, 1, 1], [], []>} : vector<32x32xf32>, vector<32x64xf32>, vector<32x64xf32> -> vector<32x64xf32>
    %287 = vector.extract_strided_slice %220 {offsets = [4, 0], sizes = [1, 64], strides = [1, 1]} : vector<8x96xf32> to vector<1x64xf32>
    %288 = vector.broadcast %287 : vector<1x64xf32> to vector<32x64xf32>
    %289 = arith.addf %286, %288 : vector<32x64xf32>
    %290 = arith.mulf %289, %289 : vector<32x64xf32>
    %291 = arith.mulf %289, %290 : vector<32x64xf32>
    %cst_88 = arith.constant 4.471500e-02 : f32
    %292 = vector.broadcast %cst_88 : f32 to vector<32x64xf32>
    %293 = arith.mulf %292, %291 : vector<32x64xf32>
    %294 = arith.addf %289, %293 : vector<32x64xf32>
    %cst_89 = arith.constant 0.797884583 : f32
    %295 = vector.broadcast %cst_89 : f32 to vector<32x64xf32>
    %296 = arith.mulf %295, %294 : vector<32x64xf32>
    %297 = math.tanh %296 : vector<32x64xf32>
    %cst_90 = arith.constant 1.000000e+00 : f32
    %298 = vector.broadcast %cst_90 : f32 to vector<32x64xf32>
    %299 = arith.addf %298, %297 : vector<32x64xf32>
    %cst_91 = arith.constant 5.000000e-01 : f32
    %300 = vector.broadcast %cst_91 : f32 to vector<32x64xf32>
    %301 = arith.mulf %300, %299 : vector<32x64xf32>
    %302 = arith.mulf %289, %301 : vector<32x64xf32>
    %c1_92 = arith.constant 1 : index
    %c0_93 = arith.constant 0 : index
    %c0_94 = arith.constant 0 : index
    %303 = vector.load %arg8[%c1_92, %c0_93, %c0_94] : memref<2x64x32xf32, #tpu.memory_space<vmem>>, vector<1x64x32xf32>
    %304 = vector.shape_cast %303 : vector<1x64x32xf32> to vector<64x32xf32>
    %cst_95 = arith.constant dense<0.000000e+00> : vector<32x32xf32>
    %305 = tpu.matmul %302, %304, %cst_95 {dimension_numbers = #tpu.dot_dimension_numbers<[1], [0], [0], [1], [0, 0, 1, 1], [], []>} : vector<32x64xf32>, vector<64x32xf32>, vector<32x32xf32> -> vector<32x32xf32>
    %306 = vector.extract_strided_slice %220 {offsets = [5, 0], sizes = [1, 32], strides = [1, 1]} : vector<8x96xf32> to vector<1x32xf32>
    %307 = vector.broadcast %306 : vector<1x32xf32> to vector<32x32xf32>
    %308 = arith.addf %305, %307 : vector<32x32xf32>
    %309 = arith.addf %283, %308 : vector<32x32xf32>
    %310 = vector.extract_strided_slice %220 {offsets = [6, 0], sizes = [1, 32], strides = [1, 1]} : vector<8x96xf32> to vector<1x32xf32>
    %311 = vector.extract_strided_slice %220 {offsets = [7, 0], sizes = [1, 32], strides = [1, 1]} : vector<8x96xf32> to vector<1x32xf32>
    %cst_96 = arith.constant dense<0.000000e+00> : vector<32xf32>
    %312 = vector.multi_reduction <add>, %309, %cst_96 [1] : vector<32x32xf32> to vector<32xf32>
    %313 = vector.shape_cast %312 : vector<32xf32> to vector<32x1xf32>
    %cst_97 = arith.constant 3.200000e+01 : f32
    %314 = vector.broadcast %cst_97 : f32 to vector<32x1xf32>
    %315 = arith.divf %313, %314 : vector<32x1xf32>
    %316 = vector.broadcast %315 : vector<32x1xf32> to vector<32x32xf32>
    %317 = arith.subf %309, %316 : vector<32x32xf32>
    %318 = arith.mulf %317, %317 : vector<32x32xf32>
    %cst_98 = arith.constant dense<0.000000e+00> : vector<32xf32>
    %319 = vector.multi_reduction <add>, %318, %cst_98 [1] : vector<32x32xf32> to vector<32xf32>
    %320 = vector.shape_cast %319 : vector<32xf32> to vector<32x1xf32>
    %cst_99 = arith.constant 3.200000e+01 : f32
    %321 = vector.broadcast %cst_99 : f32 to vector<32x1xf32>
    %322 = arith.divf %320, %321 : vector<32x1xf32>
    %323 = vector.broadcast %315 : vector<32x1xf32> to vector<32x32xf32>
    %324 = arith.subf %309, %323 : vector<32x32xf32>
    %cst_100 = arith.constant 9.99999996E-13 : f32
    %325 = vector.broadcast %cst_100 : f32 to vector<32x1xf32>
    %326 = arith.addf %322, %325 : vector<32x1xf32>
    %327 = math.rsqrt %326 : vector<32x1xf32>
    %328 = vector.broadcast %327 : vector<32x1xf32> to vector<32x32xf32>
    %329 = arith.mulf %324, %328 : vector<32x32xf32>
    %330 = vector.broadcast %310 : vector<1x32xf32> to vector<32x32xf32>
    %331 = arith.mulf %329, %330 : vector<32x32xf32>
    %332 = vector.broadcast %311 : vector<1x32xf32> to vector<32x32xf32>
    %333 = arith.addf %331, %332 : vector<32x32xf32>
    %334 = arith.addf %333, %21 : vector<32x32xf32>
    %c92 = arith.constant 92 : index
    %c0_101 = arith.constant 0 : index
    %335 = vector.load %arg1[%c92, %c0_101] : memref<98x32xf32, #tpu.memory_space<vmem>>, vector<1x32xf32>
    %c93 = arith.constant 93 : index
    %c0_102 = arith.constant 0 : index
    %336 = vector.load %arg1[%c93, %c0_102] : memref<98x32xf32, #tpu.memory_space<vmem>>, vector<1x32xf32>
    %cst_103 = arith.constant dense<0.000000e+00> : vector<32xf32>
    %337 = vector.multi_reduction <add>, %334, %cst_103 [1] : vector<32x32xf32> to vector<32xf32>
    %338 = vector.shape_cast %337 : vector<32xf32> to vector<32x1xf32>
    %cst_104 = arith.constant 3.200000e+01 : f32
    %339 = vector.broadcast %cst_104 : f32 to vector<32x1xf32>
    %340 = arith.divf %338, %339 : vector<32x1xf32>
    %341 = vector.broadcast %340 : vector<32x1xf32> to vector<32x32xf32>
    %342 = arith.subf %334, %341 : vector<32x32xf32>
    %343 = arith.mulf %342, %342 : vector<32x32xf32>
    %cst_105 = arith.constant dense<0.000000e+00> : vector<32xf32>
    %344 = vector.multi_reduction <add>, %343, %cst_105 [1] : vector<32x32xf32> to vector<32xf32>
    %345 = vector.shape_cast %344 : vector<32xf32> to vector<32x1xf32>
    %cst_106 = arith.constant 3.200000e+01 : f32
    %346 = vector.broadcast %cst_106 : f32 to vector<32x1xf32>
    %347 = arith.divf %345, %346 : vector<32x1xf32>
    %348 = vector.broadcast %340 : vector<32x1xf32> to vector<32x32xf32>
    %349 = arith.subf %334, %348 : vector<32x32xf32>
    %cst_107 = arith.constant 9.99999997E-7 : f32
    %350 = vector.broadcast %cst_107 : f32 to vector<32x1xf32>
    %351 = arith.addf %347, %350 : vector<32x1xf32>
    %352 = math.rsqrt %351 : vector<32x1xf32>
    %353 = vector.broadcast %352 : vector<32x1xf32> to vector<32x32xf32>
    %354 = arith.mulf %349, %353 : vector<32x32xf32>
    %355 = vector.broadcast %335 : vector<1x32xf32> to vector<32x32xf32>
    %356 = arith.mulf %354, %355 : vector<32x32xf32>
    %357 = vector.broadcast %336 : vector<1x32xf32> to vector<32x32xf32>
    %358 = arith.addf %356, %357 : vector<32x32xf32>
    %c0_108 = arith.constant 0 : index
    %c3 = arith.constant 3 : index
    %359 = vector.load %arg0[%c0_108, %c3] : memref<32x4xi32, #tpu.memory_space<vmem>>, vector<8x1xi32>
    %360 = tpu.iota {dimensions = array<i32: 1>} : vector<8x32xi32>
    %361 = vector.broadcast %359 : vector<8x1xi32> to vector<8x32xi32>
    %362 = arith.cmpi eq, %361, %360 : vector<8x32xi32>
    %363 = arith.extui %362 : vector<8x32xi1> to vector<8x32xi32>
    %364 = arith.sitofp %363 : vector<8x32xi32> to vector<8x32xf32>
    %cst_109 = arith.constant dense<0.000000e+00> : vector<8x32xf32>
    %365 = tpu.matmul %364, %358, %cst_109 {dimension_numbers = #tpu.dot_dimension_numbers<[1], [0], [0], [1], [0, 0, 1, 1], [], []>} : vector<8x32xf32>, vector<32x32xf32>, vector<8x32xf32> -> vector<8x32xf32>
    %c0_110 = arith.constant 0 : index
    %c0_111 = arith.constant 0 : index
    %366 = vector.load %arg4[%c0_110, %c0_111] : memref<8x1xf32, #tpu.memory_space<vmem>>, vector<8x1xf32>
    %367 = vector.broadcast %366 : vector<8x1xf32> to vector<8x32xf32>
    %368 = arith.mulf %365, %367 : vector<8x32xf32>
    %c86 = arith.constant 86 : index
    %c0_112 = arith.constant 0 : index
    %369 = vector.load %arg1[%c86, %c0_112] : memref<98x32xf32, #tpu.memory_space<vmem>>, vector<4x32xf32>
    %370 = tpu.concatenate %369, %369 in 0 : vector<4x32xf32>, vector<4x32xf32> -> vector<8x32xf32>
    %371 = arith.addf %368, %370 : vector<8x32xf32>
    %372 = tpu.iota {dimensions = array<i32: 0>} : vector<32x32xi32>
    %373 = tpu.iota {dimensions = array<i32: 1>} : vector<32x32xi32>
    %c0_i32_113 = arith.constant 0 : i32
    %374 = vector.broadcast %c0_i32_113 : i32 to vector<32x32xi32>
    %375 = arith.cmpi sge, %372, %374 : vector<32x32xi32>
    %c8_i32_114 = arith.constant 8 : i32
    %376 = vector.broadcast %c8_i32_114 : i32 to vector<32x32xi32>
    %377 = arith.cmpi slt, %372, %376 : vector<32x32xi32>
    %378 = arith.andi %375, %377 : vector<32x32xi1>
    %c0_i32_115 = arith.constant 0 : i32
    %379 = vector.broadcast %c0_i32_115 : i32 to vector<32x32xi32>
    %380 = arith.cmpi sge, %373, %379 : vector<32x32xi32>
    %381 = arith.andi %378, %380 : vector<32x32xi1>
    %c8_i32_116 = arith.constant 8 : i32
    %382 = vector.broadcast %c8_i32_116 : i32 to vector<32x32xi32>
    %383 = arith.cmpi slt, %373, %382 : vector<32x32xi32>
    %384 = arith.andi %381, %383 : vector<32x32xi1>
    %c8_i32_117 = arith.constant 8 : i32
    %385 = vector.broadcast %c8_i32_117 : i32 to vector<32x32xi32>
    %386 = arith.cmpi sge, %372, %385 : vector<32x32xi32>
    %c16_i32_118 = arith.constant 16 : i32
    %387 = vector.broadcast %c16_i32_118 : i32 to vector<32x32xi32>
    %388 = arith.cmpi slt, %372, %387 : vector<32x32xi32>
    %389 = arith.andi %386, %388 : vector<32x32xi1>
    %c8_i32_119 = arith.constant 8 : i32
    %390 = vector.broadcast %c8_i32_119 : i32 to vector<32x32xi32>
    %391 = arith.cmpi sge, %373, %390 : vector<32x32xi32>
    %392 = arith.andi %389, %391 : vector<32x32xi1>
    %c16_i32_120 = arith.constant 16 : i32
    %393 = vector.broadcast %c16_i32_120 : i32 to vector<32x32xi32>
    %394 = arith.cmpi slt, %373, %393 : vector<32x32xi32>
    %395 = arith.andi %392, %394 : vector<32x32xi1>
    %396 = arith.ori %384, %395 : vector<32x32xi1>
    %c16_i32_121 = arith.constant 16 : i32
    %397 = vector.broadcast %c16_i32_121 : i32 to vector<32x32xi32>
    %398 = arith.cmpi sge, %372, %397 : vector<32x32xi32>
    %c24_i32_122 = arith.constant 24 : i32
    %399 = vector.broadcast %c24_i32_122 : i32 to vector<32x32xi32>
    %400 = arith.cmpi slt, %372, %399 : vector<32x32xi32>
    %401 = arith.andi %398, %400 : vector<32x32xi1>
    %c16_i32_123 = arith.constant 16 : i32
    %402 = vector.broadcast %c16_i32_123 : i32 to vector<32x32xi32>
    %403 = arith.cmpi sge, %373, %402 : vector<32x32xi32>
    %404 = arith.andi %401, %403 : vector<32x32xi1>
    %c24_i32_124 = arith.constant 24 : i32
    %405 = vector.broadcast %c24_i32_124 : i32 to vector<32x32xi32>
    %406 = arith.cmpi slt, %373, %405 : vector<32x32xi32>
    %407 = arith.andi %404, %406 : vector<32x32xi1>
    %408 = arith.ori %396, %407 : vector<32x32xi1>
    %c24_i32_125 = arith.constant 24 : i32
    %409 = vector.broadcast %c24_i32_125 : i32 to vector<32x32xi32>
    %410 = arith.cmpi sge, %372, %409 : vector<32x32xi32>
    %c32_i32_126 = arith.constant 32 : i32
    %411 = vector.broadcast %c32_i32_126 : i32 to vector<32x32xi32>
    %412 = arith.cmpi slt, %372, %411 : vector<32x32xi32>
    %413 = arith.andi %410, %412 : vector<32x32xi1>
    %c24_i32_127 = arith.constant 24 : i32
    %414 = vector.broadcast %c24_i32_127 : i32 to vector<32x32xi32>
    %415 = arith.cmpi sge, %373, %414 : vector<32x32xi32>
    %416 = arith.andi %413, %415 : vector<32x32xi1>
    %c32_i32_128 = arith.constant 32 : i32
    %417 = vector.broadcast %c32_i32_128 : i32 to vector<32x32xi32>
    %418 = arith.cmpi slt, %373, %417 : vector<32x32xi32>
    %419 = arith.andi %416, %418 : vector<32x32xi1>
    %420 = arith.ori %408, %419 : vector<32x32xi1>
    %421 = arith.extui %420 : vector<32x32xi1> to vector<32x32xi32>
    %422 = arith.sitofp %421 : vector<32x32xi32> to vector<32x32xf32>
    %cst_129 = arith.constant 0.353553385 : f32
    %423 = vector.broadcast %cst_129 : f32 to vector<32x32xf32>
    %424 = arith.mulf %422, %423 : vector<32x32xf32>
    %c0_130 = arith.constant 0 : index
    %c0_131 = arith.constant 0 : index
    %425 = vector.load %arg3[%c0_130, %c0_131] : memref<8x8xf32, #tpu.memory_space<vmem>>, vector<8x8xf32>
    %426 = tpu.concatenate %425, %425, %425, %425 in 0 : vector<8x8xf32>, vector<8x8xf32>, vector<8x8xf32>, vector<8x8xf32> -> vector<32x8xf32>
    %c0_132 = arith.constant 0 : index
    %c0_133 = arith.constant 0 : index
    %c0_134 = arith.constant 0 : index
    %427 = vector.load %arg14[%c0_132, %c0_133, %c0_134] : memref<2x8x96xf32, #tpu.memory_space<vmem>>, vector<1x8x96xf32>
    %428 = vector.shape_cast %427 : vector<1x8x96xf32> to vector<8x96xf32>
    %c0_135 = arith.constant 0 : index
    %c0_136 = arith.constant 0 : index
    %c0_137 = arith.constant 0 : index
    %429 = vector.load %arg10[%c0_135, %c0_136, %c0_137] : memref<2x32x96xf32, #tpu.memory_space<vmem>>, vector<1x32x96xf32>
    %430 = vector.shape_cast %429 : vector<1x32x96xf32> to vector<32x96xf32>
    %431 = vector.extract_strided_slice %428 {offsets = [0, 0], sizes = [1, 96], strides = [1, 1]} : vector<8x96xf32> to vector<1x96xf32>
    %c0_138 = arith.constant 0 : index
    %c0_139 = arith.constant 0 : index
    %c0_140 = arith.constant 0 : index
    %432 = vector.load %arg11[%c0_138, %c0_139, %c0_140] : memref<2x32x32xf32, #tpu.memory_space<vmem>>, vector<1x32x32xf32>
    %433 = vector.shape_cast %432 : vector<1x32x32xf32> to vector<32x32xf32>
    %434 = vector.extract_strided_slice %428 {offsets = [1, 0], sizes = [1, 32], strides = [1, 1]} : vector<8x96xf32> to vector<1x32xf32>
    %cst_141 = arith.constant dense<0.000000e+00> : vector<8x96xf32>
    %435 = tpu.matmul %371, %430, %cst_141 {dimension_numbers = #tpu.dot_dimension_numbers<[1], [0], [0], [1], [0, 0, 1, 1], [], []>} : vector<8x32xf32>, vector<32x96xf32>, vector<8x96xf32> -> vector<8x96xf32>
    %436 = vector.broadcast %431 : vector<1x96xf32> to vector<8x96xf32>
    %437 = arith.addf %435, %436 : vector<8x96xf32>
    %438 = vector.extract_strided_slice %437 {offsets = [0, 0], sizes = [8, 32], strides = [1, 1]} : vector<8x96xf32> to vector<8x32xf32>
    %439 = vector.extract_strided_slice %437 {offsets = [0, 32], sizes = [8, 32], strides = [1, 1]} : vector<8x96xf32> to vector<8x32xf32>
    %440 = vector.extract_strided_slice %437 {offsets = [0, 64], sizes = [8, 32], strides = [1, 1]} : vector<8x96xf32> to vector<8x32xf32>
    %441 = tpu.concatenate %438, %438, %438, %438 in 0 : vector<8x32xf32>, vector<8x32xf32>, vector<8x32xf32>, vector<8x32xf32> -> vector<32x32xf32>
    %442 = arith.mulf %441, %424 : vector<32x32xf32>
    %cst_142 = arith.constant dense<0.000000e+00> : vector<32x8xf32>
    %443 = tpu.matmul %442, %439, %cst_142 {dimension_numbers = #tpu.dot_dimension_numbers<[1], [1], [0], [0], [0, 0, 1, 0], [], []>} : vector<32x32xf32>, vector<8x32xf32>, vector<32x8xf32> -> vector<32x8xf32>
    %444 = arith.addf %443, %426 : vector<32x8xf32>
    %cst_143 = arith.constant dense<0xFF800000> : vector<32xf32>
    %445 = vector.multi_reduction <maximumf>, %444, %cst_143 [1] : vector<32x8xf32> to vector<32xf32>
    %446 = vector.shape_cast %445 : vector<32xf32> to vector<32x1xf32>
    %447 = vector.broadcast %446 : vector<32x1xf32> to vector<32x8xf32>
    %448 = arith.subf %444, %447 : vector<32x8xf32>
    %449 = math.exp %448 : vector<32x8xf32>
    %cst_144 = arith.constant dense<0.000000e+00> : vector<32xf32>
    %450 = vector.multi_reduction <add>, %449, %cst_144 [1] : vector<32x8xf32> to vector<32xf32>
    %451 = vector.shape_cast %450 : vector<32xf32> to vector<32x1xf32>
    %452 = tpu.reciprocal %451 {approx = true} : vector<32x1xf32> -> vector<32x1xf32>
    %453 = vector.broadcast %452 : vector<32x1xf32> to vector<32x8xf32>
    %454 = arith.mulf %449, %453 : vector<32x8xf32>
    %cst_145 = arith.constant dense<0.000000e+00> : vector<32x32xf32>
    %455 = tpu.matmul %454, %440, %cst_145 {dimension_numbers = #tpu.dot_dimension_numbers<[1], [0], [0], [1], [0, 0, 1, 1], [], []>} : vector<32x8xf32>, vector<8x32xf32>, vector<32x32xf32> -> vector<32x32xf32>
    %456 = arith.mulf %455, %422 : vector<32x32xf32>
    %457 = vector.extract_strided_slice %456 {offsets = [0, 0], sizes = [8, 32], strides = [1, 1]} : vector<32x32xf32> to vector<8x32xf32>
    %458 = vector.extract_strided_slice %456 {offsets = [8, 0], sizes = [8, 32], strides = [1, 1]} : vector<32x32xf32> to vector<8x32xf32>
    %459 = arith.addf %457, %458 : vector<8x32xf32>
    %460 = vector.extract_strided_slice %456 {offsets = [16, 0], sizes = [8, 32], strides = [1, 1]} : vector<32x32xf32> to vector<8x32xf32>
    %461 = arith.addf %459, %460 : vector<8x32xf32>
    %462 = vector.extract_strided_slice %456 {offsets = [24, 0], sizes = [8, 32], strides = [1, 1]} : vector<32x32xf32> to vector<8x32xf32>
    %463 = arith.addf %461, %462 : vector<8x32xf32>
    %cst_146 = arith.constant dense<0.000000e+00> : vector<8x32xf32>
    %464 = tpu.matmul %463, %433, %cst_146 {dimension_numbers = #tpu.dot_dimension_numbers<[1], [0], [0], [1], [0, 0, 1, 1], [], []>} : vector<8x32xf32>, vector<32x32xf32>, vector<8x32xf32> -> vector<8x32xf32>
    %465 = vector.broadcast %434 : vector<1x32xf32> to vector<8x32xf32>
    %466 = arith.addf %464, %465 : vector<8x32xf32>
    %467 = arith.addf %371, %466 : vector<8x32xf32>
    %468 = vector.extract_strided_slice %428 {offsets = [2, 0], sizes = [1, 32], strides = [1, 1]} : vector<8x96xf32> to vector<1x32xf32>
    %469 = vector.extract_strided_slice %428 {offsets = [3, 0], sizes = [1, 32], strides = [1, 1]} : vector<8x96xf32> to vector<1x32xf32>
    %cst_147 = arith.constant dense<0.000000e+00> : vector<8xf32>
    %470 = vector.multi_reduction <add>, %467, %cst_147 [1] : vector<8x32xf32> to vector<8xf32>
    %471 = vector.shape_cast %470 : vector<8xf32> to vector<8x1xf32>
    %cst_148 = arith.constant 3.200000e+01 : f32
    %472 = vector.broadcast %cst_148 : f32 to vector<8x1xf32>
    %473 = arith.divf %471, %472 : vector<8x1xf32>
    %474 = vector.broadcast %473 : vector<8x1xf32> to vector<8x32xf32>
    %475 = arith.subf %467, %474 : vector<8x32xf32>
    %476 = arith.mulf %475, %475 : vector<8x32xf32>
    %cst_149 = arith.constant dense<0.000000e+00> : vector<8xf32>
    %477 = vector.multi_reduction <add>, %476, %cst_149 [1] : vector<8x32xf32> to vector<8xf32>
    %478 = vector.shape_cast %477 : vector<8xf32> to vector<8x1xf32>
    %cst_150 = arith.constant 3.200000e+01 : f32
    %479 = vector.broadcast %cst_150 : f32 to vector<8x1xf32>
    %480 = arith.divf %478, %479 : vector<8x1xf32>
    %481 = vector.broadcast %473 : vector<8x1xf32> to vector<8x32xf32>
    %482 = arith.subf %467, %481 : vector<8x32xf32>
    %cst_151 = arith.constant 9.99999974E-6 : f32
    %483 = vector.broadcast %cst_151 : f32 to vector<8x1xf32>
    %484 = arith.addf %480, %483 : vector<8x1xf32>
    %485 = math.rsqrt %484 : vector<8x1xf32>
    %486 = vector.broadcast %485 : vector<8x1xf32> to vector<8x32xf32>
    %487 = arith.mulf %482, %486 : vector<8x32xf32>
    %488 = vector.broadcast %468 : vector<1x32xf32> to vector<8x32xf32>
    %489 = arith.mulf %487, %488 : vector<8x32xf32>
    %490 = vector.broadcast %469 : vector<1x32xf32> to vector<8x32xf32>
    %491 = arith.addf %489, %490 : vector<8x32xf32>
    %c0_152 = arith.constant 0 : index
    %c0_153 = arith.constant 0 : index
    %c0_154 = arith.constant 0 : index
    %492 = vector.load %arg12[%c0_152, %c0_153, %c0_154] : memref<2x32x64xf32, #tpu.memory_space<vmem>>, vector<1x32x64xf32>
    %493 = vector.shape_cast %492 : vector<1x32x64xf32> to vector<32x64xf32>
    %cst_155 = arith.constant dense<0.000000e+00> : vector<8x64xf32>
    %494 = tpu.matmul %491, %493, %cst_155 {dimension_numbers = #tpu.dot_dimension_numbers<[1], [0], [0], [1], [0, 0, 1, 1], [], []>} : vector<8x32xf32>, vector<32x64xf32>, vector<8x64xf32> -> vector<8x64xf32>
    %495 = vector.extract_strided_slice %428 {offsets = [4, 0], sizes = [1, 64], strides = [1, 1]} : vector<8x96xf32> to vector<1x64xf32>
    %496 = vector.broadcast %495 : vector<1x64xf32> to vector<8x64xf32>
    %497 = arith.addf %494, %496 : vector<8x64xf32>
    %cst_156 = arith.constant 0.000000e+00 : f32
    %498 = vector.broadcast %cst_156 : f32 to vector<8x64xf32>
    %499 = arith.maximumf %497, %498 : vector<8x64xf32>
    %c0_157 = arith.constant 0 : index
    %c0_158 = arith.constant 0 : index
    %c0_159 = arith.constant 0 : index
    %500 = vector.load %arg13[%c0_157, %c0_158, %c0_159] : memref<2x64x32xf32, #tpu.memory_space<vmem>>, vector<1x64x32xf32>
    %501 = vector.shape_cast %500 : vector<1x64x32xf32> to vector<64x32xf32>
    %cst_160 = arith.constant dense<0.000000e+00> : vector<8x32xf32>
    %502 = tpu.matmul %499, %501, %cst_160 {dimension_numbers = #tpu.dot_dimension_numbers<[1], [0], [0], [1], [0, 0, 1, 1], [], []>} : vector<8x64xf32>, vector<64x32xf32>, vector<8x32xf32> -> vector<8x32xf32>
    %503 = vector.extract_strided_slice %428 {offsets = [5, 0], sizes = [1, 32], strides = [1, 1]} : vector<8x96xf32> to vector<1x32xf32>
    %504 = vector.broadcast %503 : vector<1x32xf32> to vector<8x32xf32>
    %505 = arith.addf %502, %504 : vector<8x32xf32>
    %506 = arith.addf %491, %505 : vector<8x32xf32>
    %507 = vector.extract_strided_slice %428 {offsets = [6, 0], sizes = [1, 32], strides = [1, 1]} : vector<8x96xf32> to vector<1x32xf32>
    %508 = vector.extract_strided_slice %428 {offsets = [7, 0], sizes = [1, 32], strides = [1, 1]} : vector<8x96xf32> to vector<1x32xf32>
    %cst_161 = arith.constant dense<0.000000e+00> : vector<8xf32>
    %509 = vector.multi_reduction <add>, %506, %cst_161 [1] : vector<8x32xf32> to vector<8xf32>
    %510 = vector.shape_cast %509 : vector<8xf32> to vector<8x1xf32>
    %cst_162 = arith.constant 3.200000e+01 : f32
    %511 = vector.broadcast %cst_162 : f32 to vector<8x1xf32>
    %512 = arith.divf %510, %511 : vector<8x1xf32>
    %513 = vector.broadcast %512 : vector<8x1xf32> to vector<8x32xf32>
    %514 = arith.subf %506, %513 : vector<8x32xf32>
    %515 = arith.mulf %514, %514 : vector<8x32xf32>
    %cst_163 = arith.constant dense<0.000000e+00> : vector<8xf32>
    %516 = vector.multi_reduction <add>, %515, %cst_163 [1] : vector<8x32xf32> to vector<8xf32>
    %517 = vector.shape_cast %516 : vector<8xf32> to vector<8x1xf32>
    %cst_164 = arith.constant 3.200000e+01 : f32
    %518 = vector.broadcast %cst_164 : f32 to vector<8x1xf32>
    %519 = arith.divf %517, %518 : vector<8x1xf32>
    %520 = vector.broadcast %512 : vector<8x1xf32> to vector<8x32xf32>
    %521 = arith.subf %506, %520 : vector<8x32xf32>
    %cst_165 = arith.constant 9.99999974E-6 : f32
    %522 = vector.broadcast %cst_165 : f32 to vector<8x1xf32>
    %523 = arith.addf %519, %522 : vector<8x1xf32>
    %524 = math.rsqrt %523 : vector<8x1xf32>
    %525 = vector.broadcast %524 : vector<8x1xf32> to vector<8x32xf32>
    %526 = arith.mulf %521, %525 : vector<8x32xf32>
    %527 = vector.broadcast %507 : vector<1x32xf32> to vector<8x32xf32>
    %528 = arith.mulf %526, %527 : vector<8x32xf32>
    %529 = vector.broadcast %508 : vector<1x32xf32> to vector<8x32xf32>
    %530 = arith.addf %528, %529 : vector<8x32xf32>
    %c1_166 = arith.constant 1 : index
    %c0_167 = arith.constant 0 : index
    %c0_168 = arith.constant 0 : index
    %531 = vector.load %arg14[%c1_166, %c0_167, %c0_168] : memref<2x8x96xf32, #tpu.memory_space<vmem>>, vector<1x8x96xf32>
    %532 = vector.shape_cast %531 : vector<1x8x96xf32> to vector<8x96xf32>
    %c1_169 = arith.constant 1 : index
    %c0_170 = arith.constant 0 : index
    %c0_171 = arith.constant 0 : index
    %533 = vector.load %arg10[%c1_169, %c0_170, %c0_171] : memref<2x32x96xf32, #tpu.memory_space<vmem>>, vector<1x32x96xf32>
    %534 = vector.shape_cast %533 : vector<1x32x96xf32> to vector<32x96xf32>
    %535 = vector.extract_strided_slice %532 {offsets = [0, 0], sizes = [1, 96], strides = [1, 1]} : vector<8x96xf32> to vector<1x96xf32>
    %c1_172 = arith.constant 1 : index
    %c0_173 = arith.constant 0 : index
    %c0_174 = arith.constant 0 : index
    %536 = vector.load %arg11[%c1_172, %c0_173, %c0_174] : memref<2x32x32xf32, #tpu.memory_space<vmem>>, vector<1x32x32xf32>
    %537 = vector.shape_cast %536 : vector<1x32x32xf32> to vector<32x32xf32>
    %538 = vector.extract_strided_slice %532 {offsets = [1, 0], sizes = [1, 32], strides = [1, 1]} : vector<8x96xf32> to vector<1x32xf32>
    %cst_175 = arith.constant dense<0.000000e+00> : vector<8x96xf32>
    %539 = tpu.matmul %530, %534, %cst_175 {dimension_numbers = #tpu.dot_dimension_numbers<[1], [0], [0], [1], [0, 0, 1, 1], [], []>} : vector<8x32xf32>, vector<32x96xf32>, vector<8x96xf32> -> vector<8x96xf32>
    %540 = vector.broadcast %535 : vector<1x96xf32> to vector<8x96xf32>
    %541 = arith.addf %539, %540 : vector<8x96xf32>
    %542 = vector.extract_strided_slice %541 {offsets = [0, 0], sizes = [8, 32], strides = [1, 1]} : vector<8x96xf32> to vector<8x32xf32>
    %543 = vector.extract_strided_slice %541 {offsets = [0, 32], sizes = [8, 32], strides = [1, 1]} : vector<8x96xf32> to vector<8x32xf32>
    %544 = vector.extract_strided_slice %541 {offsets = [0, 64], sizes = [8, 32], strides = [1, 1]} : vector<8x96xf32> to vector<8x32xf32>
    %545 = tpu.concatenate %542, %542, %542, %542 in 0 : vector<8x32xf32>, vector<8x32xf32>, vector<8x32xf32>, vector<8x32xf32> -> vector<32x32xf32>
    %546 = arith.mulf %545, %424 : vector<32x32xf32>
    %cst_176 = arith.constant dense<0.000000e+00> : vector<32x8xf32>
    %547 = tpu.matmul %546, %543, %cst_176 {dimension_numbers = #tpu.dot_dimension_numbers<[1], [1], [0], [0], [0, 0, 1, 0], [], []>} : vector<32x32xf32>, vector<8x32xf32>, vector<32x8xf32> -> vector<32x8xf32>
    %548 = arith.addf %547, %426 : vector<32x8xf32>
    %cst_177 = arith.constant dense<0xFF800000> : vector<32xf32>
    %549 = vector.multi_reduction <maximumf>, %548, %cst_177 [1] : vector<32x8xf32> to vector<32xf32>
    %550 = vector.shape_cast %549 : vector<32xf32> to vector<32x1xf32>
    %551 = vector.broadcast %550 : vector<32x1xf32> to vector<32x8xf32>
    %552 = arith.subf %548, %551 : vector<32x8xf32>
    %553 = math.exp %552 : vector<32x8xf32>
    %cst_178 = arith.constant dense<0.000000e+00> : vector<32xf32>
    %554 = vector.multi_reduction <add>, %553, %cst_178 [1] : vector<32x8xf32> to vector<32xf32>
    %555 = vector.shape_cast %554 : vector<32xf32> to vector<32x1xf32>
    %556 = tpu.reciprocal %555 {approx = true} : vector<32x1xf32> -> vector<32x1xf32>
    %557 = vector.broadcast %556 : vector<32x1xf32> to vector<32x8xf32>
    %558 = arith.mulf %553, %557 : vector<32x8xf32>
    %cst_179 = arith.constant dense<0.000000e+00> : vector<32x32xf32>
    %559 = tpu.matmul %558, %544, %cst_179 {dimension_numbers = #tpu.dot_dimension_numbers<[1], [0], [0], [1], [0, 0, 1, 1], [], []>} : vector<32x8xf32>, vector<8x32xf32>, vector<32x32xf32> -> vector<32x32xf32>
    %560 = arith.mulf %559, %422 : vector<32x32xf32>
    %561 = vector.extract_strided_slice %560 {offsets = [0, 0], sizes = [8, 32], strides = [1, 1]} : vector<32x32xf32> to vector<8x32xf32>
    %562 = vector.extract_strided_slice %560 {offsets = [8, 0], sizes = [8, 32], strides = [1, 1]} : vector<32x32xf32> to vector<8x32xf32>
    %563 = arith.addf %561, %562 : vector<8x32xf32>
    %564 = vector.extract_strided_slice %560 {offsets = [16, 0], sizes = [8, 32], strides = [1, 1]} : vector<32x32xf32> to vector<8x32xf32>
    %565 = arith.addf %563, %564 : vector<8x32xf32>
    %566 = vector.extract_strided_slice %560 {offsets = [24, 0], sizes = [8, 32], strides = [1, 1]} : vector<32x32xf32> to vector<8x32xf32>
    %567 = arith.addf %565, %566 : vector<8x32xf32>
    %cst_180 = arith.constant dense<0.000000e+00> : vector<8x32xf32>
    %568 = tpu.matmul %567, %537, %cst_180 {dimension_numbers = #tpu.dot_dimension_numbers<[1], [0], [0], [1], [0, 0, 1, 1], [], []>} : vector<8x32xf32>, vector<32x32xf32>, vector<8x32xf32> -> vector<8x32xf32>
    %569 = vector.broadcast %538 : vector<1x32xf32> to vector<8x32xf32>
    %570 = arith.addf %568, %569 : vector<8x32xf32>
    %571 = arith.addf %530, %570 : vector<8x32xf32>
    %572 = vector.extract_strided_slice %532 {offsets = [2, 0], sizes = [1, 32], strides = [1, 1]} : vector<8x96xf32> to vector<1x32xf32>
    %573 = vector.extract_strided_slice %532 {offsets = [3, 0], sizes = [1, 32], strides = [1, 1]} : vector<8x96xf32> to vector<1x32xf32>
    %cst_181 = arith.constant dense<0.000000e+00> : vector<8xf32>
    %574 = vector.multi_reduction <add>, %571, %cst_181 [1] : vector<8x32xf32> to vector<8xf32>
    %575 = vector.shape_cast %574 : vector<8xf32> to vector<8x1xf32>
    %cst_182 = arith.constant 3.200000e+01 : f32
    %576 = vector.broadcast %cst_182 : f32 to vector<8x1xf32>
    %577 = arith.divf %575, %576 : vector<8x1xf32>
    %578 = vector.broadcast %577 : vector<8x1xf32> to vector<8x32xf32>
    %579 = arith.subf %571, %578 : vector<8x32xf32>
    %580 = arith.mulf %579, %579 : vector<8x32xf32>
    %cst_183 = arith.constant dense<0.000000e+00> : vector<8xf32>
    %581 = vector.multi_reduction <add>, %580, %cst_183 [1] : vector<8x32xf32> to vector<8xf32>
    %582 = vector.shape_cast %581 : vector<8xf32> to vector<8x1xf32>
    %cst_184 = arith.constant 3.200000e+01 : f32
    %583 = vector.broadcast %cst_184 : f32 to vector<8x1xf32>
    %584 = arith.divf %582, %583 : vector<8x1xf32>
    %585 = vector.broadcast %577 : vector<8x1xf32> to vector<8x32xf32>
    %586 = arith.subf %571, %585 : vector<8x32xf32>
    %cst_185 = arith.constant 9.99999974E-6 : f32
    %587 = vector.broadcast %cst_185 : f32 to vector<8x1xf32>
    %588 = arith.addf %584, %587 : vector<8x1xf32>
    %589 = math.rsqrt %588 : vector<8x1xf32>
    %590 = vector.broadcast %589 : vector<8x1xf32> to vector<8x32xf32>
    %591 = arith.mulf %586, %590 : vector<8x32xf32>
    %592 = vector.broadcast %572 : vector<1x32xf32> to vector<8x32xf32>
    %593 = arith.mulf %591, %592 : vector<8x32xf32>
    %594 = vector.broadcast %573 : vector<1x32xf32> to vector<8x32xf32>
    %595 = arith.addf %593, %594 : vector<8x32xf32>
    %c1_186 = arith.constant 1 : index
    %c0_187 = arith.constant 0 : index
    %c0_188 = arith.constant 0 : index
    %596 = vector.load %arg12[%c1_186, %c0_187, %c0_188] : memref<2x32x64xf32, #tpu.memory_space<vmem>>, vector<1x32x64xf32>
    %597 = vector.shape_cast %596 : vector<1x32x64xf32> to vector<32x64xf32>
    %cst_189 = arith.constant dense<0.000000e+00> : vector<8x64xf32>
    %598 = tpu.matmul %595, %597, %cst_189 {dimension_numbers = #tpu.dot_dimension_numbers<[1], [0], [0], [1], [0, 0, 1, 1], [], []>} : vector<8x32xf32>, vector<32x64xf32>, vector<8x64xf32> -> vector<8x64xf32>
    %599 = vector.extract_strided_slice %532 {offsets = [4, 0], sizes = [1, 64], strides = [1, 1]} : vector<8x96xf32> to vector<1x64xf32>
    %600 = vector.broadcast %599 : vector<1x64xf32> to vector<8x64xf32>
    %601 = arith.addf %598, %600 : vector<8x64xf32>
    %cst_190 = arith.constant 0.000000e+00 : f32
    %602 = vector.broadcast %cst_190 : f32 to vector<8x64xf32>
    %603 = arith.maximumf %601, %602 : vector<8x64xf32>
    %c1_191 = arith.constant 1 : index
    %c0_192 = arith.constant 0 : index
    %c0_193 = arith.constant 0 : index
    %604 = vector.load %arg13[%c1_191, %c0_192, %c0_193] : memref<2x64x32xf32, #tpu.memory_space<vmem>>, vector<1x64x32xf32>
    %605 = vector.shape_cast %604 : vector<1x64x32xf32> to vector<64x32xf32>
    %cst_194 = arith.constant dense<0.000000e+00> : vector<8x32xf32>
    %606 = tpu.matmul %603, %605, %cst_194 {dimension_numbers = #tpu.dot_dimension_numbers<[1], [0], [0], [1], [0, 0, 1, 1], [], []>} : vector<8x64xf32>, vector<64x32xf32>, vector<8x32xf32> -> vector<8x32xf32>
    %607 = vector.extract_strided_slice %532 {offsets = [5, 0], sizes = [1, 32], strides = [1, 1]} : vector<8x96xf32> to vector<1x32xf32>
    %608 = vector.broadcast %607 : vector<1x32xf32> to vector<8x32xf32>
    %609 = arith.addf %606, %608 : vector<8x32xf32>
    %610 = arith.addf %595, %609 : vector<8x32xf32>
    %611 = vector.extract_strided_slice %532 {offsets = [6, 0], sizes = [1, 32], strides = [1, 1]} : vector<8x96xf32> to vector<1x32xf32>
    %612 = vector.extract_strided_slice %532 {offsets = [7, 0], sizes = [1, 32], strides = [1, 1]} : vector<8x96xf32> to vector<1x32xf32>
    %cst_195 = arith.constant dense<0.000000e+00> : vector<8xf32>
    %613 = vector.multi_reduction <add>, %610, %cst_195 [1] : vector<8x32xf32> to vector<8xf32>
    %614 = vector.shape_cast %613 : vector<8xf32> to vector<8x1xf32>
    %cst_196 = arith.constant 3.200000e+01 : f32
    %615 = vector.broadcast %cst_196 : f32 to vector<8x1xf32>
    %616 = arith.divf %614, %615 : vector<8x1xf32>
    %617 = vector.broadcast %616 : vector<8x1xf32> to vector<8x32xf32>
    %618 = arith.subf %610, %617 : vector<8x32xf32>
    %619 = arith.mulf %618, %618 : vector<8x32xf32>
    %cst_197 = arith.constant dense<0.000000e+00> : vector<8xf32>
    %620 = vector.multi_reduction <add>, %619, %cst_197 [1] : vector<8x32xf32> to vector<8xf32>
    %621 = vector.shape_cast %620 : vector<8xf32> to vector<8x1xf32>
    %cst_198 = arith.constant 3.200000e+01 : f32
    %622 = vector.broadcast %cst_198 : f32 to vector<8x1xf32>
    %623 = arith.divf %621, %622 : vector<8x1xf32>
    %624 = vector.broadcast %616 : vector<8x1xf32> to vector<8x32xf32>
    %625 = arith.subf %610, %624 : vector<8x32xf32>
    %cst_199 = arith.constant 9.99999974E-6 : f32
    %626 = vector.broadcast %cst_199 : f32 to vector<8x1xf32>
    %627 = arith.addf %623, %626 : vector<8x1xf32>
    %628 = math.rsqrt %627 : vector<8x1xf32>
    %629 = vector.broadcast %628 : vector<8x1xf32> to vector<8x32xf32>
    %630 = arith.mulf %625, %629 : vector<8x32xf32>
    %631 = vector.broadcast %611 : vector<1x32xf32> to vector<8x32xf32>
    %632 = arith.mulf %630, %631 : vector<8x32xf32>
    %633 = vector.broadcast %612 : vector<1x32xf32> to vector<8x32xf32>
    %634 = arith.addf %632, %633 : vector<8x32xf32>
    %c94 = arith.constant 94 : index
    %c0_200 = arith.constant 0 : index
    %635 = vector.load %arg1[%c94, %c0_200] : memref<98x32xf32, #tpu.memory_space<vmem>>, vector<1x32xf32>
    %c95 = arith.constant 95 : index
    %c0_201 = arith.constant 0 : index
    %636 = vector.load %arg1[%c95, %c0_201] : memref<98x32xf32, #tpu.memory_space<vmem>>, vector<1x32xf32>
    %cst_202 = arith.constant dense<0.000000e+00> : vector<8xf32>
    %637 = vector.multi_reduction <add>, %634, %cst_202 [1] : vector<8x32xf32> to vector<8xf32>
    %638 = vector.shape_cast %637 : vector<8xf32> to vector<8x1xf32>
    %cst_203 = arith.constant 3.200000e+01 : f32
    %639 = vector.broadcast %cst_203 : f32 to vector<8x1xf32>
    %640 = arith.divf %638, %639 : vector<8x1xf32>
    %641 = vector.broadcast %640 : vector<8x1xf32> to vector<8x32xf32>
    %642 = arith.subf %634, %641 : vector<8x32xf32>
    %643 = arith.mulf %642, %642 : vector<8x32xf32>
    %cst_204 = arith.constant dense<0.000000e+00> : vector<8xf32>
    %644 = vector.multi_reduction <add>, %643, %cst_204 [1] : vector<8x32xf32> to vector<8xf32>
    %645 = vector.shape_cast %644 : vector<8xf32> to vector<8x1xf32>
    %cst_205 = arith.constant 3.200000e+01 : f32
    %646 = vector.broadcast %cst_205 : f32 to vector<8x1xf32>
    %647 = arith.divf %645, %646 : vector<8x1xf32>
    %648 = vector.broadcast %640 : vector<8x1xf32> to vector<8x32xf32>
    %649 = arith.subf %634, %648 : vector<8x32xf32>
    %cst_206 = arith.constant 9.99999997E-7 : f32
    %650 = vector.broadcast %cst_206 : f32 to vector<8x1xf32>
    %651 = arith.addf %647, %650 : vector<8x1xf32>
    %652 = math.rsqrt %651 : vector<8x1xf32>
    %653 = vector.broadcast %652 : vector<8x1xf32> to vector<8x32xf32>
    %654 = arith.mulf %649, %653 : vector<8x32xf32>
    %655 = vector.broadcast %635 : vector<1x32xf32> to vector<8x32xf32>
    %656 = arith.mulf %654, %655 : vector<8x32xf32>
    %657 = vector.broadcast %636 : vector<1x32xf32> to vector<8x32xf32>
    %658 = arith.addf %656, %657 : vector<8x32xf32>
    %c96 = arith.constant 96 : index
    %c0_207 = arith.constant 0 : index
    %659 = vector.load %arg1[%c96, %c0_207] : memref<98x32xf32, #tpu.memory_space<vmem>>, vector<1x32xf32>
    %c97 = arith.constant 97 : index
    %c0_208 = arith.constant 0 : index
    %660 = vector.load %arg1[%c97, %c0_208] : memref<98x32xf32, #tpu.memory_space<vmem>>, vector<1x1xf32>
    %661 = vector.broadcast %659 : vector<1x32xf32> to vector<8x32xf32>
    %662 = arith.mulf %658, %661 : vector<8x32xf32>
    %cst_209 = arith.constant dense<0.000000e+00> : vector<8xf32>
    %663 = vector.multi_reduction <add>, %662, %cst_209 [1] : vector<8x32xf32> to vector<8xf32>
    %664 = vector.shape_cast %663 : vector<8xf32> to vector<8x1xf32>
    %665 = vector.broadcast %660 : vector<1x1xf32> to vector<8x1xf32>
    %666 = arith.addf %664, %665 : vector<8x1xf32>
    %667 = arith.negf %666 : vector<8x1xf32>
    %668 = math.exp %667 : vector<8x1xf32>
    %cst_210 = arith.constant 1.000000e+00 : f32
    %669 = vector.broadcast %cst_210 : f32 to vector<8x1xf32>
    %670 = arith.addf %669, %668 : vector<8x1xf32>
    %671 = arith.divf %669, %670 : vector<8x1xf32>
    %672 = arith.mulf %671, %366 : vector<8x1xf32>
    %c0_211 = arith.constant 0 : index
    %c0_212 = arith.constant 0 : index
    %673 = vector.load %arg15[%c0_211, %c0_212] : memref<8x1xf32, #tpu.memory_space<vmem>>, vector<8x1xf32>
    tpu.vector_store %arg15[%c0_211, %c0_212], %672 {strides = array<i32>} : memref<8x1xf32, #tpu.memory_space<vmem>>, vector<8x1xf32>,
    return
  }
}

</mosaic_0001>

<llo_original>
// kernel: forward.1
$region0: #{forward.1}
  #allocation0 [shape = 'u32[]', space=smem, size = 0x4, offset = 0x4, fixed_abs, tag = 'smem constant byte address 0x4 - core index']
  #allocation1 [shape = 'u32[144,128]{1,0:T(1,128)}', space=vmem, size = 0x12000, scoped, tag = 'internal scratch']
  %s0 = inlined_call_operand.vmem [shape: s32[32,4], index: 0, kind: input, shape index: {}]
  %s1 = inlined_call_operand.vmem [shape: f32[98,32], index: 1, kind: input, shape index: {}]
  %s2 = inlined_call_operand.vmem [shape: f32[32,32], index: 2, kind: input, shape index: {}]
  %s3 = inlined_call_operand.vmem [shape: f32[8,8], index: 3, kind: input, shape index: {}]
  %s4 = inlined_call_operand.vmem [shape: f32[8,1], index: 4, kind: input, shape index: {}]
  %s5 = inlined_call_operand.vmem [shape: f32[2,32,96], index: 5, kind: input, shape index: {}]
  %s6 = inlined_call_operand.vmem [shape: f32[2,32,32], index: 6, kind: input, shape index: {}]
  %s7 = inlined_call_operand.vmem [shape: f32[2,32,64], index: 7, kind: input, shape index: {}]
  %s8 = inlined_call_operand.vmem [shape: f32[2,64,32], index: 8, kind: input, shape index: {}]
  %s9 = inlined_call_operand.vmem [shape: f32[2,8,96], index: 9, kind: input, shape index: {}]
  %s10 = inlined_call_operand.vmem [shape: f32[2,32,96], index: 10, kind: input, shape index: {}]
  %s11 = inlined_call_operand.vmem [shape: f32[2,32,32], index: 11, kind: input, shape index: {}]
  %s12 = inlined_call_operand.vmem [shape: f32[2,32,64], index: 12, kind: input, shape index: {}]
  %s13 = inlined_call_operand.vmem [shape: f32[2,64,32], index: 13, kind: input, shape index: {}]
  %s14 = inlined_call_operand.vmem [shape: f32[2,8,96], index: 14, kind: input, shape index: {}]
  %s15 = inlined_call_operand.vmem [shape: f32[8,1], index: 15, kind: output, shape index: {}]
  %s16 = sld [smem:[#allocation0]]
  $region70: #{forward.1} parent=0
    _
  %s18 = ssub.s32 1, %s16
  %s19 = scalar_select 0, %s18, %s16
  // Predicated region
  $region2: #{forward.1} parent=0 // pred_check
    _
  $region3: #{forward.1} parent=0 // pred_check_branch
    %21 = sbr.rel (0) target = $region5
  $region4: #{forward.1} parent=0 // pred_region
    _
  $region5: #{forward.1} parent=0 // pred_fallthru
    _
  // Predicated region
  $region6: #{forward.1} parent=0 // pred_check
    _
  $region7: #{forward.1} parent=0 // pred_check_branch
    %23 = sbr.rel (0) target = $region9
  $region8: #{forward.1} parent=0 // pred_region
    _
  $region9: #{forward.1} parent=0 // pred_fallthru
    _
  // Predicated region
  $region10: #{forward.1} parent=0 // pred_check
    _
  $region11: #{forward.1} parent=0 // pred_check_branch
    %25 = sbr.rel (0) target = $region13
  $region12: #{forward.1} parent=0 // pred_region
    _
  $region13: #{forward.1} parent=0 // pred_fallthru
    _
  // Predicated region
  $region14: #{forward.1} parent=0 // pred_check
    _
  $region15: #{forward.1} parent=0 // pred_check_branch
    %27 = sbr.rel (0) target = $region17
  $region16: #{forward.1} parent=0 // pred_region
    _
  $region17: #{forward.1} parent=0 // pred_fallthru
    _
  // Predicated region
  $region18: #{forward.1} parent=0 // pred_check
    _
  $region19: #{forward.1} parent=0 // pred_check_branch
    %29 = sbr.rel (0) target = $region21
  $region20: #{forward.1} parent=0 // pred_region
    _
  $region21: #{forward.1} parent=0 // pred_fallthru
    _
  // Predicated region
  $region22: #{forward.1} parent=0 // pred_check
    _
  $region23: #{forward.1} parent=0 // pred_check_branch
    %31 = sbr.rel (0) target = $region25
  $region24: #{forward.1} parent=0 // pred_region
    _
  $region25: #{forward.1} parent=0 // pred_fallthru
    _
  // Predicated region
  $region26: #{forward.1} parent=0 // pred_check
    _
  $region27: #{forward.1} parent=0 // pred_check_branch
    %33 = sbr.rel (0) target = $region29
  $region28: #{forward.1} parent=0 // pred_region
    _
  $region29: #{forward.1} parent=0 // pred_fallthru
    _
  // Predicated region
  $region30: #{forward.1} parent=0 // pred_check
    _
  $region31: #{forward.1} parent=0 // pred_check_branch
    %35 = sbr.rel (0) target = $region33
  $region32: #{forward.1} parent=0 // pred_region
    _
  $region33: #{forward.1} parent=0 // pred_fallthru
    _
  // Predicated region
  $region34: #{forward.1} parent=0 // pred_check
    _
  $region35: #{forward.1} parent=0 // pred_check_branch
    %37 = sbr.rel (0) target = $region37
  $region36: #{forward.1} parent=0 // pred_region
    _
  $region37: #{forward.1} parent=0 // pred_fallthru
    _
  // Predicated region
  $region38: #{forward.1} parent=0 // pred_check
    _
  $region39: #{forward.1} parent=0 // pred_check_branch
    %39 = sbr.rel (0) target = $region41
  $region40: #{forward.1} parent=0 // pred_region
    _
  $region41: #{forward.1} parent=0 // pred_fallthru
    _
  // Predicated region
  $region42: #{forward.1} parent=0 // pred_check
    _
  $region43: #{forward.1} parent=0 // pred_check_branch
    %41 = sbr.rel (0) target = $region45
  $region44: #{forward.1} parent=0 // pred_region
    _
  $region45: #{forward.1} parent=0 // pred_fallthru
    _
  // Predicated region
  $region46: #{forward.1} parent=0 // pred_check
    _
  $region47: #{forward.1} parent=0 // pred_check_branch
    %43 = sbr.rel (0) target = $region49
  $region48: #{forward.1} parent=0 // pred_region
    _
  $region49: #{forward.1} parent=0 // pred_fallthru
    _
  // Predicated region
  $region50: #{forward.1} parent=0 // pred_check
    _
  $region51: #{forward.1} parent=0 // pred_check_branch
    %45 = sbr.rel (0) target = $region53
  $region52: #{forward.1} parent=0 // pred_region
    _
  $region53: #{forward.1} parent=0 // pred_fallthru
    _
  // Predicated region
  $region54: #{forward.1} parent=0 // pred_check
    _
  $region55: #{forward.1} parent=0 // pred_check_branch
    %47 = sbr.rel (0) target = $region57
  $region56: #{forward.1} parent=0 // pred_region
    _
  $region57: #{forward.1} parent=0 // pred_fallthru
    _
  // Predicated region
  $region58: #{forward.1} parent=0 // pred_check
    _
  $region59: #{forward.1} parent=0 // pred_check_branch
    %49 = sbr.rel (0) target = $region61
  $region60: #{forward.1} parent=0 // pred_region
    _
  $region61: #{forward.1} parent=0 // pred_fallthru
    _
  %v50 = vld [vmem:[%s0] sm:$0xff]
  %v51 = vld [vmem:[%s0 + $0x8] sm:$0xff]
  %v52 = vld [vmem:[%s0 + $0x10] sm:$0xff]
  %v53 = vld [vmem:[%s0 + $0x18] sm:$0xff]
  %v54 = vlaneseq
  %v55 = vand.u32 %v54, 127
  %56 = vset.pattern.permute.xlu0 0
  %57 = vperm.xlu0 %56, %v50
  %v58 = vpop.permute.xlu0 %57
  %59 = vset.pattern.permute.xlu0 0
  %60 = vperm.xlu0 %59, %v51
  %v61 = vpop.permute.xlu0 %60
  %62 = vset.pattern.permute.xlu0 0
  %63 = vperm.xlu0 %62, %v52
  %v64 = vpop.permute.xlu0 %63
  %65 = vset.pattern.permute.xlu0 0
  %66 = vperm.xlu0 %65, %v53
  %v67 = vpop.permute.xlu0 %66
  %vm68 = vcmp.eq.s32.totalorder %v58, %v55
  %vm69 = vcmp.eq.s32.totalorder %v61, %v55
  %vm70 = vcmp.eq.s32.totalorder %v64, %v55
  %vm71 = vcmp.eq.s32.totalorder %v67, %v55
  %v72 = vadd.s32 %v50, 64
  %v73 = vadd.s32 %v51, 64
  %v74 = vadd.s32 %v52, 64
  %v75 = vadd.s32 %v53, 64
  %76 = vset.pattern.permute.xlu0 1
  %77 = vperm.xlu0 %76, %v72
  %v78 = vpop.permute.xlu0 %77
  %79 = vset.pattern.permute.xlu0 1
  %80 = vperm.xlu0 %79, %v73
  %v81 = vpop.permute.xlu0 %80
  %82 = vset.pattern.permute.xlu0 1
  %83 = vperm.xlu0 %82, %v74
  %v84 = vpop.permute.xlu0 %83
  %85 = vset.pattern.permute.xlu0 1
  %86 = vperm.xlu0 %85, %v75
  %v87 = vpop.permute.xlu0 %86
  %vm88 = vcmp.eq.s32.totalorder %v78, %v55
  %vm89 = vcmp.eq.s32.totalorder %v81, %v55
  %vm90 = vcmp.eq.s32.totalorder %v84, %v55
  %vm91 = vcmp.eq.s32.totalorder %v87, %v55
  %vm92 = vmor %vm68, %vm88
  %vm93 = vmor %vm69, %vm89
  %vm94 = vmor %vm70, %vm90
  %vm95 = vmor %vm71, %vm91
  %v96 = vsel %vm92, 1, 0
  %v97 = vsel %vm93, 1, 0
  %v98 = vsel %vm94, 1, 0
  %v99 = vsel %vm95, 1, 0
  %v100 = vcvt.s32.f32 %v96
  %v101 = vcvt.s32.f32 %v97
  %v102 = vcvt.s32.f32 %v98
  %v103 = vcvt.s32.f32 %v99
  %v104 = vld [vmem:[%s1] sm:$0xff]
  %v105 = vld [vmem:[%s1 + $0x8] sm:$0xff]
  %v106 = vld [vmem:[%s1 + $0x10] sm:$0xff]
  %v107 = vld [vmem:[%s1 + $0x18] sm:$0xff]
  %v108 = vld [vmem:[%s1 + $0x20] sm:$0xff]
  %v109 = vld [vmem:[%s1 + $0x28] sm:$0xff]
  %v110 = vld [vmem:[%s1 + $0x30] sm:$0xff]
  %v111 = vld [vmem:[%s1 + $0x38] sm:$0xff]
  %v112 = vld [vmem:[%s1 + $0x40] sm:$0x3]
  %113 = vset.pattern.permute.xlu0 2
  %114 = vperm.xlu0 %113, %v50
  %v115 = vpop.permute.xlu0 %114
  %116 = vset.pattern.permute.xlu0 2
  %117 = vperm.xlu0 %116, %v51
  %v118 = vpop.permute.xlu0 %117
  %119 = vset.pattern.permute.xlu0 2
  %120 = vperm.xlu0 %119, %v52
  %v121 = vpop.permute.xlu0 %120
  %122 = vset.pattern.permute.xlu0 2
  %123 = vperm.xlu0 %122, %v53
  %v124 = vpop.permute.xlu0 %123
  %vm125 = vcmp.eq.s32.totalorder %v115, %v55
  %vm126 = vcmp.eq.s32.totalorder %v118, %v55
  %vm127 = vcmp.eq.s32.totalorder %v121, %v55
  %vm128 = vcmp.eq.s32.totalorder %v124, %v55
  %v129 = vsel %vm125, 1, 0
  %v130 = vsel %vm126, 1, 0
  %v131 = vsel %vm127, 1, 0
  %v132 = vsel %vm128, 1, 0
  %v133 = vcvt.s32.f32 %v129
  %v134 = vcvt.s32.f32 %v130
  %v135 = vcvt.s32.f32 %v131
  %v136 = vcvt.s32.f32 %v132
  %v137 = vld [vmem:[%s1 + $0x42] sm:$0xf]
  %vm138 = vcmask 31744
  %v140 = vsel %vm138, %v133, 0
  %v143 = vsel %vm138, %v134, 0
  %v146 = vsel %vm138, %v135, 0
  %v149 = vsel %vm138, %v136, 0
  %vm151 = vcmask 1043456
  %v153 = vsel %vm151, %v137, 0
  %155 = vmatprep.subr.mxu0 0.0
  %156 = vmatpush1.msra.mxu0 0.0
  %157 = vmatprep.subr.mxu0 0.0
  %158 = vmatpush1.msra.mxu0 0.0
  %159 = vmatprep.subr.mxu0 0.0
  %160 = vmatpush1.msra.mxu0 0.0
  %161 = vmatprep.subr.mxu0 0.0
  %162 = vmatpush1.msra.mxu0 0.0
  %163 = vmatprep.subr.mxu0 0.0
  %164 = vmatpush1.msra.mxu0 0.0
  %165 = vmatprep.subr.mxu0 0.0
  %166 = vmatpush1.msra.mxu0 0.0
  %167 = vmatprep.subr.mxu0 0.0
  %168 = vmatpush1.msra.mxu0 0.0
  %169 = vmatprep.subr.mxu0 0.0
  %170 = vmatpush1.msra.mxu0 0.0
  %171 = vmatprep.subr.mxu0 0.0
  %172 = vmatpush1.msra.mxu0 0.0
  %173 = vmatprep.subr.mxu0 0.0
  %174 = vmatpush1.msra.mxu0 0.0
  %175 = vmatprep.subr.mxu0 0.0
  %176 = vmatpush1.msra.mxu0 0.0
  %177 = vmatprep.subr.mxu0 0.0
  %178 = vmatpush1.msra.mxu0 0.0
  %179 = vmatprep.subr.mxu0 0.0
  %180 = vmatpush1.msra.mxu0 0.0
  %181 = vmatprep.subr.mxu0 0.0
  %182 = vmatpush1.msra.mxu0 0.0
  %183 = vmatprep.subr.mxu0 0.0
  %184 = vmatpush1.msra.mxu0 0.0
  %185 = vmatprep.subr.mxu0 0.0
  %186 = vmatpush1.msra.mxu0 %v153
  %187 = vmatprep.subr.mxu0 0.0
  %188 = vmatpush2.msra.mxu0 0.0
  %189 = vmatprep.subr.mxu0 0.0
  %190 = vmatpush2.msra.mxu0 0.0
  %191 = vmatprep.subr.mxu0 0.0
  %192 = vmatpush2.msra.mxu0 0.0
  %193 = vmatprep.subr.mxu0 0.0
  %194 = vmatpush2.msra.mxu0 0.0
  %195 = vmatprep.subr.mxu0 0.0
  %196 = vmatpush2.msra.mxu0 0.0
  %197 = vmatprep.subr.mxu0 0.0
  %198 = vmatpush2.msra.mxu0 0.0
  %199 = vmatprep.subr.mxu0 0.0
  %200 = vmatpush2.msra.mxu0 0.0
  %201 = vmatprep.subr.mxu0 0.0
  %202 = vmatpush2.msra.mxu0 0.0
  %203 = vmatprep.subr.mxu0 0.0
  %204 = vmatpush2.msra.mxu0 0.0
  %205 = vmatprep.subr.mxu0 0.0
  %206 = vmatpush2.msra.mxu0 0.0
  %207 = vmatprep.subr.mxu0 0.0
  %208 = vmatpush2.msra.mxu0 0.0
  %209 = vmatprep.subr.mxu0 0.0
  %210 = vmatpush2.msra.mxu0 0.0
  %211 = vmatprep.subr.mxu0 0.0
  %212 = vmatpush2.msra.mxu0 0.0
  %213 = vmatprep.subr.mxu0 0.0
  %214 = vmatpush2.msra.mxu0 0.0
  %215 = vmatprep.subr.mxu0 0.0
  %216 = vmatpush2.msra.mxu0 0.0
  %217 = vmatprep.subr.mxu0 0.0
  %218 = vmatpush2.msra.mxu0 0.0
  %219 = vmatprep.mubr.f32.mxu0 0.0
  %220 = vmatmul.mubr.f32.gmra.mxu0 %v140
  %v221 = vpop.f32.mrf.mxu0
  %v222 = vadd.f32 0.0, %v221
  %v223 = vpop.f32.mrf.mxu0
  %224 = vmatprep.mubr.f32.mxu0 0.0
  %225 = vmatmul.mubr.f32.gmra.mxu0 %v143
  %v226 = vpop.f32.mrf.mxu0
  %v227 = vadd.f32 0.0, %v226
  %v228 = vpop.f32.mrf.mxu0
  %229 = vmatprep.mubr.f32.mxu0 0.0
  %230 = vmatmul.mubr.f32.gmra.mxu0 %v146
  %v231 = vpop.f32.mrf.mxu0
  %v232 = vadd.f32 0.0, %v231
  %v233 = vpop.f32.mrf.mxu0
  %234 = vmatprep.mubr.f32.mxu0 0.0
  %235 = vmatmul.mubr.f32.gmra.mxu0 %v149
  %v236 = vpop.f32.mrf.mxu0
  %v237 = vadd.f32 0.0, %v236
  %v238 = vpop.f32.mrf.mxu0
  %239 = vdwg.mxu0
  %v240 = vld [vmem:[%s1 + $0x46] sm:$0xff]
  %v241 = vld [vmem:[%s1 + $0x4e] sm:$0xff]
  %vm242 = vcmask 539648
  %v244 = vsel %vm242, %v100, 0
  %v247 = vsel %vm242, %v101, 0
  %v250 = vsel %vm242, %v102, 0
  %v253 = vsel %vm242, %v103, 0
  %vm255 = vcmask 1041408
  %v257 = vsel %vm255, %v112, 0
  %259 = vmatprep.subr.mxu0 0.0
  %260 = vmatpush1.msra.mxu0 0.0
  %261 = vmatprep.subr.mxu0 0.0
  %262 = vmatpush1.msra.mxu0 0.0
  %263 = vmatprep.subr.mxu0 0.0
  %264 = vmatpush1.msra.mxu0 0.0
  %265 = vmatprep.subr.mxu0 0.0
  %266 = vmatpush1.msra.mxu0 0.0
  %267 = vmatprep.subr.mxu0 0.0
  %268 = vmatpush1.msra.mxu0 0.0
  %269 = vmatprep.subr.mxu0 0.0
  %270 = vmatpush1.msra.mxu0 0.0
  %271 = vmatprep.subr.mxu0 0.0
  %272 = vmatpush1.msra.mxu0 0.0
  %273 = vmatprep.subr.mxu0 0.0
  %274 = vmatpush1.msra.mxu0 %v257
  %275 = vmatprep.subr.mxu0 0.0
  %276 = vmatpush1.msra.mxu0 %v111
  %277 = vmatprep.subr.mxu0 0.0
  %278 = vmatpush1.msra.mxu0 %v110
  %279 = vmatprep.subr.mxu0 0.0
  %280 = vmatpush1.msra.mxu0 %v109
  %281 = vmatprep.subr.mxu0 0.0
  %282 = vmatpush1.msra.mxu0 %v108
  %283 = vmatprep.subr.mxu0 0.0
  %284 = vmatpush1.msra.mxu0 %v107
  %285 = vmatprep.subr.mxu0 0.0
  %286 = vmatpush1.msra.mxu0 %v106
  %287 = vmatprep.subr.mxu0 0.0
  %288 = vmatpush1.msra.mxu0 %v105
  %289 = vmatprep.subr.mxu0 0.0
  %290 = vmatpush1.msra.mxu0 %v104
  %291 = vmatprep.subr.mxu0 0.0
  %292 = vmatpush2.msra.mxu0 0.0
  %293 = vmatprep.subr.mxu0 0.0
  %294 = vmatpush2.msra.mxu0 0.0
  %295 = vmatprep.subr.mxu0 0.0
  %296 = vmatpush2.msra.mxu0 0.0
  %297 = vmatprep.subr.mxu0 0.0
  %298 = vmatpush2.msra.mxu0 0.0
  %299 = vmatprep.subr.mxu0 0.0
  %300 = vmatpush2.msra.mxu0 0.0
  %301 = vmatprep.subr.mxu0 0.0
  %302 = vmatpush2.msra.mxu0 0.0
  %303 = vmatprep.subr.mxu0 0.0
  %304 = vmatpush2.msra.mxu0 0.0
  %305 = vmatprep.subr.mxu0 0.0
  %306 = vmatpush2.msra.mxu0 0.0
  %307 = vmatprep.subr.mxu0 0.0
  %308 = vmatpush2.msra.mxu0 0.0
  %309 = vmatprep.subr.mxu0 0.0
  %310 = vmatpush2.msra.mxu0 0.0
  %311 = vmatprep.subr.mxu0 0.0
  %312 = vmatpush2.msra.mxu0 0.0
  %313 = vmatprep.subr.mxu0 0.0
  %314 = vmatpush2.msra.mxu0 0.0
  %315 = vmatprep.subr.mxu0 0.0
  %316 = vmatpush2.msra.mxu0 0.0
  %317 = vmatprep.subr.mxu0 0.0
  %318 = vmatpush2.msra.mxu0 0.0
  %319 = vmatprep.subr.mxu0 0.0
  %320 = vmatpush2.msra.mxu0 0.0
  %321 = vmatprep.subr.mxu0 0.0
  %322 = vmatpush2.msra.mxu0 0.0
  %323 = vmatprep.mubr.f32.mxu0 0.0
  %324 = vmatmul.mubr.f32.gmra.mxu0 %v244
  %v325 = vpop.f32.mrf.mxu0
  %v326 = vadd.f32 %v240, %v325
  %v327 = vpop.f32.mrf.mxu0
  %328 = vmatprep.mubr.f32.mxu0 0.0
  %329 = vmatmul.mubr.f32.gmra.mxu0 %v247
  %v330 = vpop.f32.mrf.mxu0
  %v331 = vadd.f32 %v241, %v330
  %v332 = vpop.f32.mrf.mxu0
  %333 = vmatprep.mubr.f32.mxu0 0.0
  %334 = vmatmul.mubr.f32.gmra.mxu0 %v250
  %v335 = vpop.f32.mrf.mxu0
  %v336 = vadd.f32 %v240, %v335
  %v337 = vpop.f32.mrf.mxu0
  %338 = vmatprep.mubr.f32.mxu0 0.0
  %339 = vmatmul.mubr.f32.gmra.mxu0 %v253
  %v340 = vpop.f32.mrf.mxu0
  %v341 = vadd.f32 %v241, %v340
  %v342 = vpop.f32.mrf.mxu0
  %343 = vdwg.mxu0
  %v344 = vld [vmem:[%s1 + $0x5a] sm:$0x1]
  %v345 = vld [vmem:[%s1 + $0x5b] sm:$0x1]
  %vm346 = vcmask 261120
  %v347 = vsel %vm346, %v326, 0.0
  %348 = vadd.xlane.f32.xlu0 %v347
  %v349 = vpop.xlane.xlu0 %348
  %v350 = vsel %vm346, %v331, 0.0
  %351 = vadd.xlane.f32.xlu0 %v350
  %v352 = vpop.xlane.xlu0 %351
  %v353 = vsel %vm346, %v336, 0.0
  %354 = vadd.xlane.f32.xlu0 %v353
  %v355 = vpop.xlane.xlu0 %354
  %v356 = vsel %vm346, %v341, 0.0
  %357 = vadd.xlane.f32.xlu0 %v356
  %v358 = vpop.xlane.xlu0 %357
  %v359 = vrcp.pop 32.0
  %v360 = vmul.f32 %v349, %v359
  %v361 = vmul.f32 %v352, %v359
  %v362 = vmul.f32 %v355, %v359
  %v363 = vmul.f32 %v358, %v359
  %v364 = vsub.f32 %v326, %v360
  %v365 = vsub.f32 %v331, %v361
  %v366 = vsub.f32 %v336, %v362
  %v367 = vsub.f32 %v341, %v363
  %v368 = vmul.f32 %v364, %v364
  %v369 = vmul.f32 %v365, %v365
  %v370 = vmul.f32 %v366, %v366
  %v371 = vmul.f32 %v367, %v367
  %v372 = vsel %vm346, %v368, 0.0
  %373 = vadd.xlane.f32.xlu0 %v372
  %v374 = vpop.xlane.xlu0 %373
  %v375 = vsel %vm346, %v369, 0.0
  %376 = vadd.xlane.f32.xlu0 %v375
  %v377 = vpop.xlane.xlu0 %376
  %v378 = vsel %vm346, %v370, 0.0
  %379 = vadd.xlane.f32.xlu0 %v378
  %v380 = vpop.xlane.xlu0 %379
  %v381 = vsel %vm346, %v371, 0.0
  %382 = vadd.xlane.f32.xlu0 %v381
  %v383 = vpop.xlane.xlu0 %382
  %v384 = vmul.f32 %v374, %v359
  %v385 = vmul.f32 %v377, %v359
  %v386 = vmul.f32 %v380, %v359
  %v387 = vmul.f32 %v383, %v359
  %v388 = vadd.f32 %v384, 1e-12
  %v389 = vadd.f32 %v385, 1e-12
  %v390 = vadd.f32 %v386, 1e-12
  %v391 = vadd.f32 %v387, 1e-12
  %v392 = vrsqrt.pop %v388
  %v393 = vrsqrt.pop %v389
  %v394 = vrsqrt.pop %v390
  %v395 = vrsqrt.pop %v391
  %v396 = vmul.f32 %v364, %v392
  %v397 = vmul.f32 %v365, %v393
  %v398 = vmul.f32 %v366, %v394
  %v399 = vmul.f32 %v367, %v395
  %v400 = vlaneseq
  %v401 = vshrl.u32 %v400, 7
  %v402 = vsub.s32 0, %v401
  %v403 = vrot.slane %v344, %v402
  %v404 = vmul.f32 %v396, %v403
  %v405 = vmul.f32 %v397, %v403
  %v406 = vmul.f32 %v398, %v403
  %v407 = vmul.f32 %v399, %v403
  %v408 = vlaneseq
  %v409 = vshrl.u32 %v408, 7
  %v410 = vsub.s32 0, %v409
  %v411 = vrot.slane %v345, %v410
  %v412 = vadd.f32 %v404, %v411
  %v413 = vadd.f32 %v405, %v411
  %v414 = vadd.f32 %v406, %v411
  %v415 = vadd.f32 %v407, %v411
  %v416 = vlaneseq
  %v417 = vshrl.u32 %v416, 7
  %v418 = vadd.s32 %v417, 8
  %v419 = vadd.s32 %v417, 16
  %v420 = vadd.s32 %v417, 24
  %v421 = vadd.s32 %v417, 32
  %v422 = vadd.s32 %v417, 40
  %v423 = vadd.s32 %v417, 48
  %v424 = vadd.s32 %v417, 56
  %v425 = vadd.s32 %v417, 64
  %v426 = vadd.s32 %v417, 72
  %v427 = vadd.s32 %v417, 80
  %v428 = vadd.s32 %v417, 88
  %v429 = vadd.s32 %v417, 96
  %v430 = vadd.s32 %v417, 104
  %v431 = vadd.s32 %v417, 112
  %v432 = vadd.s32 %v417, 120
  %vm433 = vcmp.ge.s32.totalorder %v417, 0
  %vm434 = vcmp.ge.s32.totalorder %v418, 0
  %vm435 = vcmp.ge.s32.totalorder %v419, 0
  %vm436 = vcmp.ge.s32.totalorder %v420, 0
  %vm437 = vcmp.ge.s32.totalorder %v421, 0
  %vm438 = vcmp.ge.s32.totalorder %v422, 0
  %vm439 = vcmp.ge.s32.totalorder %v423, 0
  %vm440 = vcmp.ge.s32.totalorder %v424, 0
  %vm441 = vcmp.ge.s32.totalorder %v425, 0
  %vm442 = vcmp.ge.s32.totalorder %v426, 0
  %vm443 = vcmp.ge.s32.totalorder %v427, 0
  %vm444 = vcmp.ge.s32.totalorder %v428, 0
  %vm445 = vcmp.ge.s32.totalorder %v429, 0
  %vm446 = vcmp.ge.s32.totalorder %v430, 0
  %vm447 = vcmp.ge.s32.totalorder %v431, 0
  %vm448 = vcmp.ge.s32.totalorder %v432, 0
  %vm449 = vcmp.lt.s32.totalorder %v417, 32
  %vm450 = vcmp.lt.s32.totalorder %v418, 32
  %vm451 = vcmp.lt.s32.totalorder %v419, 32
  %vm452 = vcmp.lt.s32.totalorder %v420, 32
  %vm453 = vcmp.lt.s32.totalorder %v421, 32
  %vm454 = vcmp.lt.s32.totalorder %v422, 32
  %vm455 = vcmp.lt.s32.totalorder %v423, 32
  %vm456 = vcmp.lt.s32.totalorder %v424, 32
  %vm457 = vcmp.lt.s32.totalorder %v425, 32
  %vm458 = vcmp.lt.s32.totalorder %v426, 32
  %vm459 = vcmp.lt.s32.totalorder %v427, 32
  %vm460 = vcmp.lt.s32.totalorder %v428, 32
  %vm461 = vcmp.lt.s32.totalorder %v429, 32
  %vm462 = vcmp.lt.s32.totalorder %v430, 32
  %vm463 = vcmp.lt.s32.totalorder %v431, 32
  %vm464 = vcmp.lt.s32.totalorder %v432, 32
  %vm465 = vmand %vm433, %vm449
  %vm466 = vmand %vm434, %vm450
  %vm467 = vmand %vm435, %vm451
  %vm468 = vmand %vm436, %vm452
  %vm469 = vmand %vm437, %vm453
  %vm470 = vmand %vm438, %vm454
  %vm471 = vmand %vm439, %vm455
  %vm472 = vmand %vm440, %vm456
  %vm473 = vmand %vm441, %vm457
  %vm474 = vmand %vm442, %vm458
  %vm475 = vmand %vm443, %vm459
  %vm476 = vmand %vm444, %vm460
  %vm477 = vmand %vm445, %vm461
  %vm478 = vmand %vm446, %vm462
  %vm479 = vmand %vm447, %vm463
  %vm480 = vmand %vm448, %vm464
  %vm481 = vcmp.ge.s32.totalorder %v55, 0
  %vm482 = vmand %vm465, %vm481
  %vm483 = vmand %vm466, %vm481
  %vm484 = vmand %vm467, %vm481
  %vm485 = vmand %vm468, %vm481
  %vm486 = vmand %vm469, %vm481
  %vm487 = vmand %vm470, %vm481
  %vm488 = vmand %vm471, %vm481
  %vm489 = vmand %vm472, %vm481
  %vm490 = vmand %vm473, %vm481
  %vm491 = vmand %vm474, %vm481
  %vm492 = vmand %vm475, %vm481
  %vm493 = vmand %vm476, %vm481
  %vm494 = vmand %vm477, %vm481
  %vm495 = vmand %vm478, %vm481
  %vm496 = vmand %vm479, %vm481
  %vm497 = vmand %vm480, %vm481
  %vm498 = vcmp.lt.s32.totalorder %v55, 8
  %vm499 = vmand %vm482, %vm498
  %vm500 = vmand %vm483, %vm498
  %vm501 = vmand %vm484, %vm498
  %vm502 = vmand %vm485, %vm498
  %vm503 = vmand %vm486, %vm498
  %vm504 = vmand %vm487, %vm498
  %vm505 = vmand %vm488, %vm498
  %vm506 = vmand %vm489, %vm498
  %vm507 = vmand %vm490, %vm498
  %vm508 = vmand %vm491, %vm498
  %vm509 = vmand %vm492, %vm498
  %vm510 = vmand %vm493, %vm498
  %vm511 = vmand %vm494, %vm498
  %vm512 = vmand %vm495, %vm498
  %vm513 = vmand %vm496, %vm498
  %vm514 = vmand %vm497, %vm498
  %vm515 = vcmp.ge.s32.totalorder %v417, 32
  %vm516 = vcmp.ge.s32.totalorder %v418, 32
  %vm517 = vcmp.ge.s32.totalorder %v419, 32
  %vm518 = vcmp.ge.s32.totalorder %v420, 32
  %vm519 = vcmp.ge.s32.totalorder %v421, 32
  %vm520 = vcmp.ge.s32.totalorder %v422, 32
  %vm521 = vcmp.ge.s32.totalorder %v423, 32
  %vm522 = vcmp.ge.s32.totalorder %v424, 32
  %vm523 = vcmp.ge.s32.totalorder %v425, 32
  %vm524 = vcmp.ge.s32.totalorder %v426, 32
  %vm525 = vcmp.ge.s32.totalorder %v427, 32
  %vm526 = vcmp.ge.s32.totalorder %v428, 32
  %vm527 = vcmp.ge.s32.totalorder %v429, 32
  %vm528 = vcmp.ge.s32.totalorder %v430, 32
  %vm529 = vcmp.ge.s32.totalorder %v431, 32
  %vm530 = vcmp.ge.s32.totalorder %v432, 32
  %vm531 = vcmp.lt.s32.totalorder %v417, 64
  %vm532 = vcmp.lt.s32.totalorder %v418, 64
  %vm533 = vcmp.lt.s32.totalorder %v419, 64
  %vm534 = vcmp.lt.s32.totalorder %v420, 64
  %vm535 = vcmp.lt.s32.totalorder %v421, 64
  %vm536 = vcmp.lt.s32.totalorder %v422, 64
  %vm537 = vcmp.lt.s32.totalorder %v423, 64
  %vm538 = vcmp.lt.s32.totalorder %v424, 64
  %vm539 = vcmp.lt.s32.totalorder %v425, 64
  %vm540 = vcmp.lt.s32.totalorder %v426, 64
  %vm541 = vcmp.lt.s32.totalorder %v427, 64
  %vm542 = vcmp.lt.s32.totalorder %v428, 64
  %vm543 = vcmp.lt.s32.totalorder %v429, 64
  %vm544 = vcmp.lt.s32.totalorder %v430, 64
  %vm545 = vcmp.lt.s32.totalorder %v431, 64
  %vm546 = vcmp.lt.s32.totalorder %v432, 64
  %vm547 = vmand %vm515, %vm531
  %vm548 = vmand %vm516, %vm532
  %vm549 = vmand %vm517, %vm533
  %vm550 = vmand %vm518, %vm534
  %vm551 = vmand %vm519, %vm535
  %vm552 = vmand %vm520, %vm536
  %vm553 = vmand %vm521, %vm537
  %vm554 = vmand %vm522, %vm538
  %vm555 = vmand %vm523, %vm539
  %vm556 = vmand %vm524, %vm540
  %vm557 = vmand %vm525, %vm541
  %vm558 = vmand %vm526, %vm542
  %vm559 = vmand %vm527, %vm543
  %vm560 = vmand %vm528, %vm544
  %vm561 = vmand %vm529, %vm545
  %vm562 = vmand %vm530, %vm546
  %vm563 = vcmp.ge.s32.totalorder %v55, 8
  %vm564 = vmand %vm547, %vm563
  %vm565 = vmand %vm548, %vm563
  %vm566 = vmand %vm549, %vm563
  %vm567 = vmand %vm550, %vm563
  %vm568 = vmand %vm551, %vm563
  %vm569 = vmand %vm552, %vm563
  %vm570 = vmand %vm553, %vm563
  %vm571 = vmand %vm554, %vm563
  %vm572 = vmand %vm555, %vm563
  %vm573 = vmand %vm556, %vm563
  %vm574 = vmand %vm557, %vm563
  %vm575 = vmand %vm558, %vm563
  %vm576 = vmand %vm559, %vm563
  %vm577 = vmand %vm560, %vm563
  %vm578 = vmand %vm561, %vm563
  %vm579 = vmand %vm562, %vm563
  %vm580 = vcmp.lt.s32.totalorder %v55, 16
  %vm581 = vmand %vm564, %vm580
  %vm582 = vmand %vm565, %vm580
  %vm583 = vmand %vm566, %vm580
  %vm584 = vmand %vm567, %vm580
  %vm585 = vmand %vm568, %vm580
  %vm586 = vmand %vm569, %vm580
  %vm587 = vmand %vm570, %vm580
  %vm588 = vmand %vm571, %vm580
  %vm589 = vmand %vm572, %vm580
  %vm590 = vmand %vm573, %vm580
  %vm591 = vmand %vm574, %vm580
  %vm592 = vmand %vm575, %vm580
  %vm593 = vmand %vm576, %vm580
  %vm594 = vmand %vm577, %vm580
  %vm595 = vmand %vm578, %vm580
  %vm596 = vmand %vm579, %vm580
  %vm597 = vmor %vm499, %vm581
  %vm598 = vmor %vm500, %vm582
  %vm599 = vmor %vm501, %vm583
  %vm600 = vmor %vm502, %vm584
  %vm601 = vmor %vm503, %vm585
  %vm602 = vmor %vm504, %vm586
  %vm603 = vmor %vm505, %vm587
  %vm604 = vmor %vm506, %vm588
  %vm605 = vmor %vm507, %vm589
  %vm606 = vmor %vm508, %vm590
  %vm607 = vmor %vm509, %vm591
  %vm608 = vmor %vm510, %vm592
  %vm609 = vmor %vm511, %vm593
  %vm610 = vmor %vm512, %vm594
  %vm611 = vmor %vm513, %vm595
  %vm612 = vmor %vm514, %vm596
  %vm613 = vcmp.ge.s32.totalorder %v417, 64
  %vm614 = vcmp.ge.s32.totalorder %v418, 64
  %vm615 = vcmp.ge.s32.totalorder %v419, 64
  %vm616 = vcmp.ge.s32.totalorder %v420, 64
  %vm617 = vcmp.ge.s32.totalorder %v421, 64
  %vm618 = vcmp.ge.s32.totalorder %v422, 64
  %vm619 = vcmp.ge.s32.totalorder %v423, 64
  %vm620 = vcmp.ge.s32.totalorder %v424, 64
  %vm621 = vcmp.ge.s32.totalorder %v425, 64
  %vm622 = vcmp.ge.s32.totalorder %v426, 64
  %vm623 = vcmp.ge.s32.totalorder %v427, 64
  %vm624 = vcmp.ge.s32.totalorder %v428, 64
  %vm625 = vcmp.ge.s32.totalorder %v429, 64
  %vm626 = vcmp.ge.s32.totalorder %v430, 64
  %vm627 = vcmp.ge.s32.totalorder %v431, 64
  %vm628 = vcmp.ge.s32.totalorder %v432, 64
  %vm629 = vcmp.lt.s32.totalorder %v417, 96
  %vm630 = vcmp.lt.s32.totalorder %v418, 96
  %vm631 = vcmp.lt.s32.totalorder %v419, 96
  %vm632 = vcmp.lt.s32.totalorder %v420, 96
  %vm633 = vcmp.lt.s32.totalorder %v421, 96
  %vm634 = vcmp.lt.s32.totalorder %v422, 96
  %vm635 = vcmp.lt.s32.totalorder %v423, 96
  %vm636 = vcmp.lt.s32.totalorder %v424, 96
  %vm637 = vcmp.lt.s32.totalorder %v425, 96
  %vm638 = vcmp.lt.s32.totalorder %v426, 96
  %vm639 = vcmp.lt.s32.totalorder %v427, 96
  %vm640 = vcmp.lt.s32.totalorder %v428, 96
  %vm641 = vcmp.lt.s32.totalorder %v429, 96
  %vm642 = vcmp.lt.s32.totalorder %v430, 96
  %vm643 = vcmp.lt.s32.totalorder %v431, 96
  %vm644 = vcmp.lt.s32.totalorder %v432, 96
  %vm645 = vmand %vm613, %vm629
  %vm646 = vmand %vm614, %vm630
  %vm647 = vmand %vm615, %vm631
  %vm648 = vmand %vm616, %vm632
  %vm649 = vmand %vm617, %vm633
  %vm650 = vmand %vm618, %vm634
  %vm651 = vmand %vm619, %vm635
  %vm652 = vmand %vm620, %vm636
  %vm653 = vmand %vm621, %vm637
  %vm654 = vmand %vm622, %vm638
  %vm655 = vmand %vm623, %vm639
  %vm656 = vmand %vm624, %vm640
  %vm657 = vmand %vm625, %vm641
  %vm658 = vmand %vm626, %vm642
  %vm659 = vmand %vm627, %vm643
  %vm660 = vmand %vm628, %vm644
  %vm661 = vcmp.ge.s32.totalorder %v55, 16
  %vm662 = vmand %vm645, %vm661
  %vm663 = vmand %vm646, %vm661
  %vm664 = vmand %vm647, %vm661
  %vm665 = vmand %vm648, %vm661
  %vm666 = vmand %vm649, %vm661
  %vm667 = vmand %vm650, %vm661
  %vm668 = vmand %vm651, %vm661
  %vm669 = vmand %vm652, %vm661
  %vm670 = vmand %vm653, %vm661
  %vm671 = vmand %vm654, %vm661
  %vm672 = vmand %vm655, %vm661
  %vm673 = vmand %vm656, %vm661
  %vm674 = vmand %vm657, %vm661
  %vm675 = vmand %vm658, %vm661
  %vm676 = vmand %vm659, %vm661
  %vm677 = vmand %vm660, %vm661
  %vm678 = vcmp.lt.s32.totalorder %v55, 24
  %vm679 = vmand %vm662, %vm678
  %vm680 = vmand %vm663, %vm678
  %vm681 = vmand %vm664, %vm678
  %vm682 = vmand %vm665, %vm678
  %vm683 = vmand %vm666, %vm678
  %vm684 = vmand %vm667, %vm678
  %vm685 = vmand %vm668, %vm678
  %vm686 = vmand %vm669, %vm678
  %vm687 = vmand %vm670, %vm678
  %vm688 = vmand %vm671, %vm678
  %vm689 = vmand %vm672, %vm678
  %vm690 = vmand %vm673, %vm678
  %vm691 = vmand %vm674, %vm678
  %vm692 = vmand %vm675, %vm678
  %vm693 = vmand %vm676, %vm678
  %vm694 = vmand %vm677, %vm678
  %vm695 = vmor %vm597, %vm679
  %vm696 = vmor %vm598, %vm680
  %vm697 = vmor %vm599, %vm681
  %vm698 = vmor %vm600, %vm682
  %vm699 = vmor %vm601, %vm683
  %vm700 = vmor %vm602, %vm684
  %vm701 = vmor %vm603, %vm685
  %vm702 = vmor %vm604, %vm686
  %vm703 = vmor %vm605, %vm687
  %vm704 = vmor %vm606, %vm688
  %vm705 = vmor %vm607, %vm689
  %vm706 = vmor %vm608, %vm690
  %vm707 = vmor %vm609, %vm691
  %vm708 = vmor %vm610, %vm692
  %vm709 = vmor %vm611, %vm693
  %vm710 = vmor %vm612, %vm694
  %vm711 = vcmp.ge.s32.totalorder %v417, 96
  %vm712 = vcmp.ge.s32.totalorder %v418, 96
  %vm713 = vcmp.ge.s32.totalorder %v419, 96
  %vm714 = vcmp.ge.s32.totalorder %v420, 96
  %vm715 = vcmp.ge.s32.totalorder %v421, 96
  %vm716 = vcmp.ge.s32.totalorder %v422, 96
  %vm717 = vcmp.ge.s32.totalorder %v423, 96
  %vm718 = vcmp.ge.s32.totalorder %v424, 96
  %vm719 = vcmp.ge.s32.totalorder %v425, 96
  %vm720 = vcmp.ge.s32.totalorder %v426, 96
  %vm721 = vcmp.ge.s32.totalorder %v427, 96
  %vm722 = vcmp.ge.s32.totalorder %v428, 96
  %vm723 = vcmp.ge.s32.totalorder %v429, 96
  %vm724 = vcmp.ge.s32.totalorder %v430, 96
  %vm725 = vcmp.ge.s32.totalorder %v431, 96
  %vm726 = vcmp.ge.s32.totalorder %v432, 96
  %vm727 = vcmp.lt.s32.totalorder %v417, 128
  %vm728 = vcmp.lt.s32.totalorder %v418, 128
  %vm729 = vcmp.lt.s32.totalorder %v419, 128
  %vm730 = vcmp.lt.s32.totalorder %v420, 128
  %vm731 = vcmp.lt.s32.totalorder %v421, 128
  %vm732 = vcmp.lt.s32.totalorder %v422, 128
  %vm733 = vcmp.lt.s32.totalorder %v423, 128
  %vm734 = vcmp.lt.s32.totalorder %v424, 128
  %vm735 = vcmp.lt.s32.totalorder %v425, 128
  %vm736 = vcmp.lt.s32.totalorder %v426, 128
  %vm737 = vcmp.lt.s32.totalorder %v427, 128
  %vm738 = vcmp.lt.s32.totalorder %v428, 128
  %vm739 = vcmp.lt.s32.totalorder %v429, 128
  %vm740 = vcmp.lt.s32.totalorder %v430, 128
  %vm741 = vcmp.lt.s32.totalorder %v431, 128
  %vm742 = vcmp.lt.s32.totalorder %v432, 128
  %vm743 = vmand %vm711, %vm727
  %vm744 = vmand %vm712, %vm728
  %vm745 = vmand %vm713, %vm729
  %vm746 = vmand %vm714, %vm730
  %vm747 = vmand %vm715, %vm731
  %vm748 = vmand %vm716, %vm732
  %vm749 = vmand %vm717, %vm733
  %vm750 = vmand %vm718, %vm734
  %vm751 = vmand %vm719, %vm735
  %vm752 = vmand %vm720, %vm736
  %vm753 = vmand %vm721, %vm737
  %vm754 = vmand %vm722, %vm738
  %vm755 = vmand %vm723, %vm739
  %vm756 = vmand %vm724, %vm740
  %vm757 = vmand %vm725, %vm741
  %vm758 = vmand %vm726, %vm742
  %vm759 = vcmp.ge.s32.totalorder %v55, 24
  %vm760 = vmand %vm743, %vm759
  %vm761 = vmand %vm744, %vm759
  %vm762 = vmand %vm745, %vm759
  %vm763 = vmand %vm746, %vm759
  %vm764 = vmand %vm747, %vm759
  %vm765 = vmand %vm748, %vm759
  %vm766 = vmand %vm749, %vm759
  %vm767 = vmand %vm750, %vm759
  %vm768 = vmand %vm751, %vm759
  %vm769 = vmand %vm752, %vm759
  %vm770 = vmand %vm753, %vm759
  %vm771 = vmand %vm754, %vm759
  %vm772 = vmand %vm755, %vm759
  %vm773 = vmand %vm756, %vm759
  %vm774 = vmand %vm757, %vm759
  %vm775 = vmand %vm758, %vm759
  %vm776 = vcmp.lt.s32.totalorder %v55, 32
  %vm777 = vmand %vm760, %vm776
  %vm778 = vmand %vm761, %vm776
  %vm779 = vmand %vm762, %vm776
  %vm780 = vmand %vm763, %vm776
  %vm781 = vmand %vm764, %vm776
  %vm782 = vmand %vm765, %vm776
  %vm783 = vmand %vm766, %vm776
  %vm784 = vmand %vm767, %vm776
  %vm785 = vmand %vm768, %vm776
  %vm786 = vmand %vm769, %vm776
  %vm787 = vmand %vm770, %vm776
  %vm788 = vmand %vm771, %vm776
  %vm789 = vmand %vm772, %vm776
  %vm790 = vmand %vm773, %vm776
  %vm791 = vmand %vm774, %vm776
  %vm792 = vmand %vm775, %vm776
  %vm793 = vmor %vm695, %vm777
  %vm794 = vmor %vm696, %vm778
  %vm795 = vmor %vm697, %vm779
  %vm796 = vmor %vm698, %vm780
  %vm797 = vmor %vm699, %vm781
  %vm798 = vmor %vm700, %vm782
  %vm799 = vmor %vm701, %vm783
  %vm800 = vmor %vm702, %vm784
  %vm801 = vmor %vm703, %vm785
  %vm802 = vmor %vm704, %vm786
  %vm803 = vmor %vm705, %vm787
  %vm804 = vmor %vm706, %vm788
  %vm805 = vmor %vm707, %vm789
  %vm806 = vmor %vm708, %vm790
  %vm807 = vmor %vm709, %vm791
  %vm808 = vmor %vm710, %vm792
  %v809 = vsel %vm793, 1, 0
  %v810 = vsel %vm794, 1, 0
  %v811 = vsel %vm795, 1, 0
  %v812 = vsel %vm796, 1, 0
  %v813 = vsel %vm797, 1, 0
  %v814 = vsel %vm798, 1, 0
  %v815 = vsel %vm799, 1, 0
  %v816 = vsel %vm800, 1, 0
  %v817 = vsel %vm801, 1, 0
  %v818 = vsel %vm802, 1, 0
  %v819 = vsel %vm803, 1, 0
  %v820 = vsel %vm804, 1, 0
  %v821 = vsel %vm805, 1, 0
  %v822 = vsel %vm806, 1, 0
  %v823 = vsel %vm807, 1, 0
  %v824 = vsel %vm808, 1, 0
  %v825 = vcvt.s32.f32 %v809
  %v826 = vcvt.s32.f32 %v810
  %v827 = vcvt.s32.f32 %v811
  %v828 = vcvt.s32.f32 %v812
  %v829 = vcvt.s32.f32 %v813
  %v830 = vcvt.s32.f32 %v814
  %v831 = vcvt.s32.f32 %v815
  %v832 = vcvt.s32.f32 %v816
  %v833 = vcvt.s32.f32 %v817
  %v834 = vcvt.s32.f32 %v818
  %v835 = vcvt.s32.f32 %v819
  %v836 = vcvt.s32.f32 %v820
  %v837 = vcvt.s32.f32 %v821
  %v838 = vcvt.s32.f32 %v822
  %v839 = vcvt.s32.f32 %v823
  %v840 = vcvt.s32.f32 %v824
  %v841 = vmul.f32 %v825, 0.35355338
  %v842 = vmul.f32 %v826, 0.35355338
  %v843 = vmul.f32 %v827, 0.35355338
  %v844 = vmul.f32 %v828, 0.35355338
  %v845 = vmul.f32 %v829, 0.35355338
  %v846 = vmul.f32 %v830, 0.35355338
  %v847 = vmul.f32 %v831, 0.35355338
  %v848 = vmul.f32 %v832, 0.35355338
  %v849 = vmul.f32 %v833, 0.35355338
  %v850 = vmul.f32 %v834, 0.35355338
  %v851 = vmul.f32 %v835, 0.35355338
  %v852 = vmul.f32 %v836, 0.35355338
  %v853 = vmul.f32 %v837, 0.35355338
  %v854 = vmul.f32 %v838, 0.35355338
  %v855 = vmul.f32 %v839, 0.35355338
  %v856 = vmul.f32 %v840, 0.35355338
  %v857 = vld [vmem:[%s2] sm:$0xff]
  %v858 = vld [vmem:[%s2 + $0x8] sm:$0xff]
  %v859 = vld [vmem:[%s2 + $0x10] sm:$0xff]
  %v860 = vld [vmem:[%s2 + $0x18] sm:$0xff]
  %v861 = vld [vmem:[%s9] sm:$0xff]
  %v862 = vld [vmem:[%s5] sm:$0xff]
  %v863 = vld [vmem:[%s5 + $0x8] sm:$0xff]
  %v864 = vld [vmem:[%s5 + $0x10] sm:$0xff]
  %v865 = vld [vmem:[%s5 + $0x18] sm:$0xff]
  %v866 = vld [vmem:[%s6] sm:$0xff]
  %v867 = vld [vmem:[%s6 + $0x8] sm:$0xff]
  %v868 = vld [vmem:[%s6 + $0x10] sm:$0xff]
  %v869 = vld [vmem:[%s6 + $0x18] sm:$0xff]
  %v870 = vlaneseq
  %v871 = vshrl.u32 %v870, 7
  %v872 = vsub.s32 0, %v871
  %v873 = vrot.slane %v861, %v872
  %v875 = vsel %vm346, %v412, 0
  %v878 = vsel %vm346, %v413, 0
  %v881 = vsel %vm346, %v414, 0
  %v884 = vsel %vm346, %v415, 0
  %886 = vmatprep.subr.mxu0 0.0
  %887 = vmatpush1.msra.mxu0 0.0
  %888 = vmatprep.subr.mxu0 0.0
  %889 = vmatpush1.msra.mxu0 0.0
  %890 = vmatprep.subr.mxu0 0.0
  %891 = vmatpush1.msra.mxu0 0.0
  %892 = vmatprep.subr.mxu0 0.0
  %893 = vmatpush1.msra.mxu0 0.0
  %894 = vmatprep.subr.mxu0 0.0
  %895 = vmatpush1.msra.mxu0 0.0
  %896 = vmatprep.subr.mxu0 0.0
  %897 = vmatpush1.msra.mxu0 0.0
  %898 = vmatprep.subr.mxu0 0.0
  %899 = vmatpush1.msra.mxu0 0.0
  %900 = vmatprep.subr.mxu0 0.0
  %901 = vmatpush1.msra.mxu0 0.0
  %902 = vmatprep.subr.mxu0 0.0
  %903 = vmatpush1.msra.mxu0 0.0
  %904 = vmatprep.subr.mxu0 0.0
  %905 = vmatpush1.msra.mxu0 0.0
  %906 = vmatprep.subr.mxu0 0.0
  %907 = vmatpush1.msra.mxu0 0.0
  %908 = vmatprep.subr.mxu0 0.0
  %909 = vmatpush1.msra.mxu0 0.0
  %910 = vmatprep.subr.mxu0 0.0
  %911 = vmatpush1.msra.mxu0 %v865
  %912 = vmatprep.subr.mxu0 0.0
  %913 = vmatpush1.msra.mxu0 %v864
  %914 = vmatprep.subr.mxu0 0.0
  %915 = vmatpush1.msra.mxu0 %v863
  %916 = vmatprep.subr.mxu0 0.0
  %917 = vmatpush1.msra.mxu0 %v862
  %918 = vmatprep.subr.mxu0 0.0
  %919 = vmatpush2.msra.mxu0 0.0
  %920 = vmatprep.subr.mxu0 0.0
  %921 = vmatpush2.msra.mxu0 0.0
  %922 = vmatprep.subr.mxu0 0.0
  %923 = vmatpush2.msra.mxu0 0.0
  %924 = vmatprep.subr.mxu0 0.0
  %925 = vmatpush2.msra.mxu0 0.0
  %926 = vmatprep.subr.mxu0 0.0
  %927 = vmatpush2.msra.mxu0 0.0
  %928 = vmatprep.subr.mxu0 0.0
  %929 = vmatpush2.msra.mxu0 0.0
  %930 = vmatprep.subr.mxu0 0.0
  %931 = vmatpush2.msra.mxu0 0.0
  %932 = vmatprep.subr.mxu0 0.0
  %933 = vmatpush2.msra.mxu0 0.0
  %934 = vmatprep.subr.mxu0 0.0
  %935 = vmatpush2.msra.mxu0 0.0
  %936 = vmatprep.subr.mxu0 0.0
  %937 = vmatpush2.msra.mxu0 0.0
  %938 = vmatprep.subr.mxu0 0.0
  %939 = vmatpush2.msra.mxu0 0.0
  %940 = vmatprep.subr.mxu0 0.0
  %941 = vmatpush2.msra.mxu0 0.0
  %942 = vmatprep.subr.mxu0 0.0
  %943 = vmatpush2.msra.mxu0 0.0
  %944 = vmatprep.subr.mxu0 0.0
  %945 = vmatpush2.msra.mxu0 0.0
  %946 = vmatprep.subr.mxu0 0.0
  %947 = vmatpush2.msra.mxu0 0.0
  %948 = vmatprep.subr.mxu0 0.0
  %949 = vmatpush2.msra.mxu0 0.0
  %950 = vmatprep.mubr.f32.mxu0 0.0
  %951 = vmatmul.mubr.f32.gmra.mxu0 %v875
  %v952 = vpop.f32.mrf.mxu0
  %v953 = vadd.f32 %v873, %v952
  %v954 = vpop.f32.mrf.mxu0
  %955 = vmatprep.mubr.f32.mxu0 0.0
  %956 = vmatmul.mubr.f32.gmra.mxu0 %v878
  %v957 = vpop.f32.mrf.mxu0
  %v958 = vadd.f32 %v873, %v957
  %v959 = vpop.f32.mrf.mxu0
  %960 = vmatprep.mubr.f32.mxu0 0.0
  %961 = vmatmul.mubr.f32.gmra.mxu0 %v881
  %v962 = vpop.f32.mrf.mxu0
  %v963 = vadd.f32 %v873, %v962
  %v964 = vpop.f32.mrf.mxu0
  %965 = vmatprep.mubr.f32.mxu0 0.0
  %966 = vmatmul.mubr.f32.gmra.mxu0 %v884
  %v967 = vpop.f32.mrf.mxu0
  %v968 = vadd.f32 %v873, %v967
  %v969 = vpop.f32.mrf.mxu0
  %970 = vdwg.mxu0
  %v971 = vmul.f32 %v953, %v841
  %v972 = vmul.f32 %v958, %v842
  %v973 = vmul.f32 %v963, %v843
  %v974 = vmul.f32 %v968, %v844
  %v975 = vmul.f32 %v953, %v845
  %v976 = vmul.f32 %v958, %v846
  %v977 = vmul.f32 %v963, %v847
  %v978 = vmul.f32 %v968, %v848
  %v979 = vmul.f32 %v953, %v849
  %v980 = vmul.f32 %v958, %v850
  %v981 = vmul.f32 %v963, %v851
  %v982 = vmul.f32 %v968, %v852
  %v983 = vmul.f32 %v953, %v853
  %v984 = vmul.f32 %v958, %v854
  %v985 = vmul.f32 %v963, %v855
  %v986 = vmul.f32 %v968, %v856
  %991 = vrot.lane.b32.xlu0 %v953, 96
  %v992 = vpop.permute.xlu0 %991
  %993 = vrot.lane.b32.xlu0 %v958, 96
  %v994 = vpop.permute.xlu0 %993
  %995 = vrot.lane.b32.xlu0 %v963, 96
  %v996 = vpop.permute.xlu0 %995
  %997 = vrot.lane.b32.xlu0 %v968, 96
  %v998 = vpop.permute.xlu0 %997
  %v1000 = vsel %vm346, %v971, 0
  %v1003 = vsel %vm346, %v972, 0
  %v1006 = vsel %vm346, %v973, 0
  %v1009 = vsel %vm346, %v974, 0
  %v1012 = vsel %vm346, %v975, 0
  %v1015 = vsel %vm346, %v976, 0
  %v1018 = vsel %vm346, %v977, 0
  %v1021 = vsel %vm346, %v978, 0
  %v1024 = vsel %vm346, %v979, 0
  %v1027 = vsel %vm346, %v980, 0
  %v1030 = vsel %vm346, %v981, 0
  %v1033 = vsel %vm346, %v982, 0
  %v1036 = vsel %vm346, %v983, 0
  %v1039 = vsel %vm346, %v984, 0
  %v1042 = vsel %vm346, %v985, 0
  %v1045 = vsel %vm346, %v986, 0
  %v1047 = vsel %vm346, %v992, 0
  %v1049 = vsel %vm346, %v994, 0
  %v1051 = vsel %vm346, %v996, 0
  %v1053 = vsel %vm346, %v998, 0
  %1055 = vmatprep.subr.mxu0 0.0
  %1056 = vmatpush1.xpose.msra.mxu0 0.0
  %1057 = vmatprep.subr.mxu0 0.0
  %1058 = vmatpush1.xpose.msra.mxu0 0.0
  %1059 = vmatprep.subr.mxu0 0.0
  %1060 = vmatpush1.xpose.msra.mxu0 0.0
  %1061 = vmatprep.subr.mxu0 0.0
  %1062 = vmatpush1.xpose.msra.mxu0 0.0
  %1063 = vmatprep.subr.mxu0 0.0
  %1064 = vmatpush1.xpose.msra.mxu0 0.0
  %1065 = vmatprep.subr.mxu0 0.0
  %1066 = vmatpush1.xpose.msra.mxu0 0.0
  %1067 = vmatprep.subr.mxu0 0.0
  %1068 = vmatpush1.xpose.msra.mxu0 0.0
  %1069 = vmatprep.subr.mxu0 0.0
  %1070 = vmatpush1.xpose.msra.mxu0 0.0
  %1071 = vmatprep.subr.mxu0 0.0
  %1072 = vmatpush1.xpose.msra.mxu0 0.0
  %1073 = vmatprep.subr.mxu0 0.0
  %1074 = vmatpush1.xpose.msra.mxu0 0.0
  %1075 = vmatprep.subr.mxu0 0.0
  %1076 = vmatpush1.xpose.msra.mxu0 0.0
  %1077 = vmatprep.subr.mxu0 0.0
  %1078 = vmatpush1.xpose.msra.mxu0 0.0
  %1079 = vmatprep.subr.mxu0 0.0
  %1080 = vmatpush1.xpose.msra.mxu0 %v1053
  %1081 = vmatprep.subr.mxu0 0.0
  %1082 = vmatpush1.xpose.msra.mxu0 %v1051
  %1083 = vmatprep.subr.mxu0 0.0
  %1084 = vmatpush1.xpose.msra.mxu0 %v1049
  %1085 = vmatprep.subr.mxu0 0.0
  %1086 = vmatpush1.xpose.msra.mxu0 %v1047
  %1087 = vmatprep.subr.mxu0 0.0
  %1088 = vmatpush2.xpose.msra.mxu0 0.0
  %1089 = vmatprep.subr.mxu0 0.0
  %1090 = vmatpush2.xpose.msra.mxu0 0.0
  %1091 = vmatprep.subr.mxu0 0.0
  %1092 = vmatpush2.xpose.msra.mxu0 0.0
  %1093 = vmatprep.subr.mxu0 0.0
  %1094 = vmatpush2.xpose.msra.mxu0 0.0
  %1095 = vmatprep.subr.mxu0 0.0
  %1096 = vmatpush2.xpose.msra.mxu0 0.0
  %1097 = vmatprep.subr.mxu0 0.0
  %1098 = vmatpush2.xpose.msra.mxu0 0.0
  %1099 = vmatprep.subr.mxu0 0.0
  %1100 = vmatpush2.xpose.msra.mxu0 0.0
  %1101 = vmatprep.subr.mxu0 0.0
  %1102 = vmatpush2.xpose.msra.mxu0 0.0
  %1103 = vmatprep.subr.mxu0 0.0
  %1104 = vmatpush2.xpose.msra.mxu0 0.0
  %1105 = vmatprep.subr.mxu0 0.0
  %1106 = vmatpush2.xpose.msra.mxu0 0.0
  %1107 = vmatprep.subr.mxu0 0.0
  %1108 = vmatpush2.xpose.msra.mxu0 0.0
  %1109 = vmatprep.subr.mxu0 0.0
  %1110 = vmatpush2.xpose.msra.mxu0 0.0
  %1111 = vmatprep.subr.mxu0 0.0
  %1112 = vmatpush2.xpose.msra.mxu0 0.0
  %1113 = vmatprep.subr.mxu0 0.0
  %1114 = vmatpush2.xpose.msra.mxu0 0.0
  %1115 = vmatprep.subr.mxu0 0.0
  %1116 = vmatpush2.xpose.msra.mxu0 0.0
  %1117 = vmatprep.subr.mxu0 0.0
  %1118 = vmatpush2.xpose.msra.mxu0 0.0
  %1119 = vmatprep.mubr.f32.mxu0 0.0
  %1120 = vmatmul.mubr.f32.gmra.mxu0 %v1000
  %v1121 = vpop.f32.mrf.mxu0
  %v1122 = vadd.f32 %v857, %v1121
  %v1123 = vpop.f32.mrf.mxu0
  %1124 = vmatprep.mubr.f32.mxu0 0.0
  %1125 = vmatmul.mubr.f32.gmra.mxu0 %v1003
  %v1126 = vpop.f32.mrf.mxu0
  %v1127 = vadd.f32 %v858, %v1126
  %v1128 = vpop.f32.mrf.mxu0
  %1129 = vmatprep.mubr.f32.mxu0 0.0
  %1130 = vmatmul.mubr.f32.gmra.mxu0 %v1006
  %v1131 = vpop.f32.mrf.mxu0
  %v1132 = vadd.f32 %v859, %v1131
  %v1133 = vpop.f32.mrf.mxu0
  %1134 = vmatprep.mubr.f32.mxu0 0.0
  %1135 = vmatmul.mubr.f32.gmra.mxu0 %v1009
  %v1136 = vpop.f32.mrf.mxu0
  %v1137 = vadd.f32 %v860, %v1136
  %v1138 = vpop.f32.mrf.mxu0
  %1139 = vmatprep.mubr.f32.mxu0 0.0
  %1140 = vmatmul.mubr.f32.gmra.mxu0 %v1012
  %v1141 = vpop.f32.mrf.mxu0
  %v1142 = vadd.f32 %v857, %v1141
  %v1143 = vpop.f32.mrf.mxu0
  %1144 = vmatprep.mubr.f32.mxu0 0.0
  %1145 = vmatmul.mubr.f32.gmra.mxu0 %v1015
  %v1146 = vpop.f32.mrf.mxu0
  %v1147 = vadd.f32 %v858, %v1146
  %v1148 = vpop.f32.mrf.mxu0
  %1149 = vmatprep.mubr.f32.mxu0 0.0
  %1150 = vmatmul.mubr.f32.gmra.mxu0 %v1018
  %v1151 = vpop.f32.mrf.mxu0
  %v1152 = vadd.f32 %v859, %v1151
  %v1153 = vpop.f32.mrf.mxu0
  %1154 = vmatprep.mubr.f32.mxu0 0.0
  %1155 = vmatmul.mubr.f32.gmra.mxu0 %v1021
  %v1156 = vpop.f32.mrf.mxu0
  %v1157 = vadd.f32 %v860, %v1156
  %v1158 = vpop.f32.mrf.mxu0
  %1159 = vmatprep.mubr.f32.mxu0 0.0
  %1160 = vmatmul.mubr.f32.gmra.mxu0 %v1024
  %v1161 = vpop.f32.mrf.mxu0
  %v1162 = vadd.f32 %v857, %v1161
  %v1163 = vpop.f32.mrf.mxu0
  %1164 = vmatprep.mubr.f32.mxu0 0.0
  %1165 = vmatmul.mubr.f32.gmra.mxu0 %v1027
  %v1166 = vpop.f32.mrf.mxu0
  %v1167 = vadd.f32 %v858, %v1166
  %v1168 = vpop.f32.mrf.mxu0
  %1169 = vmatprep.mubr.f32.mxu0 0.0
  %1170 = vmatmul.mubr.f32.gmra.mxu0 %v1030
  %v1171 = vpop.f32.mrf.mxu0
  %v1172 = vadd.f32 %v859, %v1171
  %v1173 = vpop.f32.mrf.mxu0
  %1174 = vmatprep.mubr.f32.mxu0 0.0
  %1175 = vmatmul.mubr.f32.gmra.mxu0 %v1033
  %v1176 = vpop.f32.mrf.mxu0
  %v1177 = vadd.f32 %v860, %v1176
  %v1178 = vpop.f32.mrf.mxu0
  %1179 = vmatprep.mubr.f32.mxu0 0.0
  %1180 = vmatmul.mubr.f32.gmra.mxu0 %v1036
  %v1181 = vpop.f32.mrf.mxu0
  %v1182 = vadd.f32 %v857, %v1181
  %v1183 = vpop.f32.mrf.mxu0
  %1184 = vmatprep.mubr.f32.mxu0 0.0
  %1185 = vmatmul.mubr.f32.gmra.mxu0 %v1039
  %v1186 = vpop.f32.mrf.mxu0
  %v1187 = vadd.f32 %v858, %v1186
  %v1188 = vpop.f32.mrf.mxu0
  %1189 = vmatprep.mubr.f32.mxu0 0.0
  %1190 = vmatmul.mubr.f32.gmra.mxu0 %v1042
  %v1191 = vpop.f32.mrf.mxu0
  %v1192 = vadd.f32 %v859, %v1191
  %v1193 = vpop.f32.mrf.mxu0
  %1194 = vmatprep.mubr.f32.mxu0 0.0
  %1195 = vmatmul.mubr.f32.gmra.mxu0 %v1045
  %v1196 = vpop.f32.mrf.mxu0
  %v1197 = vadd.f32 %v860, %v1196
  %v1198 = vpop.f32.mrf.mxu0
  %1199 = vdwg.mxu0
  %v1200 = vsel %vm346, %v1122, -inf
  %1201 = vmax.xlane.f32.xlu0 %v1200
  %v1202 = vpop.xlane.xlu0 %1201
  %v1203 = vsel %vm346, %v1127, -inf
  %1204 = vmax.xlane.f32.xlu0 %v1203
  %v1205 = vpop.xlane.xlu0 %1204
  %v1206 = vsel %vm346, %v1132, -inf
  %1207 = vmax.xlane.f32.xlu0 %v1206
  %v1208 = vpop.xlane.xlu0 %1207
  %v1209 = vsel %vm346, %v1137, -inf
  %1210 = vmax.xlane.f32.xlu0 %v1209
  %v1211 = vpop.xlane.xlu0 %1210
  %v1212 = vsel %vm346, %v1142, -inf
  %1213 = vmax.xlane.f32.xlu0 %v1212
  %v1214 = vpop.xlane.xlu0 %1213
  %v1215 = vsel %vm346, %v1147, -inf
  %1216 = vmax.xlane.f32.xlu0 %v1215
  %v1217 = vpop.xlane.xlu0 %1216
  %v1218 = vsel %vm346, %v1152, -inf
  %1219 = vmax.xlane.f32.xlu0 %v1218
  %v1220 = vpop.xlane.xlu0 %1219
  %v1221 = vsel %vm346, %v1157, -inf
  %1222 = vmax.xlane.f32.xlu0 %v1221
  %v1223 = vpop.xlane.xlu0 %1222
  %v1224 = vsel %vm346, %v1162, -inf
  %1225 = vmax.xlane.f32.xlu0 %v1224
  %v1226 = vpop.xlane.xlu0 %1225
  %v1227 = vsel %vm346, %v1167, -inf
  %1228 = vmax.xlane.f32.xlu0 %v1227
  %v1229 = vpop.xlane.xlu0 %1228
  %v1230 = vsel %vm346, %v1172, -inf
  %1231 = vmax.xlane.f32.xlu0 %v1230
  %v1232 = vpop.xlane.xlu0 %1231
  %v1233 = vsel %vm346, %v1177, -inf
  %1234 = vmax.xlane.f32.xlu0 %v1233
  %v1235 = vpop.xlane.xlu0 %1234
  %v1236 = vsel %vm346, %v1182, -inf
  %1237 = vmax.xlane.f32.xlu0 %v1236
  %v1238 = vpop.xlane.xlu0 %1237
  %v1239 = vsel %vm346, %v1187, -inf
  %1240 = vmax.xlane.f32.xlu0 %v1239
  %v1241 = vpop.xlane.xlu0 %1240
  %v1242 = vsel %vm346, %v1192, -inf
  %1243 = vmax.xlane.f32.xlu0 %v1242
  %v1244 = vpop.xlane.xlu0 %1243
  %v1245 = vsel %vm346, %v1197, -inf
  %1246 = vmax.xlane.f32.xlu0 %v1245
  %v1247 = vpop.xlane.xlu0 %1246
  %v1248 = vsub.f32 %v1122, %v1202
  %v1249 = vsub.f32 %v1127, %v1205
  %v1250 = vsub.f32 %v1132, %v1208
  %v1251 = vsub.f32 %v1137, %v1211
  %v1252 = vsub.f32 %v1142, %v1214
  %v1253 = vsub.f32 %v1147, %v1217
  %v1254 = vsub.f32 %v1152, %v1220
  %v1255 = vsub.f32 %v1157, %v1223
  %v1256 = vsub.f32 %v1162, %v1226
  %v1257 = vsub.f32 %v1167, %v1229
  %v1258 = vsub.f32 %v1172, %v1232
  %v1259 = vsub.f32 %v1177, %v1235
  %v1260 = vsub.f32 %v1182, %v1238
  %v1261 = vsub.f32 %v1187, %v1241
  %v1262 = vsub.f32 %v1192, %v1244
  %v1263 = vsub.f32 %v1197, %v1247
  %v1264 = vmul.f32 %v1248, 1.442695
  %v1265 = vpow.pop %v1264
  %v1266 = vmul.f32 %v1249, 1.442695
  %v1267 = vpow.pop %v1266
  %v1268 = vmul.f32 %v1250, 1.442695
  %v1269 = vpow.pop %v1268
  %v1270 = vmul.f32 %v1251, 1.442695
  %v1271 = vpow.pop %v1270
  %v1272 = vmul.f32 %v1252, 1.442695
  %v1273 = vpow.pop %v1272
  %v1274 = vmul.f32 %v1253, 1.442695
  %v1275 = vpow.pop %v1274
  %v1276 = vmul.f32 %v1254, 1.442695
  %v1277 = vpow.pop %v1276
  %v1278 = vmul.f32 %v1255, 1.442695
  %v1279 = vpow.pop %v1278
  %v1280 = vmul.f32 %v1256, 1.442695
  %v1281 = vpow.pop %v1280
  %v1282 = vmul.f32 %v1257, 1.442695
  %v1283 = vpow.pop %v1282
  %v1284 = vmul.f32 %v1258, 1.442695
  %v1285 = vpow.pop %v1284
  %v1286 = vmul.f32 %v1259, 1.442695
  %v1287 = vpow.pop %v1286
  %v1288 = vmul.f32 %v1260, 1.442695
  %v1289 = vpow.pop %v1288
  %v1290 = vmul.f32 %v1261, 1.442695
  %v1291 = vpow.pop %v1290
  %v1292 = vmul.f32 %v1262, 1.442695
  %v1293 = vpow.pop %v1292
  %v1294 = vmul.f32 %v1263, 1.442695
  %v1295 = vpow.pop %v1294
  %v1296 = vsel %vm346, %v1265, 0.0
  %1297 = vadd.xlane.f32.xlu0 %v1296
  %v1298 = vpop.xlane.xlu0 %1297
  %v1299 = vsel %vm346, %v1267, 0.0
  %1300 = vadd.xlane.f32.xlu0 %v1299
  %v1301 = vpop.xlane.xlu0 %1300
  %v1302 = vsel %vm346, %v1269, 0.0
  %1303 = vadd.xlane.f32.xlu0 %v1302
  %v1304 = vpop.xlane.xlu0 %1303
  %v1305 = vsel %vm346, %v1271, 0.0
  %1306 = vadd.xlane.f32.xlu0 %v1305
  %v1307 = vpop.xlane.xlu0 %1306
  %v1308 = vsel %vm346, %v1273, 0.0
  %1309 = vadd.xlane.f32.xlu0 %v1308
  %v1310 = vpop.xlane.xlu0 %1309
  %v1311 = vsel %vm346, %v1275, 0.0
  %1312 = vadd.xlane.f32.xlu0 %v1311
  %v1313 = vpop.xlane.xlu0 %1312
  %v1314 = vsel %vm346, %v1277, 0.0
  %1315 = vadd.xlane.f32.xlu0 %v1314
  %v1316 = vpop.xlane.xlu0 %1315
  %v1317 = vsel %vm346, %v1279, 0.0
  %1318 = vadd.xlane.f32.xlu0 %v1317
  %v1319 = vpop.xlane.xlu0 %1318
  %v1320 = vsel %vm346, %v1281, 0.0
  %1321 = vadd.xlane.f32.xlu0 %v1320
  %v1322 = vpop.xlane.xlu0 %1321
  %v1323 = vsel %vm346, %v1283, 0.0
  %1324 = vadd.xlane.f32.xlu0 %v1323
  %v1325 = vpop.xlane.xlu0 %1324
  %v1326 = vsel %vm346, %v1285, 0.0
  %1327 = vadd.xlane.f32.xlu0 %v1326
  %v1328 = vpop.xlane.xlu0 %1327
  %v1329 = vsel %vm346, %v1287, 0.0
  %1330 = vadd.xlane.f32.xlu0 %v1329
  %v1331 = vpop.xlane.xlu0 %1330
  %v1332 = vsel %vm346, %v1289, 0.0
  %1333 = vadd.xlane.f32.xlu0 %v1332
  %v1334 = vpop.xlane.xlu0 %1333
  %v1335 = vsel %vm346, %v1291, 0.0
  %1336 = vadd.xlane.f32.xlu0 %v1335
  %v1337 = vpop.xlane.xlu0 %1336
  %v1338 = vsel %vm346, %v1293, 0.0
  %1339 = vadd.xlane.f32.xlu0 %v1338
  %v1340 = vpop.xlane.xlu0 %1339
  %v1341 = vsel %vm346, %v1295, 0.0
  %1342 = vadd.xlane.f32.xlu0 %v1341
  %v1343 = vpop.xlane.xlu0 %1342
  %v1344 = vrcp.pop %v1298
  %v1345 = vrcp.pop %v1301
  %v1346 = vrcp.pop %v1304
  %v1347 = vrcp.pop %v1307
  %v1348 = vrcp.pop %v1310
  %v1349 = vrcp.pop %v1313
  %v1350 = vrcp.pop %v1316
  %v1351 = vrcp.pop %v1319
  %v1352 = vrcp.pop %v1322
  %v1353 = vrcp.pop %v1325
  %v1354 = vrcp.pop %v1328
  %v1355 = vrcp.pop %v1331
  %v1356 = vrcp.pop %v1334
  %v1357 = vrcp.pop %v1337
  %v1358 = vrcp.pop %v1340
  %v1359 = vrcp.pop %v1343
  %v1360 = vmul.f32 %v1265, %v1344
  %v1361 = vmul.f32 %v1267, %v1345
  %v1362 = vmul.f32 %v1269, %v1346
  %v1363 = vmul.f32 %v1271, %v1347
  %v1364 = vmul.f32 %v1273, %v1348
  %v1365 = vmul.f32 %v1275, %v1349
  %v1366 = vmul.f32 %v1277, %v1350
  %v1367 = vmul.f32 %v1279, %v1351
  %v1368 = vmul.f32 %v1281, %v1352
  %v1369 = vmul.f32 %v1283, %v1353
  %v1370 = vmul.f32 %v1285, %v1354
  %v1371 = vmul.f32 %v1287, %v1355
  %v1372 = vmul.f32 %v1289, %v1356
  %v1373 = vmul.f32 %v1291, %v1357
  %v1374 = vmul.f32 %v1293, %v1358
  %v1375 = vmul.f32 %v1295, %v1359
  %1376 = vrot.lane.b32.xlu0 %v953, 64
  %v1377 = vpop.permute.xlu0 %1376
  %1378 = vrot.lane.b32.xlu0 %v958, 64
  %v1379 = vpop.permute.xlu0 %1378
  %1380 = vrot.lane.b32.xlu0 %v963, 64
  %v1381 = vpop.permute.xlu0 %1380
  %1382 = vrot.lane.b32.xlu0 %v968, 64
  %v1383 = vpop.permute.xlu0 %1382
  %v1389 = vsel %vm346, %v1360, 0
  %v1392 = vsel %vm346, %v1361, 0
  %v1395 = vsel %vm346, %v1362, 0
  %v1398 = vsel %vm346, %v1363, 0
  %v1401 = vsel %vm346, %v1364, 0
  %v1404 = vsel %vm346, %v1365, 0
  %v1407 = vsel %vm346, %v1366, 0
  %v1410 = vsel %vm346, %v1367, 0
  %v1413 = vsel %vm346, %v1368, 0
  %v1416 = vsel %vm346, %v1369, 0
  %v1419 = vsel %vm346, %v1370, 0
  %v1422 = vsel %vm346, %v1371, 0
  %v1425 = vsel %vm346, %v1372, 0
  %v1428 = vsel %vm346, %v1373, 0
  %v1431 = vsel %vm346, %v1374, 0
  %v1434 = vsel %vm346, %v1375, 0
  %1436 = vmatprep.subr.mxu0 0.0
  %1437 = vmatpush1.msra.mxu0 0.0
  %1438 = vmatprep.subr.mxu0 0.0
  %1439 = vmatpush1.msra.mxu0 0.0
  %1440 = vmatprep.subr.mxu0 0.0
  %1441 = vmatpush1.msra.mxu0 0.0
  %1442 = vmatprep.subr.mxu0 0.0
  %1443 = vmatpush1.msra.mxu0 0.0
  %1444 = vmatprep.subr.mxu0 0.0
  %1445 = vmatpush1.msra.mxu0 0.0
  %1446 = vmatprep.subr.mxu0 0.0
  %1447 = vmatpush1.msra.mxu0 0.0
  %1448 = vmatprep.subr.mxu0 0.0
  %1449 = vmatpush1.msra.mxu0 0.0
  %1450 = vmatprep.subr.mxu0 0.0
  %1451 = vmatpush1.msra.mxu0 0.0
  %1452 = vmatprep.subr.mxu0 0.0
  %1453 = vmatpush1.msra.mxu0 0.0
  %1454 = vmatprep.subr.mxu0 0.0
  %1455 = vmatpush1.msra.mxu0 0.0
  %1456 = vmatprep.subr.mxu0 0.0
  %1457 = vmatpush1.msra.mxu0 0.0
  %1458 = vmatprep.subr.mxu0 0.0
  %1459 = vmatpush1.msra.mxu0 0.0
  %1460 = vmatprep.subr.mxu0 0.0
  %1461 = vmatpush1.msra.mxu0 %v1383
  %1462 = vmatprep.subr.mxu0 0.0
  %1463 = vmatpush1.msra.mxu0 %v1381
  %1464 = vmatprep.subr.mxu0 0.0
  %1465 = vmatpush1.msra.mxu0 %v1379
  %1466 = vmatprep.subr.mxu0 0.0
  %1467 = vmatpush1.msra.mxu0 %v1377
  %1468 = vmatprep.subr.mxu0 0.0
  %1469 = vmatpush2.msra.mxu0 0.0
  %1470 = vmatprep.subr.mxu0 0.0
  %1471 = vmatpush2.msra.mxu0 0.0
  %1472 = vmatprep.subr.mxu0 0.0
  %1473 = vmatpush2.msra.mxu0 0.0
  %1474 = vmatprep.subr.mxu0 0.0
  %1475 = vmatpush2.msra.mxu0 0.0
  %1476 = vmatprep.subr.mxu0 0.0
  %1477 = vmatpush2.msra.mxu0 0.0
  %1478 = vmatprep.subr.mxu0 0.0
  %1479 = vmatpush2.msra.mxu0 0.0
  %1480 = vmatprep.subr.mxu0 0.0
  %1481 = vmatpush2.msra.mxu0 0.0
  %1482 = vmatprep.subr.mxu0 0.0
  %1483 = vmatpush2.msra.mxu0 0.0
  %1484 = vmatprep.subr.mxu0 0.0
  %1485 = vmatpush2.msra.mxu0 0.0
  %1486 = vmatprep.subr.mxu0 0.0
  %1487 = vmatpush2.msra.mxu0 0.0
  %1488 = vmatprep.subr.mxu0 0.0
  %1489 = vmatpush2.msra.mxu0 0.0
  %1490 = vmatprep.subr.mxu0 0.0
  %1491 = vmatpush2.msra.mxu0 0.0
  %1492 = vmatprep.subr.mxu0 0.0
  %1493 = vmatpush2.msra.mxu0 0.0
  %1494 = vmatprep.subr.mxu0 0.0
  %1495 = vmatpush2.msra.mxu0 0.0
  %1496 = vmatprep.subr.mxu0 0.0
  %1497 = vmatpush2.msra.mxu0 0.0
  %1498 = vmatprep.subr.mxu0 0.0
  %1499 = vmatpush2.msra.mxu0 0.0
  %1500 = vmatprep.mubr.f32.mxu0 0.0
  %1501 = vmatmul.mubr.f32.gmra.mxu0 %v1389
  %v1502 = vpop.f32.mrf.mxu0
  %v1503 = vadd.f32 0.0, %v1502
  %v1504 = vpop.f32.mrf.mxu0
  %1505 = vmatprep.mubr.f32.mxu0 0.0
  %1506 = vmatmul.mubr.f32.gmra.mxu0 %v1392
  %v1507 = vpop.f32.mrf.mxu0
  %v1508 = vadd.f32 0.0, %v1507
  %v1509 = vpop.f32.mrf.mxu0
  %1510 = vmatprep.mubr.f32.mxu0 0.0
  %1511 = vmatmul.mubr.f32.gmra.mxu0 %v1395
  %v1512 = vpop.f32.mrf.mxu0
  %v1513 = vadd.f32 0.0, %v1512
  %v1514 = vpop.f32.mrf.mxu0
  %1515 = vmatprep.mubr.f32.mxu0 0.0
  %1516 = vmatmul.mubr.f32.gmra.mxu0 %v1398
  %v1517 = vpop.f32.mrf.mxu0
  %v1518 = vadd.f32 0.0, %v1517
  %v1519 = vpop.f32.mrf.mxu0
  %1520 = vmatprep.mubr.f32.mxu0 0.0
  %1521 = vmatmul.mubr.f32.gmra.mxu0 %v1401
  %v1522 = vpop.f32.mrf.mxu0
  %v1523 = vadd.f32 0.0, %v1522
  %v1524 = vpop.f32.mrf.mxu0
  %1525 = vmatprep.mubr.f32.mxu0 0.0
  %1526 = vmatmul.mubr.f32.gmra.mxu0 %v1404
  %v1527 = vpop.f32.mrf.mxu0
  %v1528 = vadd.f32 0.0, %v1527
  %v1529 = vpop.f32.mrf.mxu0
  %1530 = vmatprep.mubr.f32.mxu0 0.0
  %1531 = vmatmul.mubr.f32.gmra.mxu0 %v1407
  %v1532 = vpop.f32.mrf.mxu0
  %v1533 = vadd.f32 0.0, %v1532
  %v1534 = vpop.f32.mrf.mxu0
  %1535 = vmatprep.mubr.f32.mxu0 0.0
  %1536 = vmatmul.mubr.f32.gmra.mxu0 %v1410
  %v1537 = vpop.f32.mrf.mxu0
  %v1538 = vadd.f32 0.0, %v1537
  %v1539 = vpop.f32.mrf.mxu0
  %1540 = vmatprep.mubr.f32.mxu0 0.0
  %1541 = vmatmul.mubr.f32.gmra.mxu0 %v1413
  %v1542 = vpop.f32.mrf.mxu0
  %v1543 = vadd.f32 0.0, %v1542
  %v1544 = vpop.f32.mrf.mxu0
  %1545 = vmatprep.mubr.f32.mxu0 0.0
  %1546 = vmatmul.mubr.f32.gmra.mxu0 %v1416
  %v1547 = vpop.f32.mrf.mxu0
  %v1548 = vadd.f32 0.0, %v1547
  %v1549 = vpop.f32.mrf.mxu0
  %1550 = vmatprep.mubr.f32.mxu0 0.0
  %1551 = vmatmul.mubr.f32.gmra.mxu0 %v1419
  %v1552 = vpop.f32.mrf.mxu0
  %v1553 = vadd.f32 0.0, %v1552
  %v1554 = vpop.f32.mrf.mxu0
  %1555 = vmatprep.mubr.f32.mxu0 0.0
  %1556 = vmatmul.mubr.f32.gmra.mxu0 %v1422
  %v1557 = vpop.f32.mrf.mxu0
  %v1558 = vadd.f32 0.0, %v1557
  %v1559 = vpop.f32.mrf.mxu0
  %1560 = vmatprep.mubr.f32.mxu0 0.0
  %1561 = vmatmul.mubr.f32.gmra.mxu0 %v1425
  %v1562 = vpop.f32.mrf.mxu0
  %v1563 = vadd.f32 0.0, %v1562
  %v1564 = vpop.f32.mrf.mxu0
  %1565 = vmatprep.mubr.f32.mxu0 0.0
  %1566 = vmatmul.mubr.f32.gmra.mxu0 %v1428
  %v1567 = vpop.f32.mrf.mxu0
  %v1568 = vadd.f32 0.0, %v1567
  %v1569 = vpop.f32.mrf.mxu0
  %1570 = vmatprep.mubr.f32.mxu0 0.0
  %1571 = vmatmul.mubr.f32.gmra.mxu0 %v1431
  %v1572 = vpop.f32.mrf.mxu0
  %v1573 = vadd.f32 0.0, %v1572
  %v1574 = vpop.f32.mrf.mxu0
  %1575 = vmatprep.mubr.f32.mxu0 0.0
  %1576 = vmatmul.mubr.f32.gmra.mxu0 %v1434
  %v1577 = vpop.f32.mrf.mxu0
  %v1578 = vadd.f32 0.0, %v1577
  %v1579 = vpop.f32.mrf.mxu0
  %1580 = vdwg.mxu0
  %v1581 = vmul.f32 %v1503, %v825
  %v1582 = vmul.f32 %v1508, %v826
  %v1583 = vmul.f32 %v1513, %v827
  %v1584 = vmul.f32 %v1518, %v828
  %v1585 = vmul.f32 %v1523, %v829
  %v1586 = vmul.f32 %v1528, %v830
  %v1587 = vmul.f32 %v1533, %v831
  %v1588 = vmul.f32 %v1538, %v832
  %v1589 = vmul.f32 %v1543, %v833
  %v1590 = vmul.f32 %v1548, %v834
  %v1591 = vmul.f32 %v1553, %v835
  %v1592 = vmul.f32 %v1558, %v836
  %v1593 = vmul.f32 %v1563, %v837
  %v1594 = vmul.f32 %v1568, %v838
  %v1595 = vmul.f32 %v1573, %v839
  %v1596 = vmul.f32 %v1578, %v840
  %v1597 = vadd.f32 %v1581, %v1585
  %v1598 = vadd.f32 %v1582, %v1586
  %v1599 = vadd.f32 %v1583, %v1587
  %v1600 = vadd.f32 %v1584, %v1588
  %v1601 = vadd.f32 %v1597, %v1589
  %v1602 = vadd.f32 %v1598, %v1590
  %v1603 = vadd.f32 %v1599, %v1591
  %v1604 = vadd.f32 %v1600, %v1592
  %v1605 = vadd.f32 %v1601, %v1593
  %v1606 = vadd.f32 %v1602, %v1594
  %v1607 = vadd.f32 %v1603, %v1595
  %v1608 = vadd.f32 %v1604, %v1596
  %v1609 = vlaneseq
  %v1610 = vshrl.u32 %v1609, 7
  %v1611 = vsub.s32 1, %v1610
  %v1612 = vrot.slane %v861, %v1611
  %v1614 = vsel %vm346, %v1605, 0
  %v1617 = vsel %vm346, %v1606, 0
  %v1620 = vsel %vm346, %v1607, 0
  %v1623 = vsel %vm346, %v1608, 0
  %1625 = vmatprep.subr.mxu0 0.0
  %1626 = vmatpush1.msra.mxu0 0.0
  %1627 = vmatprep.subr.mxu0 0.0
  %1628 = vmatpush1.msra.mxu0 0.0
  %1629 = vmatprep.subr.mxu0 0.0
  %1630 = vmatpush1.msra.mxu0 0.0
  %1631 = vmatprep.subr.mxu0 0.0
  %1632 = vmatpush1.msra.mxu0 0.0
  %1633 = vmatprep.subr.mxu0 0.0
  %1634 = vmatpush1.msra.mxu0 0.0
  %1635 = vmatprep.subr.mxu0 0.0
  %1636 = vmatpush1.msra.mxu0 0.0
  %1637 = vmatprep.subr.mxu0 0.0
  %1638 = vmatpush1.msra.mxu0 0.0
  %1639 = vmatprep.subr.mxu0 0.0
  %1640 = vmatpush1.msra.mxu0 0.0
  %1641 = vmatprep.subr.mxu0 0.0
  %1642 = vmatpush1.msra.mxu0 0.0
  %1643 = vmatprep.subr.mxu0 0.0
  %1644 = vmatpush1.msra.mxu0 0.0
  %1645 = vmatprep.subr.mxu0 0.0
  %1646 = vmatpush1.msra.mxu0 0.0
  %1647 = vmatprep.subr.mxu0 0.0
  %1648 = vmatpush1.msra.mxu0 0.0
  %1649 = vmatprep.subr.mxu0 0.0
  %1650 = vmatpush1.msra.mxu0 %v869
  %1651 = vmatprep.subr.mxu0 0.0
  %1652 = vmatpush1.msra.mxu0 %v868
  %1653 = vmatprep.subr.mxu0 0.0
  %1654 = vmatpush1.msra.mxu0 %v867
  %1655 = vmatprep.subr.mxu0 0.0
  %1656 = vmatpush1.msra.mxu0 %v866
  %1657 = vmatprep.subr.mxu0 0.0
  %1658 = vmatpush2.msra.mxu0 0.0
  %1659 = vmatprep.subr.mxu0 0.0
  %1660 = vmatpush2.msra.mxu0 0.0
  %1661 = vmatprep.subr.mxu0 0.0
  %1662 = vmatpush2.msra.mxu0 0.0
  %1663 = vmatprep.subr.mxu0 0.0
  %1664 = vmatpush2.msra.mxu0 0.0
  %1665 = vmatprep.subr.mxu0 0.0
  %1666 = vmatpush2.msra.mxu0 0.0
  %1667 = vmatprep.subr.mxu0 0.0
  %1668 = vmatpush2.msra.mxu0 0.0
  %1669 = vmatprep.subr.mxu0 0.0
  %1670 = vmatpush2.msra.mxu0 0.0
  %1671 = vmatprep.subr.mxu0 0.0
  %1672 = vmatpush2.msra.mxu0 0.0
  %1673 = vmatprep.subr.mxu0 0.0
  %1674 = vmatpush2.msra.mxu0 0.0
  %1675 = vmatprep.subr.mxu0 0.0
  %1676 = vmatpush2.msra.mxu0 0.0
  %1677 = vmatprep.subr.mxu0 0.0
  %1678 = vmatpush2.msra.mxu0 0.0
  %1679 = vmatprep.subr.mxu0 0.0
  %1680 = vmatpush2.msra.mxu0 0.0
  %1681 = vmatprep.subr.mxu0 0.0
  %1682 = vmatpush2.msra.mxu0 0.0
  %1683 = vmatprep.subr.mxu0 0.0
  %1684 = vmatpush2.msra.mxu0 0.0
  %1685 = vmatprep.subr.mxu0 0.0
  %1686 = vmatpush2.msra.mxu0 0.0
  %1687 = vmatprep.subr.mxu0 0.0
  %1688 = vmatpush2.msra.mxu0 0.0
  %1689 = vmatprep.mubr.f32.mxu0 0.0
  %1690 = vmatmul.mubr.f32.gmra.mxu0 %v1614
  %v1691 = vpop.f32.mrf.mxu0
  %v1692 = vadd.f32 %v1612, %v1691
  %v1693 = vpop.f32.mrf.mxu0
  %1694 = vmatprep.mubr.f32.mxu0 0.0
  %1695 = vmatmul.mubr.f32.gmra.mxu0 %v1617
  %v1696 = vpop.f32.mrf.mxu0
  %v1697 = vadd.f32 %v1612, %v1696
  %v1698 = vpop.f32.mrf.mxu0
  %1699 = vmatprep.mubr.f32.mxu0 0.0
  %1700 = vmatmul.mubr.f32.gmra.mxu0 %v1620
  %v1701 = vpop.f32.mrf.mxu0
  %v1702 = vadd.f32 %v1612, %v1701
  %v1703 = vpop.f32.mrf.mxu0
  %1704 = vmatprep.mubr.f32.mxu0 0.0
  %1705 = vmatmul.mubr.f32.gmra.mxu0 %v1623
  %v1706 = vpop.f32.mrf.mxu0
  %v1707 = vadd.f32 %v1612, %v1706
  %v1708 = vpop.f32.mrf.mxu0
  %1709 = vdwg.mxu0
  %v1710 = vadd.f32 %v412, %v1692
  %v1711 = vadd.f32 %v413, %v1697
  %v1712 = vadd.f32 %v414, %v1702
  %v1713 = vadd.f32 %v415, %v1707
  %v1714 = vsel %vm346, %v1710, 0.0
  %1715 = vadd.xlane.f32.xlu0 %v1714
  %v1716 = vpop.xlane.xlu0 %1715
  %v1717 = vsel %vm346, %v1711, 0.0
  %1718 = vadd.xlane.f32.xlu0 %v1717
  %v1719 = vpop.xlane.xlu0 %1718
  %v1720 = vsel %vm346, %v1712, 0.0
  %1721 = vadd.xlane.f32.xlu0 %v1720
  %v1722 = vpop.xlane.xlu0 %1721
  %v1723 = vsel %vm346, %v1713, 0.0
  %1724 = vadd.xlane.f32.xlu0 %v1723
  %v1725 = vpop.xlane.xlu0 %1724
  %v1726 = vmul.f32 %v1716, %v359
  %v1727 = vmul.f32 %v1719, %v359
  %v1728 = vmul.f32 %v1722, %v359
  %v1729 = vmul.f32 %v1725, %v359
  %v1730 = vsub.f32 %v1710, %v1726
  %v1731 = vsub.f32 %v1711, %v1727
  %v1732 = vsub.f32 %v1712, %v1728
  %v1733 = vsub.f32 %v1713, %v1729
  %v1734 = vmul.f32 %v1730, %v1730
  %v1735 = vmul.f32 %v1731, %v1731
  %v1736 = vmul.f32 %v1732, %v1732
  %v1737 = vmul.f32 %v1733, %v1733
  %v1738 = vsel %vm346, %v1734, 0.0
  %1739 = vadd.xlane.f32.xlu0 %v1738
  %v1740 = vpop.xlane.xlu0 %1739
  %v1741 = vsel %vm346, %v1735, 0.0
  %1742 = vadd.xlane.f32.xlu0 %v1741
  %v1743 = vpop.xlane.xlu0 %1742
  %v1744 = vsel %vm346, %v1736, 0.0
  %1745 = vadd.xlane.f32.xlu0 %v1744
  %v1746 = vpop.xlane.xlu0 %1745
  %v1747 = vsel %vm346, %v1737, 0.0
  %1748 = vadd.xlane.f32.xlu0 %v1747
  %v1749 = vpop.xlane.xlu0 %1748
  %v1750 = vmul.f32 %v1740, %v359
  %v1751 = vmul.f32 %v1743, %v359
  %v1752 = vmul.f32 %v1746, %v359
  %v1753 = vmul.f32 %v1749, %v359
  %v1754 = vadd.f32 %v1750, 1e-12
  %v1755 = vadd.f32 %v1751, 1e-12
  %v1756 = vadd.f32 %v1752, 1e-12
  %v1757 = vadd.f32 %v1753, 1e-12
  %v1758 = vrsqrt.pop %v1754
  %v1759 = vrsqrt.pop %v1755
  %v1760 = vrsqrt.pop %v1756
  %v1761 = vrsqrt.pop %v1757
  %v1762 = vmul.f32 %v1730, %v1758
  %v1763 = vmul.f32 %v1731, %v1759
  %v1764 = vmul.f32 %v1732, %v1760
  %v1765 = vmul.f32 %v1733, %v1761
  %v1766 = vlaneseq
  %v1767 = vshrl.u32 %v1766, 7
  %v1768 = vsub.s32 2, %v1767
  %v1769 = vrot.slane %v861, %v1768
  %v1770 = vmul.f32 %v1762, %v1769
  %v1771 = vmul.f32 %v1763, %v1769
  %v1772 = vmul.f32 %v1764, %v1769
  %v1773 = vmul.f32 %v1765, %v1769
  %v1774 = vlaneseq
  %v1775 = vshrl.u32 %v1774, 7
  %v1776 = vsub.s32 3, %v1775
  %v1777 = vrot.slane %v861, %v1776
  %v1778 = vadd.f32 %v1770, %v1777
  %v1779 = vadd.f32 %v1771, %v1777
  %v1780 = vadd.f32 %v1772, %v1777
  %v1781 = vadd.f32 %v1773, %v1777
  %v1782 = vld [vmem:[%s7] sm:$0xff]
  %v1783 = vld [vmem:[%s7 + $0x8] sm:$0xff]
  %v1784 = vld [vmem:[%s7 + $0x10] sm:$0xff]
  %v1785 = vld [vmem:[%s7 + $0x18] sm:$0xff]
  %v1786 = vlaneseq
  %v1787 = vshrl.u32 %v1786, 7
  %v1788 = vsub.s32 4, %v1787
  %v1789 = vrot.slane %v861, %v1788
  %v1791 = vsel %vm346, %v1778, 0
  %v1794 = vsel %vm346, %v1779, 0
  %v1797 = vsel %vm346, %v1780, 0
  %v1800 = vsel %vm346, %v1781, 0
  %1802 = vmatprep.subr.mxu0 0.0
  %1803 = vmatpush1.msra.mxu0 0.0
  %1804 = vmatprep.subr.mxu0 0.0
  %1805 = vmatpush1.msra.mxu0 0.0
  %1806 = vmatprep.subr.mxu0 0.0
  %1807 = vmatpush1.msra.mxu0 0.0
  %1808 = vmatprep.subr.mxu0 0.0
  %1809 = vmatpush1.msra.mxu0 0.0
  %1810 = vmatprep.subr.mxu0 0.0
  %1811 = vmatpush1.msra.mxu0 0.0
  %1812 = vmatprep.subr.mxu0 0.0
  %1813 = vmatpush1.msra.mxu0 0.0
  %1814 = vmatprep.subr.mxu0 0.0
  %1815 = vmatpush1.msra.mxu0 0.0
  %1816 = vmatprep.subr.mxu0 0.0
  %1817 = vmatpush1.msra.mxu0 0.0
  %1818 = vmatprep.subr.mxu0 0.0
  %1819 = vmatpush1.msra.mxu0 0.0
  %1820 = vmatprep.subr.mxu0 0.0
  %1821 = vmatpush1.msra.mxu0 0.0
  %1822 = vmatprep.subr.mxu0 0.0
  %1823 = vmatpush1.msra.mxu0 0.0
  %1824 = vmatprep.subr.mxu0 0.0
  %1825 = vmatpush1.msra.mxu0 0.0
  %1826 = vmatprep.subr.mxu0 0.0
  %1827 = vmatpush1.msra.mxu0 %v1785
  %1828 = vmatprep.subr.mxu0 0.0
  %1829 = vmatpush1.msra.mxu0 %v1784
  %1830 = vmatprep.subr.mxu0 0.0
  %1831 = vmatpush1.msra.mxu0 %v1783
  %1832 = vmatprep.subr.mxu0 0.0
  %1833 = vmatpush1.msra.mxu0 %v1782
  %1834 = vmatprep.subr.mxu0 0.0
  %1835 = vmatpush2.msra.mxu0 0.0
  %1836 = vmatprep.subr.mxu0 0.0
  %1837 = vmatpush2.msra.mxu0 0.0
  %1838 = vmatprep.subr.mxu0 0.0
  %1839 = vmatpush2.msra.mxu0 0.0
  %1840 = vmatprep.subr.mxu0 0.0
  %1841 = vmatpush2.msra.mxu0 0.0
  %1842 = vmatprep.subr.mxu0 0.0
  %1843 = vmatpush2.msra.mxu0 0.0
  %1844 = vmatprep.subr.mxu0 0.0
  %1845 = vmatpush2.msra.mxu0 0.0
  %1846 = vmatprep.subr.mxu0 0.0
  %1847 = vmatpush2.msra.mxu0 0.0
  %1848 = vmatprep.subr.mxu0 0.0
  %1849 = vmatpush2.msra.mxu0 0.0
  %1850 = vmatprep.subr.mxu0 0.0
  %1851 = vmatpush2.msra.mxu0 0.0
  %1852 = vmatprep.subr.mxu0 0.0
  %1853 = vmatpush2.msra.mxu0 0.0
  %1854 = vmatprep.subr.mxu0 0.0
  %1855 = vmatpush2.msra.mxu0 0.0
  %1856 = vmatprep.subr.mxu0 0.0
  %1857 = vmatpush2.msra.mxu0 0.0
  %1858 = vmatprep.subr.mxu0 0.0
  %1859 = vmatpush2.msra.mxu0 0.0
  %1860 = vmatprep.subr.mxu0 0.0
  %1861 = vmatpush2.msra.mxu0 0.0
  %1862 = vmatprep.subr.mxu0 0.0
  %1863 = vmatpush2.msra.mxu0 0.0
  %1864 = vmatprep.subr.mxu0 0.0
  %1865 = vmatpush2.msra.mxu0 0.0
  %1866 = vmatprep.mubr.f32.mxu0 0.0
  %1867 = vmatmul.mubr.f32.gmra.mxu0 %v1791
  %v1868 = vpop.f32.mrf.mxu0
  %v1869 = vadd.f32 %v1789, %v1868
  %v1870 = vpop.f32.mrf.mxu0
  %1871 = vmatprep.mubr.f32.mxu0 0.0
  %1872 = vmatmul.mubr.f32.gmra.mxu0 %v1794
  %v1873 = vpop.f32.mrf.mxu0
  %v1874 = vadd.f32 %v1789, %v1873
  %v1875 = vpop.f32.mrf.mxu0
  %1876 = vmatprep.mubr.f32.mxu0 0.0
  %1877 = vmatmul.mubr.f32.gmra.mxu0 %v1797
  %v1878 = vpop.f32.mrf.mxu0
  %v1879 = vadd.f32 %v1789, %v1878
  %v1880 = vpop.f32.mrf.mxu0
  %1881 = vmatprep.mubr.f32.mxu0 0.0
  %1882 = vmatmul.mubr.f32.gmra.mxu0 %v1800
  %v1883 = vpop.f32.mrf.mxu0
  %v1884 = vadd.f32 %v1789, %v1883
  %v1885 = vpop.f32.mrf.mxu0
  %1886 = vdwg.mxu0
  %v1887 = vmul.f32 %v1869, %v1869
  %v1888 = vmul.f32 %v1874, %v1874
  %v1889 = vmul.f32 %v1879, %v1879
  %v1890 = vmul.f32 %v1884, %v1884
  %v1891 = vmul.f32 %v1869, %v1887
  %v1892 = vmul.f32 %v1874, %v1888
  %v1893 = vmul.f32 %v1879, %v1889
  %v1894 = vmul.f32 %v1884, %v1890
  %v1895 = vmul.f32 %v1891, 0.044715
  %v1896 = vmul.f32 %v1892, 0.044715
  %v1897 = vmul.f32 %v1893, 0.044715
  %v1898 = vmul.f32 %v1894, 0.044715
  %v1899 = vadd.f32 %v1869, %v1895
  %v1900 = vadd.f32 %v1874, %v1896
  %v1901 = vadd.f32 %v1879, %v1897
  %v1902 = vadd.f32 %v1884, %v1898
  %v1903 = vmul.f32 %v1899, 0.7978846
  %v1904 = vmul.f32 %v1900, 0.7978846
  %v1905 = vmul.f32 %v1901, 0.7978846
  %v1906 = vmul.f32 %v1902, 0.7978846
  %v1907 = vtanh.pop %v1903
  %v1908 = vtanh.pop %v1904
  %v1909 = vtanh.pop %v1905
  %v1910 = vtanh.pop %v1906
  %v1911 = vadd.f32 %v1907, 1.0
  %v1912 = vadd.f32 %v1908, 1.0
  %v1913 = vadd.f32 %v1909, 1.0
  %v1914 = vadd.f32 %v1910, 1.0
  %v1915 = vmul.f32 %v1911, 0.5
  %v1916 = vmul.f32 %v1912, 0.5
  %v1917 = vmul.f32 %v1913, 0.5
  %v1918 = vmul.f32 %v1914, 0.5
  %v1919 = vmul.f32 %v1869, %v1915
  %v1920 = vmul.f32 %v1874, %v1916
  %v1921 = vmul.f32 %v1879, %v1917
  %v1922 = vmul.f32 %v1884, %v1918
  %v1923 = vld [vmem:[%s8] sm:$0xff]
  %v1924 = vld [vmem:[%s8 + $0x8] sm:$0xff]
  %v1925 = vld [vmem:[%s8 + $0x10] sm:$0xff]
  %v1926 = vld [vmem:[%s8 + $0x18] sm:$0xff]
  %v1927 = vld [vmem:[%s8 + $0x20] sm:$0xff]
  %v1928 = vld [vmem:[%s8 + $0x28] sm:$0xff]
  %v1929 = vld [vmem:[%s8 + $0x30] sm:$0xff]
  %v1930 = vld [vmem:[%s8 + $0x38] sm:$0xff]
  %v1931 = vlaneseq
  %v1932 = vshrl.u32 %v1931, 7
  %v1933 = vsub.s32 5, %v1932
  %v1934 = vrot.slane %v861, %v1933
  %vm1935 = vcmask 523264
  %v1937 = vsel %vm1935, %v1919, 0
  %v1940 = vsel %vm1935, %v1920, 0
  %v1943 = vsel %vm1935, %v1921, 0
  %v1946 = vsel %vm1935, %v1922, 0
  %1948 = vmatprep.subr.mxu0 0.0
  %1949 = vmatpush1.msra.mxu0 0.0
  %1950 = vmatprep.subr.mxu0 0.0
  %1951 = vmatpush1.msra.mxu0 0.0
  %1952 = vmatprep.subr.mxu0 0.0
  %1953 = vmatpush1.msra.mxu0 0.0
  %1954 = vmatprep.subr.mxu0 0.0
  %1955 = vmatpush1.msra.mxu0 0.0
  %1956 = vmatprep.subr.mxu0 0.0
  %1957 = vmatpush1.msra.mxu0 0.0
  %1958 = vmatprep.subr.mxu0 0.0
  %1959 = vmatpush1.msra.mxu0 0.0
  %1960 = vmatprep.subr.mxu0 0.0
  %1961 = vmatpush1.msra.mxu0 0.0
  %1962 = vmatprep.subr.mxu0 0.0
  %1963 = vmatpush1.msra.mxu0 0.0
  %1964 = vmatprep.subr.mxu0 0.0
  %1965 = vmatpush1.msra.mxu0 %v1930
  %1966 = vmatprep.subr.mxu0 0.0
  %1967 = vmatpush1.msra.mxu0 %v1929
  %1968 = vmatprep.subr.mxu0 0.0
  %1969 = vmatpush1.msra.mxu0 %v1928
  %1970 = vmatprep.subr.mxu0 0.0
  %1971 = vmatpush1.msra.mxu0 %v1927
  %1972 = vmatprep.subr.mxu0 0.0
  %1973 = vmatpush1.msra.mxu0 %v1926
  %1974 = vmatprep.subr.mxu0 0.0
  %1975 = vmatpush1.msra.mxu0 %v1925
  %1976 = vmatprep.subr.mxu0 0.0
  %1977 = vmatpush1.msra.mxu0 %v1924
  %1978 = vmatprep.subr.mxu0 0.0
  %1979 = vmatpush1.msra.mxu0 %v1923
  %1980 = vmatprep.subr.mxu0 0.0
  %1981 = vmatpush2.msra.mxu0 0.0
  %1982 = vmatprep.subr.mxu0 0.0
  %1983 = vmatpush2.msra.mxu0 0.0
  %1984 = vmatprep.subr.mxu0 0.0
  %1985 = vmatpush2.msra.mxu0 0.0
  %1986 = vmatprep.subr.mxu0 0.0
  %1987 = vmatpush2.msra.mxu0 0.0
  %1988 = vmatprep.subr.mxu0 0.0
  %1989 = vmatpush2.msra.mxu0 0.0
  %1990 = vmatprep.subr.mxu0 0.0
  %1991 = vmatpush2.msra.mxu0 0.0
  %1992 = vmatprep.subr.mxu0 0.0
  %1993 = vmatpush2.msra.mxu0 0.0
  %1994 = vmatprep.subr.mxu0 0.0
  %1995 = vmatpush2.msra.mxu0 0.0
  %1996 = vmatprep.subr.mxu0 0.0
  %1997 = vmatpush2.msra.mxu0 0.0
  %1998 = vmatprep.subr.mxu0 0.0
  %1999 = vmatpush2.msra.mxu0 0.0
  %2000 = vmatprep.subr.mxu0 0.0
  %2001 = vmatpush2.msra.mxu0 0.0
  %2002 = vmatprep.subr.mxu0 0.0
  %2003 = vmatpush2.msra.mxu0 0.0
  %2004 = vmatprep.subr.mxu0 0.0
  %2005 = vmatpush2.msra.mxu0 0.0
  %2006 = vmatprep.subr.mxu0 0.0
  %2007 = vmatpush2.msra.mxu0 0.0
  %2008 = vmatprep.subr.mxu0 0.0
  %2009 = vmatpush2.msra.mxu0 0.0
  %2010 = vmatprep.subr.mxu0 0.0
  %2011 = vmatpush2.msra.mxu0 0.0
  %2012 = vmatprep.mubr.f32.mxu0 0.0
  %2013 = vmatmul.mubr.f32.gmra.mxu0 %v1937
  %v2014 = vpop.f32.mrf.mxu0
  %v2015 = vadd.f32 %v1934, %v2014
  %v2016 = vpop.f32.mrf.mxu0
  %2017 = vmatprep.mubr.f32.mxu0 0.0
  %2018 = vmatmul.mubr.f32.gmra.mxu0 %v1940
  %v2019 = vpop.f32.mrf.mxu0
  %v2020 = vadd.f32 %v1934, %v2019
  %v2021 = vpop.f32.mrf.mxu0
  %2022 = vmatprep.mubr.f32.mxu0 0.0
  %2023 = vmatmul.mubr.f32.gmra.mxu0 %v1943
  %v2024 = vpop.f32.mrf.mxu0
  %v2025 = vadd.f32 %v1934, %v2024
  %v2026 = vpop.f32.mrf.mxu0
  %2027 = vmatprep.mubr.f32.mxu0 0.0
  %2028 = vmatmul.mubr.f32.gmra.mxu0 %v1946
  %v2029 = vpop.f32.mrf.mxu0
  %v2030 = vadd.f32 %v1934, %v2029
  %v2031 = vpop.f32.mrf.mxu0
  %2032 = vdwg.mxu0
  %v2033 = vadd.f32 %v1778, %v2015
  %v2034 = vadd.f32 %v1779, %v2020
  %v2035 = vadd.f32 %v1780, %v2025
  %v2036 = vadd.f32 %v1781, %v2030
  %v2037 = vsel %vm346, %v2033, 0.0
  %2038 = vadd.xlane.f32.xlu0 %v2037
  %v2039 = vpop.xlane.xlu0 %2038
  %v2040 = vsel %vm346, %v2034, 0.0
  %2041 = vadd.xlane.f32.xlu0 %v2040
  %v2042 = vpop.xlane.xlu0 %2041
  %v2043 = vsel %vm346, %v2035, 0.0
  %2044 = vadd.xlane.f32.xlu0 %v2043
  %v2045 = vpop.xlane.xlu0 %2044
  %v2046 = vsel %vm346, %v2036, 0.0
  %2047 = vadd.xlane.f32.xlu0 %v2046
  %v2048 = vpop.xlane.xlu0 %2047
  %v2049 = vmul.f32 %v2039, %v359
  %v2050 = vmul.f32 %v2042, %v359
  %v2051 = vmul.f32 %v2045, %v359
  %v2052 = vmul.f32 %v2048, %v359
  %v2053 = vsub.f32 %v2033, %v2049
  %v2054 = vsub.f32 %v2034, %v2050
  %v2055 = vsub.f32 %v2035, %v2051
  %v2056 = vsub.f32 %v2036, %v2052
  %v2057 = vmul.f32 %v2053, %v2053
  %v2058 = vmul.f32 %v2054, %v2054
  %v2059 = vmul.f32 %v2055, %v2055
  %v2060 = vmul.f32 %v2056, %v2056
  %v2061 = vsel %vm346, %v2057, 0.0
  %2062 = vadd.xlane.f32.xlu0 %v2061
  %v2063 = vpop.xlane.xlu0 %2062
  %v2064 = vsel %vm346, %v2058, 0.0
  %2065 = vadd.xlane.f32.xlu0 %v2064
  %v2066 = vpop.xlane.xlu0 %2065
  %v2067 = vsel %vm346, %v2059, 0.0
  %2068 = vadd.xlane.f32.xlu0 %v2067
  %v2069 = vpop.xlane.xlu0 %2068
  %v2070 = vsel %vm346, %v2060, 0.0
  %2071 = vadd.xlane.f32.xlu0 %v2070
  %v2072 = vpop.xlane.xlu0 %2071
  %v2073 = vmul.f32 %v2063, %v359
  %v2074 = vmul.f32 %v2066, %v359
  %v2075 = vmul.f32 %v2069, %v359
  %v2076 = vmul.f32 %v2072, %v359
  %v2077 = vadd.f32 %v2073, 1e-12
  %v2078 = vadd.f32 %v2074, 1e-12
  %v2079 = vadd.f32 %v2075, 1e-12
  %v2080 = vadd.f32 %v2076, 1e-12
  %v2081 = vrsqrt.pop %v2077
  %v2082 = vrsqrt.pop %v2078
  %v2083 = vrsqrt.pop %v2079
  %v2084 = vrsqrt.pop %v2080
  %v2085 = vmul.f32 %v2053, %v2081
  %v2086 = vmul.f32 %v2054, %v2082
  %v2087 = vmul.f32 %v2055, %v2083
  %v2088 = vmul.f32 %v2056, %v2084
  %v2089 = vlaneseq
  %v2090 = vshrl.u32 %v2089, 7
  %v2091 = vsub.s32 6, %v2090
  %v2092 = vrot.slane %v861, %v2091
  %v2093 = vmul.f32 %v2085, %v2092
  %v2094 = vmul.f32 %v2086, %v2092
  %v2095 = vmul.f32 %v2087, %v2092
  %v2096 = vmul.f32 %v2088, %v2092
  %v2097 = vlaneseq
  %v2098 = vshrl.u32 %v2097, 7
  %v2099 = vsub.s32 7, %v2098
  %v2100 = vrot.slane %v861, %v2099
  %v2101 = vadd.f32 %v2093, %v2100
  %v2102 = vadd.f32 %v2094, %v2100
  %v2103 = vadd.f32 %v2095, %v2100
  %v2104 = vadd.f32 %v2096, %v2100
  %s2105 = scalar_lea.vmem %s9, 8
  %v2106 = vld [vmem:[%s2105] sm:$0xff]
  %s2107 = scalar_lea.vmem %s5, 32
  %v2108 = vld [vmem:[%s2107] sm:$0xff]
  %v2109 = vld [vmem:[%s2107 + $0x8] sm:$0xff]
  %v2110 = vld [vmem:[%s2107 + $0x10] sm:$0xff]
  %v2111 = vld [vmem:[%s2107 + $0x18] sm:$0xff]
  %s2112 = scalar_lea.vmem %s6, 32
  %v2113 = vld [vmem:[%s2112] sm:$0xff]
  %v2114 = vld [vmem:[%s2112 + $0x8] sm:$0xff]
  %v2115 = vld [vmem:[%s2112 + $0x10] sm:$0xff]
  %v2116 = vld [vmem:[%s2112 + $0x18] sm:$0xff]
  %v2117 = vlaneseq
  %v2118 = vshrl.u32 %v2117, 7
  %v2119 = vsub.s32 0, %v2118
  %v2120 = vrot.slane %v2106, %v2119
  %v2122 = vsel %vm346, %v2101, 0
  %v2125 = vsel %vm346, %v2102, 0
  %v2128 = vsel %vm346, %v2103, 0
  %v2131 = vsel %vm346, %v2104, 0
  %2133 = vmatprep.subr.mxu0 0.0
  %2134 = vmatpush1.msra.mxu0 0.0
  %2135 = vmatprep.subr.mxu0 0.0
  %2136 = vmatpush1.msra.mxu0 0.0
  %2137 = vmatprep.subr.mxu0 0.0
  %2138 = vmatpush1.msra.mxu0 0.0
  %2139 = vmatprep.subr.mxu0 0.0
  %2140 = vmatpush1.msra.mxu0 0.0
  %2141 = vmatprep.subr.mxu0 0.0
  %2142 = vmatpush1.msra.mxu0 0.0
  %2143 = vmatprep.subr.mxu0 0.0
  %2144 = vmatpush1.msra.mxu0 0.0
  %2145 = vmatprep.subr.mxu0 0.0
  %2146 = vmatpush1.msra.mxu0 0.0
  %2147 = vmatprep.subr.mxu0 0.0
  %2148 = vmatpush1.msra.mxu0 0.0
  %2149 = vmatprep.subr.mxu0 0.0
  %2150 = vmatpush1.msra.mxu0 0.0
  %2151 = vmatprep.subr.mxu0 0.0
  %2152 = vmatpush1.msra.mxu0 0.0
  %2153 = vmatprep.subr.mxu0 0.0
  %2154 = vmatpush1.msra.mxu0 0.0
  %2155 = vmatprep.subr.mxu0 0.0
  %2156 = vmatpush1.msra.mxu0 0.0
  %2157 = vmatprep.subr.mxu0 0.0
  %2158 = vmatpush1.msra.mxu0 %v2111
  %2159 = vmatprep.subr.mxu0 0.0
  %2160 = vmatpush1.msra.mxu0 %v2110
  %2161 = vmatprep.subr.mxu0 0.0
  %2162 = vmatpush1.msra.mxu0 %v2109
  %2163 = vmatprep.subr.mxu0 0.0
  %2164 = vmatpush1.msra.mxu0 %v2108
  %2165 = vmatprep.subr.mxu0 0.0
  %2166 = vmatpush2.msra.mxu0 0.0
  %2167 = vmatprep.subr.mxu0 0.0
  %2168 = vmatpush2.msra.mxu0 0.0
  %2169 = vmatprep.subr.mxu0 0.0
  %2170 = vmatpush2.msra.mxu0 0.0
  %2171 = vmatprep.subr.mxu0 0.0
  %2172 = vmatpush2.msra.mxu0 0.0
  %2173 = vmatprep.subr.mxu0 0.0
  %2174 = vmatpush2.msra.mxu0 0.0
  %2175 = vmatprep.subr.mxu0 0.0
  %2176 = vmatpush2.msra.mxu0 0.0
  %2177 = vmatprep.subr.mxu0 0.0
  %2178 = vmatpush2.msra.mxu0 0.0
  %2179 = vmatprep.subr.mxu0 0.0
  %2180 = vmatpush2.msra.mxu0 0.0
  %2181 = vmatprep.subr.mxu0 0.0
  %2182 = vmatpush2.msra.mxu0 0.0
  %2183 = vmatprep.subr.mxu0 0.0
  %2184 = vmatpush2.msra.mxu0 0.0
  %2185 = vmatprep.subr.mxu0 0.0
  %2186 = vmatpush2.msra.mxu0 0.0
  %2187 = vmatprep.subr.mxu0 0.0
  %2188 = vmatpush2.msra.mxu0 0.0
  %2189 = vmatprep.subr.mxu0 0.0
  %2190 = vmatpush2.msra.mxu0 0.0
  %2191 = vmatprep.subr.mxu0 0.0
  %2192 = vmatpush2.msra.mxu0 0.0
  %2193 = vmatprep.subr.mxu0 0.0
  %2194 = vmatpush2.msra.mxu0 0.0
  %2195 = vmatprep.subr.mxu0 0.0
  %2196 = vmatpush2.msra.mxu0 0.0
  %2197 = vmatprep.mubr.f32.mxu0 0.0
  %2198 = vmatmul.mubr.f32.gmra.mxu0 %v2122
  %v2199 = vpop.f32.mrf.mxu0
  %v2200 = vadd.f32 %v2120, %v2199
  %v2201 = vpop.f32.mrf.mxu0
  %2202 = vmatprep.mubr.f32.mxu0 0.0
  %2203 = vmatmul.mubr.f32.gmra.mxu0 %v2125
  %v2204 = vpop.f32.mrf.mxu0
  %v2205 = vadd.f32 %v2120, %v2204
  %v2206 = vpop.f32.mrf.mxu0
  %2207 = vmatprep.mubr.f32.mxu0 0.0
  %2208 = vmatmul.mubr.f32.gmra.mxu0 %v2128
  %v2209 = vpop.f32.mrf.mxu0
  %v2210 = vadd.f32 %v2120, %v2209
  %v2211 = vpop.f32.mrf.mxu0
  %2212 = vmatprep.mubr.f32.mxu0 0.0
  %2213 = vmatmul.mubr.f32.gmra.mxu0 %v2131
  %v2214 = vpop.f32.mrf.mxu0
  %v2215 = vadd.f32 %v2120, %v2214
  %v2216 = vpop.f32.mrf.mxu0
  %2217 = vdwg.mxu0
  %v2218 = vmul.f32 %v2200, %v841
  %v2219 = vmul.f32 %v2205, %v842
  %v2220 = vmul.f32 %v2210, %v843
  %v2221 = vmul.f32 %v2215, %v844
  %v2222 = vmul.f32 %v2200, %v845
  %v2223 = vmul.f32 %v2205, %v846
  %v2224 = vmul.f32 %v2210, %v847
  %v2225 = vmul.f32 %v2215, %v848
  %v2226 = vmul.f32 %v2200, %v849
  %v2227 = vmul.f32 %v2205, %v850
  %v2228 = vmul.f32 %v2210, %v851
  %v2229 = vmul.f32 %v2215, %v852
  %v2230 = vmul.f32 %v2200, %v853
  %v2231 = vmul.f32 %v2205, %v854
  %v2232 = vmul.f32 %v2210, %v855
  %v2233 = vmul.f32 %v2215, %v856
  %2238 = vrot.lane.b32.xlu0 %v2200, 96
  %v2239 = vpop.permute.xlu0 %2238
  %2240 = vrot.lane.b32.xlu0 %v2205, 96
  %v2241 = vpop.permute.xlu0 %2240
  %2242 = vrot.lane.b32.xlu0 %v2210, 96
  %v2243 = vpop.permute.xlu0 %2242
  %2244 = vrot.lane.b32.xlu0 %v2215, 96
  %v2245 = vpop.permute.xlu0 %2244
  %v2247 = vsel %vm346, %v2218, 0
  %v2250 = vsel %vm346, %v2219, 0
  %v2253 = vsel %vm346, %v2220, 0
  %v2256 = vsel %vm346, %v2221, 0
  %v2259 = vsel %vm346, %v2222, 0
  %v2262 = vsel %vm346, %v2223, 0
  %v2265 = vsel %vm346, %v2224, 0
  %v2268 = vsel %vm346, %v2225, 0
  %v2271 = vsel %vm346, %v2226, 0
  %v2274 = vsel %vm346, %v2227, 0
  %v2277 = vsel %vm346, %v2228, 0
  %v2280 = vsel %vm346, %v2229, 0
  %v2283 = vsel %vm346, %v2230, 0
  %v2286 = vsel %vm346, %v2231, 0
  %v2289 = vsel %vm346, %v2232, 0
  %v2292 = vsel %vm346, %v2233, 0
  %v2294 = vsel %vm346, %v2239, 0
  %v2296 = vsel %vm346, %v2241, 0
  %v2298 = vsel %vm346, %v2243, 0
  %v2300 = vsel %vm346, %v2245, 0
  %2302 = vmatprep.subr.mxu0 0.0
  %2303 = vmatpush1.xpose.msra.mxu0 0.0
  %2304 = vmatprep.subr.mxu0 0.0
  %2305 = vmatpush1.xpose.msra.mxu0 0.0
  %2306 = vmatprep.subr.mxu0 0.0
  %2307 = vmatpush1.xpose.msra.mxu0 0.0
  %2308 = vmatprep.subr.mxu0 0.0
  %2309 = vmatpush1.xpose.msra.mxu0 0.0
  %2310 = vmatprep.subr.mxu0 0.0
  %2311 = vmatpush1.xpose.msra.mxu0 0.0
  %2312 = vmatprep.subr.mxu0 0.0
  %2313 = vmatpush1.xpose.msra.mxu0 0.0
  %2314 = vmatprep.subr.mxu0 0.0
  %2315 = vmatpush1.xpose.msra.mxu0 0.0
  %2316 = vmatprep.subr.mxu0 0.0
  %2317 = vmatpush1.xpose.msra.mxu0 0.0
  %2318 = vmatprep.subr.mxu0 0.0
  %2319 = vmatpush1.xpose.msra.mxu0 0.0
  %2320 = vmatprep.subr.mxu0 0.0
  %2321 = vmatpush1.xpose.msra.mxu0 0.0
  %2322 = vmatprep.subr.mxu0 0.0
  %2323 = vmatpush1.xpose.msra.mxu0 0.0
  %2324 = vmatprep.subr.mxu0 0.0
  %2325 = vmatpush1.xpose.msra.mxu0 0.0
  %2326 = vmatprep.subr.mxu0 0.0
  %2327 = vmatpush1.xpose.msra.mxu0 %v2300
  %2328 = vmatprep.subr.mxu0 0.0
  %2329 = vmatpush1.xpose.msra.mxu0 %v2298
  %2330 = vmatprep.subr.mxu0 0.0
  %2331 = vmatpush1.xpose.msra.mxu0 %v2296
  %2332 = vmatprep.subr.mxu0 0.0
  %2333 = vmatpush1.xpose.msra.mxu0 %v2294
  %2334 = vmatprep.subr.mxu0 0.0
  %2335 = vmatpush2.xpose.msra.mxu0 0.0
  %2336 = vmatprep.subr.mxu0 0.0
  %2337 = vmatpush2.xpose.msra.mxu0 0.0
  %2338 = vmatprep.subr.mxu0 0.0
  %2339 = vmatpush2.xpose.msra.mxu0 0.0
  %2340 = vmatprep.subr.mxu0 0.0
  %2341 = vmatpush2.xpose.msra.mxu0 0.0
  %2342 = vmatprep.subr.mxu0 0.0
  %2343 = vmatpush2.xpose.msra.mxu0 0.0
  %2344 = vmatprep.subr.mxu0 0.0
  %2345 = vmatpush2.xpose.msra.mxu0 0.0
  %2346 = vmatprep.subr.mxu0 0.0
  %2347 = vmatpush2.xpose.msra.mxu0 0.0
  %2348 = vmatprep.subr.mxu0 0.0
  %2349 = vmatpush2.xpose.msra.mxu0 0.0
  %2350 = vmatprep.subr.mxu0 0.0
  %2351 = vmatpush2.xpose.msra.mxu0 0.0
  %2352 = vmatprep.subr.mxu0 0.0
  %2353 = vmatpush2.xpose.msra.mxu0 0.0
  %2354 = vmatprep.subr.mxu0 0.0
  %2355 = vmatpush2.xpose.msra.mxu0 0.0
  %2356 = vmatprep.subr.mxu0 0.0
  %2357 = vmatpush2.xpose.msra.mxu0 0.0
  %2358 = vmatprep.subr.mxu0 0.0
  %2359 = vmatpush2.xpose.msra.mxu0 0.0
  %2360 = vmatprep.subr.mxu0 0.0
  %2361 = vmatpush2.xpose.msra.mxu0 0.0
  %2362 = vmatprep.subr.mxu0 0.0
  %2363 = vmatpush2.xpose.msra.mxu0 0.0
  %2364 = vmatprep.subr.mxu0 0.0
  %2365 = vmatpush2.xpose.msra.mxu0 0.0
  %2366 = vmatprep.mubr.f32.mxu0 0.0
  %2367 = vmatmul.mubr.f32.gmra.mxu0 %v2247
  %v2368 = vpop.f32.mrf.mxu0
  %v2369 = vadd.f32 %v857, %v2368
  %v2370 = vpop.f32.mrf.mxu0
  %2371 = vmatprep.mubr.f32.mxu0 0.0
  %2372 = vmatmul.mubr.f32.gmra.mxu0 %v2250
  %v2373 = vpop.f32.mrf.mxu0
  %v2374 = vadd.f32 %v858, %v2373
  %v2375 = vpop.f32.mrf.mxu0
  %2376 = vmatprep.mubr.f32.mxu0 0.0
  %2377 = vmatmul.mubr.f32.gmra.mxu0 %v2253
  %v2378 = vpop.f32.mrf.mxu0
  %v2379 = vadd.f32 %v859, %v2378
  %v2380 = vpop.f32.mrf.mxu0
  %2381 = vmatprep.mubr.f32.mxu0 0.0
  %2382 = vmatmul.mubr.f32.gmra.mxu0 %v2256
  %v2383 = vpop.f32.mrf.mxu0
  %v2384 = vadd.f32 %v860, %v2383
  %v2385 = vpop.f32.mrf.mxu0
  %2386 = vmatprep.mubr.f32.mxu0 0.0
  %2387 = vmatmul.mubr.f32.gmra.mxu0 %v2259
  %v2388 = vpop.f32.mrf.mxu0
  %v2389 = vadd.f32 %v857, %v2388
  %v2390 = vpop.f32.mrf.mxu0
  %2391 = vmatprep.mubr.f32.mxu0 0.0
  %2392 = vmatmul.mubr.f32.gmra.mxu0 %v2262
  %v2393 = vpop.f32.mrf.mxu0
  %v2394 = vadd.f32 %v858, %v2393
  %v2395 = vpop.f32.mrf.mxu0
  %2396 = vmatprep.mubr.f32.mxu0 0.0
  %2397 = vmatmul.mubr.f32.gmra.mxu0 %v2265
  %v2398 = vpop.f32.mrf.mxu0
  %v2399 = vadd.f32 %v859, %v2398
  %v2400 = vpop.f32.mrf.mxu0
  %2401 = vmatprep.mubr.f32.mxu0 0.0
  %2402 = vmatmul.mubr.f32.gmra.mxu0 %v2268
  %v2403 = vpop.f32.mrf.mxu0
  %v2404 = vadd.f32 %v860, %v2403
  %v2405 = vpop.f32.mrf.mxu0
  %2406 = vmatprep.mubr.f32.mxu0 0.0
  %2407 = vmatmul.mubr.f32.gmra.mxu0 %v2271
  %v2408 = vpop.f32.mrf.mxu0
  %v2409 = vadd.f32 %v857, %v2408
  %v2410 = vpop.f32.mrf.mxu0
  %2411 = vmatprep.mubr.f32.mxu0 0.0
  %2412 = vmatmul.mubr.f32.gmra.mxu0 %v2274
  %v2413 = vpop.f32.mrf.mxu0
  %v2414 = vadd.f32 %v858, %v2413
  %v2415 = vpop.f32.mrf.mxu0
  %2416 = vmatprep.mubr.f32.mxu0 0.0
  %2417 = vmatmul.mubr.f32.gmra.mxu0 %v2277
  %v2418 = vpop.f32.mrf.mxu0
  %v2419 = vadd.f32 %v859, %v2418
  %v2420 = vpop.f32.mrf.mxu0
  %2421 = vmatprep.mubr.f32.mxu0 0.0
  %2422 = vmatmul.mubr.f32.gmra.mxu0 %v2280
  %v2423 = vpop.f32.mrf.mxu0
  %v2424 = vadd.f32 %v860, %v2423
  %v2425 = vpop.f32.mrf.mxu0
  %2426 = vmatprep.mubr.f32.mxu0 0.0
  %2427 = vmatmul.mubr.f32.gmra.mxu0 %v2283
  %v2428 = vpop.f32.mrf.mxu0
  %v2429 = vadd.f32 %v857, %v2428
  %v2430 = vpop.f32.mrf.mxu0
  %2431 = vmatprep.mubr.f32.mxu0 0.0
  %2432 = vmatmul.mubr.f32.gmra.mxu0 %v2286
  %v2433 = vpop.f32.mrf.mxu0
  %v2434 = vadd.f32 %v858, %v2433
  %v2435 = vpop.f32.mrf.mxu0
  %2436 = vmatprep.mubr.f32.mxu0 0.0
  %2437 = vmatmul.mubr.f32.gmra.mxu0 %v2289
  %v2438 = vpop.f32.mrf.mxu0
  %v2439 = vadd.f32 %v859, %v2438
  %v2440 = vpop.f32.mrf.mxu0
  %2441 = vmatprep.mubr.f32.mxu0 0.0
  %2442 = vmatmul.mubr.f32.gmra.mxu0 %v2292
  %v2443 = vpop.f32.mrf.mxu0
  %v2444 = vadd.f32 %v860, %v2443
  %v2445 = vpop.f32.mrf.mxu0
  %2446 = vdwg.mxu0
  %v2447 = vsel %vm346, %v2369, -inf
  %2448 = vmax.xlane.f32.xlu0 %v2447
  %v2449 = vpop.xlane.xlu0 %2448
  %v2450 = vsel %vm346, %v2374, -inf
  %2451 = vmax.xlane.f32.xlu0 %v2450
  %v2452 = vpop.xlane.xlu0 %2451
  %v2453 = vsel %vm346, %v2379, -inf
  %2454 = vmax.xlane.f32.xlu0 %v2453
  %v2455 = vpop.xlane.xlu0 %2454
  %v2456 = vsel %vm346, %v2384, -inf
  %2457 = vmax.xlane.f32.xlu0 %v2456
  %v2458 = vpop.xlane.xlu0 %2457
  %v2459 = vsel %vm346, %v2389, -inf
  %2460 = vmax.xlane.f32.xlu0 %v2459
  %v2461 = vpop.xlane.xlu0 %2460
  %v2462 = vsel %vm346, %v2394, -inf
  %2463 = vmax.xlane.f32.xlu0 %v2462
  %v2464 = vpop.xlane.xlu0 %2463
  %v2465 = vsel %vm346, %v2399, -inf
  %2466 = vmax.xlane.f32.xlu0 %v2465
  %v2467 = vpop.xlane.xlu0 %2466
  %v2468 = vsel %vm346, %v2404, -inf
  %2469 = vmax.xlane.f32.xlu0 %v2468
  %v2470 = vpop.xlane.xlu0 %2469
  %v2471 = vsel %vm346, %v2409, -inf
  %2472 = vmax.xlane.f32.xlu0 %v2471
  %v2473 = vpop.xlane.xlu0 %2472
  %v2474 = vsel %vm346, %v2414, -inf
  %2475 = vmax.xlane.f32.xlu0 %v2474
  %v2476 = vpop.xlane.xlu0 %2475
  %v2477 = vsel %vm346, %v2419, -inf
  %2478 = vmax.xlane.f32.xlu0 %v2477
  %v2479 = vpop.xlane.xlu0 %2478
  %v2480 = vsel %vm346, %v2424, -inf
  %2481 = vmax.xlane.f32.xlu0 %v2480
  %v2482 = vpop.xlane.xlu0 %2481
  %v2483 = vsel %vm346, %v2429, -inf
  %2484 = vmax.xlane.f32.xlu0 %v2483
  %v2485 = vpop.xlane.xlu0 %2484
  %v2486 = vsel %vm346, %v2434, -inf
  %2487 = vmax.xlane.f32.xlu0 %v2486
  %v2488 = vpop.xlane.xlu0 %2487
  %v2489 = vsel %vm346, %v2439, -inf
  %2490 = vmax.xlane.f32.xlu0 %v2489
  %v2491 = vpop.xlane.xlu0 %2490
  %v2492 = vsel %vm346, %v2444, -inf
  %2493 = vmax.xlane.f32.xlu0 %v2492
  %v2494 = vpop.xlane.xlu0 %2493
  %v2495 = vsub.f32 %v2369, %v2449
  %v2496 = vsub.f32 %v2374, %v2452
  %v2497 = vsub.f32 %v2379, %v2455
  %v2498 = vsub.f32 %v2384, %v2458
  %v2499 = vsub.f32 %v2389, %v2461
  %v2500 = vsub.f32 %v2394, %v2464
  %v2501 = vsub.f32 %v2399, %v2467
  %v2502 = vsub.f32 %v2404, %v2470
  %v2503 = vsub.f32 %v2409, %v2473
  %v2504 = vsub.f32 %v2414, %v2476
  %v2505 = vsub.f32 %v2419, %v2479
  %v2506 = vsub.f32 %v2424, %v2482
  %v2507 = vsub.f32 %v2429, %v2485
  %v2508 = vsub.f32 %v2434, %v2488
  %v2509 = vsub.f32 %v2439, %v2491
  %v2510 = vsub.f32 %v2444, %v2494
  %v2511 = vmul.f32 %v2495, 1.442695
  %v2512 = vpow.pop %v2511
  %v2513 = vmul.f32 %v2496, 1.442695
  %v2514 = vpow.pop %v2513
  %v2515 = vmul.f32 %v2497, 1.442695
  %v2516 = vpow.pop %v2515
  %v2517 = vmul.f32 %v2498, 1.442695
  %v2518 = vpow.pop %v2517
  %v2519 = vmul.f32 %v2499, 1.442695
  %v2520 = vpow.pop %v2519
  %v2521 = vmul.f32 %v2500, 1.442695
  %v2522 = vpow.pop %v2521
  %v2523 = vmul.f32 %v2501, 1.442695
  %v2524 = vpow.pop %v2523
  %v2525 = vmul.f32 %v2502, 1.442695
  %v2526 = vpow.pop %v2525
  %v2527 = vmul.f32 %v2503, 1.442695
  %v2528 = vpow.pop %v2527
  %v2529 = vmul.f32 %v2504, 1.442695
  %v2530 = vpow.pop %v2529
  %v2531 = vmul.f32 %v2505, 1.442695
  %v2532 = vpow.pop %v2531
  %v2533 = vmul.f32 %v2506, 1.442695
  %v2534 = vpow.pop %v2533
  %v2535 = vmul.f32 %v2507, 1.442695
  %v2536 = vpow.pop %v2535
  %v2537 = vmul.f32 %v2508, 1.442695
  %v2538 = vpow.pop %v2537
  %v2539 = vmul.f32 %v2509, 1.442695
  %v2540 = vpow.pop %v2539
  %v2541 = vmul.f32 %v2510, 1.442695
  %v2542 = vpow.pop %v2541
  %v2543 = vsel %vm346, %v2512, 0.0
  %2544 = vadd.xlane.f32.xlu0 %v2543
  %v2545 = vpop.xlane.xlu0 %2544
  %v2546 = vsel %vm346, %v2514, 0.0
  %2547 = vadd.xlane.f32.xlu0 %v2546
  %v2548 = vpop.xlane.xlu0 %2547
  %v2549 = vsel %vm346, %v2516, 0.0
  %2550 = vadd.xlane.f32.xlu0 %v2549
  %v2551 = vpop.xlane.xlu0 %2550
  %v2552 = vsel %vm346, %v2518, 0.0
  %2553 = vadd.xlane.f32.xlu0 %v2552
  %v2554 = vpop.xlane.xlu0 %2553
  %v2555 = vsel %vm346, %v2520, 0.0
  %2556 = vadd.xlane.f32.xlu0 %v2555
  %v2557 = vpop.xlane.xlu0 %2556
  %v2558 = vsel %vm346, %v2522, 0.0
  %2559 = vadd.xlane.f32.xlu0 %v2558
  %v2560 = vpop.xlane.xlu0 %2559
  %v2561 = vsel %vm346, %v2524, 0.0
  %2562 = vadd.xlane.f32.xlu0 %v2561
  %v2563 = vpop.xlane.xlu0 %2562
  %v2564 = vsel %vm346, %v2526, 0.0
  %2565 = vadd.xlane.f32.xlu0 %v2564
  %v2566 = vpop.xlane.xlu0 %2565
  %v2567 = vsel %vm346, %v2528, 0.0
  %2568 = vadd.xlane.f32.xlu0 %v2567
  %v2569 = vpop.xlane.xlu0 %2568
  %v2570 = vsel %vm346, %v2530, 0.0
  %2571 = vadd.xlane.f32.xlu0 %v2570
  %v2572 = vpop.xlane.xlu0 %2571
  %v2573 = vsel %vm346, %v2532, 0.0
  %2574 = vadd.xlane.f32.xlu0 %v2573
  %v2575 = vpop.xlane.xlu0 %2574
  %v2576 = vsel %vm346, %v2534, 0.0
  %2577 = vadd.xlane.f32.xlu0 %v2576
  %v2578 = vpop.xlane.xlu0 %2577
  %v2579 = vsel %vm346, %v2536, 0.0
  %2580 = vadd.xlane.f32.xlu0 %v2579
  %v2581 = vpop.xlane.xlu0 %2580
  %v2582 = vsel %vm346, %v2538, 0.0
  %2583 = vadd.xlane.f32.xlu0 %v2582
  %v2584 = vpop.xlane.xlu0 %2583
  %v2585 = vsel %vm346, %v2540, 0.0
  %2586 = vadd.xlane.f32.xlu0 %v2585
  %v2587 = vpop.xlane.xlu0 %2586
  %v2588 = vsel %vm346, %v2542, 0.0
  %2589 = vadd.xlane.f32.xlu0 %v2588
  %v2590 = vpop.xlane.xlu0 %2589
  %v2591 = vrcp.pop %v2545
  %v2592 = vrcp.pop %v2548
  %v2593 = vrcp.pop %v2551
  %v2594 = vrcp.pop %v2554
  %v2595 = vrcp.pop %v2557
  %v2596 = vrcp.pop %v2560
  %v2597 = vrcp.pop %v2563
  %v2598 = vrcp.pop %v2566
  %v2599 = vrcp.pop %v2569
  %v2600 = vrcp.pop %v2572
  %v2601 = vrcp.pop %v2575
  %v2602 = vrcp.pop %v2578
  %v2603 = vrcp.pop %v2581
  %v2604 = vrcp.pop %v2584
  %v2605 = vrcp.pop %v2587
  %v2606 = vrcp.pop %v2590
  %v2607 = vmul.f32 %v2512, %v2591
  %v2608 = vmul.f32 %v2514, %v2592
  %v2609 = vmul.f32 %v2516, %v2593
  %v2610 = vmul.f32 %v2518, %v2594
  %v2611 = vmul.f32 %v2520, %v2595
  %v2612 = vmul.f32 %v2522, %v2596
  %v2613 = vmul.f32 %v2524, %v2597
  %v2614 = vmul.f32 %v2526, %v2598
  %v2615 = vmul.f32 %v2528, %v2599
  %v2616 = vmul.f32 %v2530, %v2600
  %v2617 = vmul.f32 %v2532, %v2601
  %v2618 = vmul.f32 %v2534, %v2602
  %v2619 = vmul.f32 %v2536, %v2603
  %v2620 = vmul.f32 %v2538, %v2604
  %v2621 = vmul.f32 %v2540, %v2605
  %v2622 = vmul.f32 %v2542, %v2606
  %2623 = vrot.lane.b32.xlu0 %v2200, 64
  %v2624 = vpop.permute.xlu0 %2623
  %2625 = vrot.lane.b32.xlu0 %v2205, 64
  %v2626 = vpop.permute.xlu0 %2625
  %2627 = vrot.lane.b32.xlu0 %v2210, 64
  %v2628 = vpop.permute.xlu0 %2627
  %2629 = vrot.lane.b32.xlu0 %v2215, 64
  %v2630 = vpop.permute.xlu0 %2629
  %v2636 = vsel %vm346, %v2607, 0
  %v2639 = vsel %vm346, %v2608, 0
  %v2642 = vsel %vm346, %v2609, 0
  %v2645 = vsel %vm346, %v2610, 0
  %v2648 = vsel %vm346, %v2611, 0
  %v2651 = vsel %vm346, %v2612, 0
  %v2654 = vsel %vm346, %v2613, 0
  %v2657 = vsel %vm346, %v2614, 0
  %v2660 = vsel %vm346, %v2615, 0
  %v2663 = vsel %vm346, %v2616, 0
  %v2666 = vsel %vm346, %v2617, 0
  %v2669 = vsel %vm346, %v2618, 0
  %v2672 = vsel %vm346, %v2619, 0
  %v2675 = vsel %vm346, %v2620, 0
  %v2678 = vsel %vm346, %v2621, 0
  %v2681 = vsel %vm346, %v2622, 0
  %2683 = vmatprep.subr.mxu0 0.0
  %2684 = vmatpush1.msra.mxu0 0.0
  %2685 = vmatprep.subr.mxu0 0.0
  %2686 = vmatpush1.msra.mxu0 0.0
  %2687 = vmatprep.subr.mxu0 0.0
  %2688 = vmatpush1.msra.mxu0 0.0
  %2689 = vmatprep.subr.mxu0 0.0
  %2690 = vmatpush1.msra.mxu0 0.0
  %2691 = vmatprep.subr.mxu0 0.0
  %2692 = vmatpush1.msra.mxu0 0.0
  %2693 = vmatprep.subr.mxu0 0.0
  %2694 = vmatpush1.msra.mxu0 0.0
  %2695 = vmatprep.subr.mxu0 0.0
  %2696 = vmatpush1.msra.mxu0 0.0
  %2697 = vmatprep.subr.mxu0 0.0
  %2698 = vmatpush1.msra.mxu0 0.0
  %2699 = vmatprep.subr.mxu0 0.0
  %2700 = vmatpush1.msra.mxu0 0.0
  %2701 = vmatprep.subr.mxu0 0.0
  %2702 = vmatpush1.msra.mxu0 0.0
  %2703 = vmatprep.subr.mxu0 0.0
  %2704 = vmatpush1.msra.mxu0 0.0
  %2705 = vmatprep.subr.mxu0 0.0
  %2706 = vmatpush1.msra.mxu0 0.0
  %2707 = vmatprep.subr.mxu0 0.0
  %2708 = vmatpush1.msra.mxu0 %v2630
  %2709 = vmatprep.subr.mxu0 0.0
  %2710 = vmatpush1.msra.mxu0 %v2628
  %2711 = vmatprep.subr.mxu0 0.0
  %2712 = vmatpush1.msra.mxu0 %v2626
  %2713 = vmatprep.subr.mxu0 0.0
  %2714 = vmatpush1.msra.mxu0 %v2624
  %2715 = vmatprep.subr.mxu0 0.0
  %2716 = vmatpush2.msra.mxu0 0.0
  %2717 = vmatprep.subr.mxu0 0.0
  %2718 = vmatpush2.msra.mxu0 0.0
  %2719 = vmatprep.subr.mxu0 0.0
  %2720 = vmatpush2.msra.mxu0 0.0
  %2721 = vmatprep.subr.mxu0 0.0
  %2722 = vmatpush2.msra.mxu0 0.0
  %2723 = vmatprep.subr.mxu0 0.0
  %2724 = vmatpush2.msra.mxu0 0.0
  %2725 = vmatprep.subr.mxu0 0.0
  %2726 = vmatpush2.msra.mxu0 0.0
  %2727 = vmatprep.subr.mxu0 0.0
  %2728 = vmatpush2.msra.mxu0 0.0
  %2729 = vmatprep.subr.mxu0 0.0
  %2730 = vmatpush2.msra.mxu0 0.0
  %2731 = vmatprep.subr.mxu0 0.0
  %2732 = vmatpush2.msra.mxu0 0.0
  %2733 = vmatprep.subr.mxu0 0.0
  %2734 = vmatpush2.msra.mxu0 0.0
  %2735 = vmatprep.subr.mxu0 0.0
  %2736 = vmatpush2.msra.mxu0 0.0
  %2737 = vmatprep.subr.mxu0 0.0
  %2738 = vmatpush2.msra.mxu0 0.0
  %2739 = vmatprep.subr.mxu0 0.0
  %2740 = vmatpush2.msra.mxu0 0.0
  %2741 = vmatprep.subr.mxu0 0.0
  %2742 = vmatpush2.msra.mxu0 0.0
  %2743 = vmatprep.subr.mxu0 0.0
  %2744 = vmatpush2.msra.mxu0 0.0
  %2745 = vmatprep.subr.mxu0 0.0
  %2746 = vmatpush2.msra.mxu0 0.0
  %2747 = vmatprep.mubr.f32.mxu0 0.0
  %2748 = vmatmul.mubr.f32.gmra.mxu0 %v2636
  %v2749 = vpop.f32.mrf.mxu0
  %v2750 = vadd.f32 0.0, %v2749
  %v2751 = vpop.f32.mrf.mxu0
  %2752 = vmatprep.mubr.f32.mxu0 0.0
  %2753 = vmatmul.mubr.f32.gmra.mxu0 %v2639
  %v2754 = vpop.f32.mrf.mxu0
  %v2755 = vadd.f32 0.0, %v2754
  %v2756 = vpop.f32.mrf.mxu0
  %2757 = vmatprep.mubr.f32.mxu0 0.0
  %2758 = vmatmul.mubr.f32.gmra.mxu0 %v2642
  %v2759 = vpop.f32.mrf.mxu0
  %v2760 = vadd.f32 0.0, %v2759
  %v2761 = vpop.f32.mrf.mxu0
  %2762 = vmatprep.mubr.f32.mxu0 0.0
  %2763 = vmatmul.mubr.f32.gmra.mxu0 %v2645
  %v2764 = vpop.f32.mrf.mxu0
  %v2765 = vadd.f32 0.0, %v2764
  %v2766 = vpop.f32.mrf.mxu0
  %2767 = vmatprep.mubr.f32.mxu0 0.0
  %2768 = vmatmul.mubr.f32.gmra.mxu0 %v2648
  %v2769 = vpop.f32.mrf.mxu0
  %v2770 = vadd.f32 0.0, %v2769
  %v2771 = vpop.f32.mrf.mxu0
  %2772 = vmatprep.mubr.f32.mxu0 0.0
  %2773 = vmatmul.mubr.f32.gmra.mxu0 %v2651
  %v2774 = vpop.f32.mrf.mxu0
  %v2775 = vadd.f32 0.0, %v2774
  %v2776 = vpop.f32.mrf.mxu0
  %2777 = vmatprep.mubr.f32.mxu0 0.0
  %2778 = vmatmul.mubr.f32.gmra.mxu0 %v2654
  %v2779 = vpop.f32.mrf.mxu0
  %v2780 = vadd.f32 0.0, %v2779
  %v2781 = vpop.f32.mrf.mxu0
  %2782 = vmatprep.mubr.f32.mxu0 0.0
  %2783 = vmatmul.mubr.f32.gmra.mxu0 %v2657
  %v2784 = vpop.f32.mrf.mxu0
  %v2785 = vadd.f32 0.0, %v2784
  %v2786 = vpop.f32.mrf.mxu0
  %2787 = vmatprep.mubr.f32.mxu0 0.0
  %2788 = vmatmul.mubr.f32.gmra.mxu0 %v2660
  %v2789 = vpop.f32.mrf.mxu0
  %v2790 = vadd.f32 0.0, %v2789
  %v2791 = vpop.f32.mrf.mxu0
  %2792 = vmatprep.mubr.f32.mxu0 0.0
  %2793 = vmatmul.mubr.f32.gmra.mxu0 %v2663
  %v2794 = vpop.f32.mrf.mxu0
  %v2795 = vadd.f32 0.0, %v2794
  %v2796 = vpop.f32.mrf.mxu0
  %2797 = vmatprep.mubr.f32.mxu0 0.0
  %2798 = vmatmul.mubr.f32.gmra.mxu0 %v2666
  %v2799 = vpop.f32.mrf.mxu0
  %v2800 = vadd.f32 0.0, %v2799
  %v2801 = vpop.f32.mrf.mxu0
  %2802 = vmatprep.mubr.f32.mxu0 0.0
  %2803 = vmatmul.mubr.f32.gmra.mxu0 %v2669
  %v2804 = vpop.f32.mrf.mxu0
  %v2805 = vadd.f32 0.0, %v2804
  %v2806 = vpop.f32.mrf.mxu0
  %2807 = vmatprep.mubr.f32.mxu0 0.0
  %2808 = vmatmul.mubr.f32.gmra.mxu0 %v2672
  %v2809 = vpop.f32.mrf.mxu0
  %v2810 = vadd.f32 0.0, %v2809
  %v2811 = vpop.f32.mrf.mxu0
  %2812 = vmatprep.mubr.f32.mxu0 0.0
  %2813 = vmatmul.mubr.f32.gmra.mxu0 %v2675
  %v2814 = vpop.f32.mrf.mxu0
  %v2815 = vadd.f32 0.0, %v2814
  %v2816 = vpop.f32.mrf.mxu0
  %2817 = vmatprep.mubr.f32.mxu0 0.0
  %2818 = vmatmul.mubr.f32.gmra.mxu0 %v2678
  %v2819 = vpop.f32.mrf.mxu0
  %v2820 = vadd.f32 0.0, %v2819
  %v2821 = vpop.f32.mrf.mxu0
  %2822 = vmatprep.mubr.f32.mxu0 0.0
  %2823 = vmatmul.mubr.f32.gmra.mxu0 %v2681
  %v2824 = vpop.f32.mrf.mxu0
  %v2825 = vadd.f32 0.0, %v2824
  %v2826 = vpop.f32.mrf.mxu0
  %2827 = vdwg.mxu0
  %v2828 = vmul.f32 %v2750, %v825
  %v2829 = vmul.f32 %v2755, %v826
  %v2830 = vmul.f32 %v2760, %v827
  %v2831 = vmul.f32 %v2765, %v828
  %v2832 = vmul.f32 %v2770, %v829
  %v2833 = vmul.f32 %v2775, %v830
  %v2834 = vmul.f32 %v2780, %v831
  %v2835 = vmul.f32 %v2785, %v832
  %v2836 = vmul.f32 %v2790, %v833
  %v2837 = vmul.f32 %v2795, %v834
  %v2838 = vmul.f32 %v2800, %v835
  %v2839 = vmul.f32 %v2805, %v836
  %v2840 = vmul.f32 %v2810, %v837
  %v2841 = vmul.f32 %v2815, %v838
  %v2842 = vmul.f32 %v2820, %v839
  %v2843 = vmul.f32 %v2825, %v840
  %v2844 = vadd.f32 %v2828, %v2832
  %v2845 = vadd.f32 %v2829, %v2833
  %v2846 = vadd.f32 %v2830, %v2834
  %v2847 = vadd.f32 %v2831, %v2835
  %v2848 = vadd.f32 %v2844, %v2836
  %v2849 = vadd.f32 %v2845, %v2837
  %v2850 = vadd.f32 %v2846, %v2838
  %v2851 = vadd.f32 %v2847, %v2839
  %v2852 = vadd.f32 %v2848, %v2840
  %v2853 = vadd.f32 %v2849, %v2841
  %v2854 = vadd.f32 %v2850, %v2842
  %v2855 = vadd.f32 %v2851, %v2843
  %v2856 = vlaneseq
  %v2857 = vshrl.u32 %v2856, 7
  %v2858 = vsub.s32 1, %v2857
  %v2859 = vrot.slane %v2106, %v2858
  %v2861 = vsel %vm346, %v2852, 0
  %v2864 = vsel %vm346, %v2853, 0
  %v2867 = vsel %vm346, %v2854, 0
  %v2870 = vsel %vm346, %v2855, 0
  %2872 = vmatprep.subr.mxu0 0.0
  %2873 = vmatpush1.msra.mxu0 0.0
  %2874 = vmatprep.subr.mxu0 0.0
  %2875 = vmatpush1.msra.mxu0 0.0
  %2876 = vmatprep.subr.mxu0 0.0
  %2877 = vmatpush1.msra.mxu0 0.0
  %2878 = vmatprep.subr.mxu0 0.0
  %2879 = vmatpush1.msra.mxu0 0.0
  %2880 = vmatprep.subr.mxu0 0.0
  %2881 = vmatpush1.msra.mxu0 0.0
  %2882 = vmatprep.subr.mxu0 0.0
  %2883 = vmatpush1.msra.mxu0 0.0
  %2884 = vmatprep.subr.mxu0 0.0
  %2885 = vmatpush1.msra.mxu0 0.0
  %2886 = vmatprep.subr.mxu0 0.0
  %2887 = vmatpush1.msra.mxu0 0.0
  %2888 = vmatprep.subr.mxu0 0.0
  %2889 = vmatpush1.msra.mxu0 0.0
  %2890 = vmatprep.subr.mxu0 0.0
  %2891 = vmatpush1.msra.mxu0 0.0
  %2892 = vmatprep.subr.mxu0 0.0
  %2893 = vmatpush1.msra.mxu0 0.0
  %2894 = vmatprep.subr.mxu0 0.0
  %2895 = vmatpush1.msra.mxu0 0.0
  %2896 = vmatprep.subr.mxu0 0.0
  %2897 = vmatpush1.msra.mxu0 %v2116
  %2898 = vmatprep.subr.mxu0 0.0
  %2899 = vmatpush1.msra.mxu0 %v2115
  %2900 = vmatprep.subr.mxu0 0.0
  %2901 = vmatpush1.msra.mxu0 %v2114
  %2902 = vmatprep.subr.mxu0 0.0
  %2903 = vmatpush1.msra.mxu0 %v2113
  %2904 = vmatprep.subr.mxu0 0.0
  %2905 = vmatpush2.msra.mxu0 0.0
  %2906 = vmatprep.subr.mxu0 0.0
  %2907 = vmatpush2.msra.mxu0 0.0
  %2908 = vmatprep.subr.mxu0 0.0
  %2909 = vmatpush2.msra.mxu0 0.0
  %2910 = vmatprep.subr.mxu0 0.0
  %2911 = vmatpush2.msra.mxu0 0.0
  %2912 = vmatprep.subr.mxu0 0.0
  %2913 = vmatpush2.msra.mxu0 0.0
  %2914 = vmatprep.subr.mxu0 0.0
  %2915 = vmatpush2.msra.mxu0 0.0
  %2916 = vmatprep.subr.mxu0 0.0
  %2917 = vmatpush2.msra.mxu0 0.0
  %2918 = vmatprep.subr.mxu0 0.0
  %2919 = vmatpush2.msra.mxu0 0.0
  %2920 = vmatprep.subr.mxu0 0.0
  %2921 = vmatpush2.msra.mxu0 0.0
  %2922 = vmatprep.subr.mxu0 0.0
  %2923 = vmatpush2.msra.mxu0 0.0
  %2924 = vmatprep.subr.mxu0 0.0
  %2925 = vmatpush2.msra.mxu0 0.0
  %2926 = vmatprep.subr.mxu0 0.0
  %2927 = vmatpush2.msra.mxu0 0.0
  %2928 = vmatprep.subr.mxu0 0.0
  %2929 = vmatpush2.msra.mxu0 0.0
  %2930 = vmatprep.subr.mxu0 0.0
  %2931 = vmatpush2.msra.mxu0 0.0
  %2932 = vmatprep.subr.mxu0 0.0
  %2933 = vmatpush2.msra.mxu0 0.0
  %2934 = vmatprep.subr.mxu0 0.0
  %2935 = vmatpush2.msra.mxu0 0.0
  %2936 = vmatprep.mubr.f32.mxu0 0.0
  %2937 = vmatmul.mubr.f32.gmra.mxu0 %v2861
  %v2938 = vpop.f32.mrf.mxu0
  %v2939 = vadd.f32 %v2859, %v2938
  %v2940 = vpop.f32.mrf.mxu0
  %2941 = vmatprep.mubr.f32.mxu0 0.0
  %2942 = vmatmul.mubr.f32.gmra.mxu0 %v2864
  %v2943 = vpop.f32.mrf.mxu0
  %v2944 = vadd.f32 %v2859, %v2943
  %v2945 = vpop.f32.mrf.mxu0
  %2946 = vmatprep.mubr.f32.mxu0 0.0
  %2947 = vmatmul.mubr.f32.gmra.mxu0 %v2867
  %v2948 = vpop.f32.mrf.mxu0
  %v2949 = vadd.f32 %v2859, %v2948
  %v2950 = vpop.f32.mrf.mxu0
  %2951 = vmatprep.mubr.f32.mxu0 0.0
  %2952 = vmatmul.mubr.f32.gmra.mxu0 %v2870
  %v2953 = vpop.f32.mrf.mxu0
  %v2954 = vadd.f32 %v2859, %v2953
  %v2955 = vpop.f32.mrf.mxu0
  %2956 = vdwg.mxu0
  %v2957 = vadd.f32 %v2101, %v2939
  %v2958 = vadd.f32 %v2102, %v2944
  %v2959 = vadd.f32 %v2103, %v2949
  %v2960 = vadd.f32 %v2104, %v2954
  %v2961 = vsel %vm346, %v2957, 0.0
  %2962 = vadd.xlane.f32.xlu0 %v2961
  %v2963 = vpop.xlane.xlu0 %2962
  %v2964 = vsel %vm346, %v2958, 0.0
  %2965 = vadd.xlane.f32.xlu0 %v2964
  %v2966 = vpop.xlane.xlu0 %2965
  %v2967 = vsel %vm346, %v2959, 0.0
  %2968 = vadd.xlane.f32.xlu0 %v2967
  %v2969 = vpop.xlane.xlu0 %2968
  %v2970 = vsel %vm346, %v2960, 0.0
  %2971 = vadd.xlane.f32.xlu0 %v2970
  %v2972 = vpop.xlane.xlu0 %2971
  %v2973 = vmul.f32 %v2963, %v359
  %v2974 = vmul.f32 %v2966, %v359
  %v2975 = vmul.f32 %v2969, %v359
  %v2976 = vmul.f32 %v2972, %v359
  %v2977 = vsub.f32 %v2957, %v2973
  %v2978 = vsub.f32 %v2958, %v2974
  %v2979 = vsub.f32 %v2959, %v2975
  %v2980 = vsub.f32 %v2960, %v2976
  %v2981 = vmul.f32 %v2977, %v2977
  %v2982 = vmul.f32 %v2978, %v2978
  %v2983 = vmul.f32 %v2979, %v2979
  %v2984 = vmul.f32 %v2980, %v2980
  %v2985 = vsel %vm346, %v2981, 0.0
  %2986 = vadd.xlane.f32.xlu0 %v2985
  %v2987 = vpop.xlane.xlu0 %2986
  %v2988 = vsel %vm346, %v2982, 0.0
  %2989 = vadd.xlane.f32.xlu0 %v2988
  %v2990 = vpop.xlane.xlu0 %2989
  %v2991 = vsel %vm346, %v2983, 0.0
  %2992 = vadd.xlane.f32.xlu0 %v2991
  %v2993 = vpop.xlane.xlu0 %2992
  %v2994 = vsel %vm346, %v2984, 0.0
  %2995 = vadd.xlane.f32.xlu0 %v2994
  %v2996 = vpop.xlane.xlu0 %2995
  %v2997 = vmul.f32 %v2987, %v359
  %v2998 = vmul.f32 %v2990, %v359
  %v2999 = vmul.f32 %v2993, %v359
  %v3000 = vmul.f32 %v2996, %v359
  %v3001 = vadd.f32 %v2997, 1e-12
  %v3002 = vadd.f32 %v2998, 1e-12
  %v3003 = vadd.f32 %v2999, 1e-12
  %v3004 = vadd.f32 %v3000, 1e-12
  %v3005 = vrsqrt.pop %v3001
  %v3006 = vrsqrt.pop %v3002
  %v3007 = vrsqrt.pop %v3003
  %v3008 = vrsqrt.pop %v3004
  %v3009 = vmul.f32 %v2977, %v3005
  %v3010 = vmul.f32 %v2978, %v3006
  %v3011 = vmul.f32 %v2979, %v3007
  %v3012 = vmul.f32 %v2980, %v3008
  %v3013 = vlaneseq
  %v3014 = vshrl.u32 %v3013, 7
  %v3015 = vsub.s32 2, %v3014
  %v3016 = vrot.slane %v2106, %v3015
  %v3017 = vmul.f32 %v3009, %v3016
  %v3018 = vmul.f32 %v3010, %v3016
  %v3019 = vmul.f32 %v3011, %v3016
  %v3020 = vmul.f32 %v3012, %v3016
  %v3021 = vlaneseq
  %v3022 = vshrl.u32 %v3021, 7
  %v3023 = vsub.s32 3, %v3022
  %v3024 = vrot.slane %v2106, %v3023
  %v3025 = vadd.f32 %v3017, %v3024
  %v3026 = vadd.f32 %v3018, %v3024
  %v3027 = vadd.f32 %v3019, %v3024
  %v3028 = vadd.f32 %v3020, %v3024
  %s3029 = scalar_lea.vmem %s7, 32
  %v3030 = vld [vmem:[%s3029] sm:$0xff]
  %v3031 = vld [vmem:[%s3029 + $0x8] sm:$0xff]
  %v3032 = vld [vmem:[%s3029 + $0x10] sm:$0xff]
  %v3033 = vld [vmem:[%s3029 + $0x18] sm:$0xff]
  %v3034 = vlaneseq
  %v3035 = vshrl.u32 %v3034, 7
  %v3036 = vsub.s32 4, %v3035
  %v3037 = vrot.slane %v2106, %v3036
  %v3039 = vsel %vm346, %v3025, 0
  %v3042 = vsel %vm346, %v3026, 0
  %v3045 = vsel %vm346, %v3027, 0
  %v3048 = vsel %vm346, %v3028, 0
  %3050 = vmatprep.subr.mxu0 0.0
  %3051 = vmatpush1.msra.mxu0 0.0
  %3052 = vmatprep.subr.mxu0 0.0
  %3053 = vmatpush1.msra.mxu0 0.0
  %3054 = vmatprep.subr.mxu0 0.0
  %3055 = vmatpush1.msra.mxu0 0.0
  %3056 = vmatprep.subr.mxu0 0.0
  %3057 = vmatpush1.msra.mxu0 0.0
  %3058 = vmatprep.subr.mxu0 0.0
  %3059 = vmatpush1.msra.mxu0 0.0
  %3060 = vmatprep.subr.mxu0 0.0
  %3061 = vmatpush1.msra.mxu0 0.0
  %3062 = vmatprep.subr.mxu0 0.0
  %3063 = vmatpush1.msra.mxu0 0.0
  %3064 = vmatprep.subr.mxu0 0.0
  %3065 = vmatpush1.msra.mxu0 0.0
  %3066 = vmatprep.subr.mxu0 0.0
  %3067 = vmatpush1.msra.mxu0 0.0
  %3068 = vmatprep.subr.mxu0 0.0
  %3069 = vmatpush1.msra.mxu0 0.0
  %3070 = vmatprep.subr.mxu0 0.0
  %3071 = vmatpush1.msra.mxu0 0.0
  %3072 = vmatprep.subr.mxu0 0.0
  %3073 = vmatpush1.msra.mxu0 0.0
  %3074 = vmatprep.subr.mxu0 0.0
  %3075 = vmatpush1.msra.mxu0 %v3033
  %3076 = vmatprep.subr.mxu0 0.0
  %3077 = vmatpush1.msra.mxu0 %v3032
  %3078 = vmatprep.subr.mxu0 0.0
  %3079 = vmatpush1.msra.mxu0 %v3031
  %3080 = vmatprep.subr.mxu0 0.0
  %3081 = vmatpush1.msra.mxu0 %v3030
  %3082 = vmatprep.subr.mxu0 0.0
  %3083 = vmatpush2.msra.mxu0 0.0
  %3084 = vmatprep.subr.mxu0 0.0
  %3085 = vmatpush2.msra.mxu0 0.0
  %3086 = vmatprep.subr.mxu0 0.0
  %3087 = vmatpush2.msra.mxu0 0.0
  %3088 = vmatprep.subr.mxu0 0.0
  %3089 = vmatpush2.msra.mxu0 0.0
  %3090 = vmatprep.subr.mxu0 0.0
  %3091 = vmatpush2.msra.mxu0 0.0
  %3092 = vmatprep.subr.mxu0 0.0
  %3093 = vmatpush2.msra.mxu0 0.0
  %3094 = vmatprep.subr.mxu0 0.0
  %3095 = vmatpush2.msra.mxu0 0.0
  %3096 = vmatprep.subr.mxu0 0.0
  %3097 = vmatpush2.msra.mxu0 0.0
  %3098 = vmatprep.subr.mxu0 0.0
  %3099 = vmatpush2.msra.mxu0 0.0
  %3100 = vmatprep.subr.mxu0 0.0
  %3101 = vmatpush2.msra.mxu0 0.0
  %3102 = vmatprep.subr.mxu0 0.0
  %3103 = vmatpush2.msra.mxu0 0.0
  %3104 = vmatprep.subr.mxu0 0.0
  %3105 = vmatpush2.msra.mxu0 0.0
  %3106 = vmatprep.subr.mxu0 0.0
  %3107 = vmatpush2.msra.mxu0 0.0
  %3108 = vmatprep.subr.mxu0 0.0
  %3109 = vmatpush2.msra.mxu0 0.0
  %3110 = vmatprep.subr.mxu0 0.0
  %3111 = vmatpush2.msra.mxu0 0.0
  %3112 = vmatprep.subr.mxu0 0.0
  %3113 = vmatpush2.msra.mxu0 0.0
  %3114 = vmatprep.mubr.f32.mxu0 0.0
  %3115 = vmatmul.mubr.f32.gmra.mxu0 %v3039
  %v3116 = vpop.f32.mrf.mxu0
  %v3117 = vadd.f32 %v3037, %v3116
  %v3118 = vpop.f32.mrf.mxu0
  %3119 = vmatprep.mubr.f32.mxu0 0.0
  %3120 = vmatmul.mubr.f32.gmra.mxu0 %v3042
  %v3121 = vpop.f32.mrf.mxu0
  %v3122 = vadd.f32 %v3037, %v3121
  %v3123 = vpop.f32.mrf.mxu0
  %3124 = vmatprep.mubr.f32.mxu0 0.0
  %3125 = vmatmul.mubr.f32.gmra.mxu0 %v3045
  %v3126 = vpop.f32.mrf.mxu0
  %v3127 = vadd.f32 %v3037, %v3126
  %v3128 = vpop.f32.mrf.mxu0
  %3129 = vmatprep.mubr.f32.mxu0 0.0
  %3130 = vmatmul.mubr.f32.gmra.mxu0 %v3048
  %v3131 = vpop.f32.mrf.mxu0
  %v3132 = vadd.f32 %v3037, %v3131
  %v3133 = vpop.f32.mrf.mxu0
  %3134 = vdwg.mxu0
  %v3135 = vmul.f32 %v3117, %v3117
  %v3136 = vmul.f32 %v3122, %v3122
  %v3137 = vmul.f32 %v3127, %v3127
  %v3138 = vmul.f32 %v3132, %v3132
  %v3139 = vmul.f32 %v3117, %v3135
  %v3140 = vmul.f32 %v3122, %v3136
  %v3141 = vmul.f32 %v3127, %v3137
  %v3142 = vmul.f32 %v3132, %v3138
  %v3143 = vmul.f32 %v3139, 0.044715
  %v3144 = vmul.f32 %v3140, 0.044715
  %v3145 = vmul.f32 %v3141, 0.044715
  %v3146 = vmul.f32 %v3142, 0.044715
  %v3147 = vadd.f32 %v3117, %v3143
  %v3148 = vadd.f32 %v3122, %v3144
  %v3149 = vadd.f32 %v3127, %v3145
  %v3150 = vadd.f32 %v3132, %v3146
  %v3151 = vmul.f32 %v3147, 0.7978846
  %v3152 = vmul.f32 %v3148, 0.7978846
  %v3153 = vmul.f32 %v3149, 0.7978846
  %v3154 = vmul.f32 %v3150, 0.7978846
  %v3155 = vtanh.pop %v3151
  %v3156 = vtanh.pop %v3152
  %v3157 = vtanh.pop %v3153
  %v3158 = vtanh.pop %v3154
  %v3159 = vadd.f32 %v3155, 1.0
  %v3160 = vadd.f32 %v3156, 1.0
  %v3161 = vadd.f32 %v3157, 1.0
  %v3162 = vadd.f32 %v3158, 1.0
  %v3163 = vmul.f32 %v3159, 0.5
  %v3164 = vmul.f32 %v3160, 0.5
  %v3165 = vmul.f32 %v3161, 0.5
  %v3166 = vmul.f32 %v3162, 0.5
  %v3167 = vmul.f32 %v3117, %v3163
  %v3168 = vmul.f32 %v3122, %v3164
  %v3169 = vmul.f32 %v3127, %v3165
  %v3170 = vmul.f32 %v3132, %v3166
  %s3171 = scalar_lea.vmem %s8, 64
  %v3172 = vld [vmem:[%s3171] sm:$0xff]
  %v3173 = vld [vmem:[%s3171 + $0x8] sm:$0xff]
  %v3174 = vld [vmem:[%s3171 + $0x10] sm:$0xff]
  %v3175 = vld [vmem:[%s3171 + $0x18] sm:$0xff]
  %v3176 = vld [vmem:[%s3171 + $0x20] sm:$0xff]
  %v3177 = vld [vmem:[%s3171 + $0x28] sm:$0xff]
  %v3178 = vld [vmem:[%s3171 + $0x30] sm:$0xff]
  %v3179 = vld [vmem:[%s3171 + $0x38] sm:$0xff]
  %v3180 = vlaneseq
  %v3181 = vshrl.u32 %v3180, 7
  %v3182 = vsub.s32 5, %v3181
  %v3183 = vrot.slane %v2106, %v3182
  %v3185 = vsel %vm1935, %v3167, 0
  %v3188 = vsel %vm1935, %v3168, 0
  %v3191 = vsel %vm1935, %v3169, 0
  %v3194 = vsel %vm1935, %v3170, 0
  %3196 = vmatprep.subr.mxu0 0.0
  %3197 = vmatpush1.msra.mxu0 0.0
  %3198 = vmatprep.subr.mxu0 0.0
  %3199 = vmatpush1.msra.mxu0 0.0
  %3200 = vmatprep.subr.mxu0 0.0
  %3201 = vmatpush1.msra.mxu0 0.0
  %3202 = vmatprep.subr.mxu0 0.0
  %3203 = vmatpush1.msra.mxu0 0.0
  %3204 = vmatprep.subr.mxu0 0.0
  %3205 = vmatpush1.msra.mxu0 0.0
  %3206 = vmatprep.subr.mxu0 0.0
  %3207 = vmatpush1.msra.mxu0 0.0
  %3208 = vmatprep.subr.mxu0 0.0
  %3209 = vmatpush1.msra.mxu0 0.0
  %3210 = vmatprep.subr.mxu0 0.0
  %3211 = vmatpush1.msra.mxu0 0.0
  %3212 = vmatprep.subr.mxu0 0.0
  %3213 = vmatpush1.msra.mxu0 %v3179
  %3214 = vmatprep.subr.mxu0 0.0
  %3215 = vmatpush1.msra.mxu0 %v3178
  %3216 = vmatprep.subr.mxu0 0.0
  %3217 = vmatpush1.msra.mxu0 %v3177
  %3218 = vmatprep.subr.mxu0 0.0
  %3219 = vmatpush1.msra.mxu0 %v3176
  %3220 = vmatprep.subr.mxu0 0.0
  %3221 = vmatpush1.msra.mxu0 %v3175
  %3222 = vmatprep.subr.mxu0 0.0
  %3223 = vmatpush1.msra.mxu0 %v3174
  %3224 = vmatprep.subr.mxu0 0.0
  %3225 = vmatpush1.msra.mxu0 %v3173
  %3226 = vmatprep.subr.mxu0 0.0
  %3227 = vmatpush1.msra.mxu0 %v3172
  %3228 = vmatprep.subr.mxu0 0.0
  %3229 = vmatpush2.msra.mxu0 0.0
  %3230 = vmatprep.subr.mxu0 0.0
  %3231 = vmatpush2.msra.mxu0 0.0
  %3232 = vmatprep.subr.mxu0 0.0
  %3233 = vmatpush2.msra.mxu0 0.0
  %3234 = vmatprep.subr.mxu0 0.0
  %3235 = vmatpush2.msra.mxu0 0.0
  %3236 = vmatprep.subr.mxu0 0.0
  %3237 = vmatpush2.msra.mxu0 0.0
  %3238 = vmatprep.subr.mxu0 0.0
  %3239 = vmatpush2.msra.mxu0 0.0
  %3240 = vmatprep.subr.mxu0 0.0
  %3241 = vmatpush2.msra.mxu0 0.0
  %3242 = vmatprep.subr.mxu0 0.0
  %3243 = vmatpush2.msra.mxu0 0.0
  %3244 = vmatprep.subr.mxu0 0.0
  %3245 = vmatpush2.msra.mxu0 0.0
  %3246 = vmatprep.subr.mxu0 0.0
  %3247 = vmatpush2.msra.mxu0 0.0
  %3248 = vmatprep.subr.mxu0 0.0
  %3249 = vmatpush2.msra.mxu0 0.0
  %3250 = vmatprep.subr.mxu0 0.0
  %3251 = vmatpush2.msra.mxu0 0.0
  %3252 = vmatprep.subr.mxu0 0.0
  %3253 = vmatpush2.msra.mxu0 0.0
  %3254 = vmatprep.subr.mxu0 0.0
  %3255 = vmatpush2.msra.mxu0 0.0
  %3256 = vmatprep.subr.mxu0 0.0
  %3257 = vmatpush2.msra.mxu0 0.0
  %3258 = vmatprep.subr.mxu0 0.0
  %3259 = vmatpush2.msra.mxu0 0.0
  %3260 = vmatprep.mubr.f32.mxu0 0.0
  %3261 = vmatmul.mubr.f32.gmra.mxu0 %v3185
  %v3262 = vpop.f32.mrf.mxu0
  %v3263 = vadd.f32 %v3183, %v3262
  %v3264 = vpop.f32.mrf.mxu0
  %3265 = vmatprep.mubr.f32.mxu0 0.0
  %3266 = vmatmul.mubr.f32.gmra.mxu0 %v3188
  %v3267 = vpop.f32.mrf.mxu0
  %v3268 = vadd.f32 %v3183, %v3267
  %v3269 = vpop.f32.mrf.mxu0
  %3270 = vmatprep.mubr.f32.mxu0 0.0
  %3271 = vmatmul.mubr.f32.gmra.mxu0 %v3191
  %v3272 = vpop.f32.mrf.mxu0
  %v3273 = vadd.f32 %v3183, %v3272
  %v3274 = vpop.f32.mrf.mxu0
  %3275 = vmatprep.mubr.f32.mxu0 0.0
  %3276 = vmatmul.mubr.f32.gmra.mxu0 %v3194
  %v3277 = vpop.f32.mrf.mxu0
  %v3278 = vadd.f32 %v3183, %v3277
  %v3279 = vpop.f32.mrf.mxu0
  %3280 = vdwg.mxu0
  %v3281 = vadd.f32 %v3025, %v3263
  %v3282 = vadd.f32 %v3026, %v3268
  %v3283 = vadd.f32 %v3027, %v3273
  %v3284 = vadd.f32 %v3028, %v3278
  %v3285 = vsel %vm346, %v3281, 0.0
  %3286 = vadd.xlane.f32.xlu0 %v3285
  %v3287 = vpop.xlane.xlu0 %3286
  %v3288 = vsel %vm346, %v3282, 0.0
  %3289 = vadd.xlane.f32.xlu0 %v3288
  %v3290 = vpop.xlane.xlu0 %3289
  %v3291 = vsel %vm346, %v3283, 0.0
  %3292 = vadd.xlane.f32.xlu0 %v3291
  %v3293 = vpop.xlane.xlu0 %3292
  %v3294 = vsel %vm346, %v3284, 0.0
  %3295 = vadd.xlane.f32.xlu0 %v3294
  %v3296 = vpop.xlane.xlu0 %3295
  %v3297 = vmul.f32 %v3287, %v359
  %v3298 = vmul.f32 %v3290, %v359
  %v3299 = vmul.f32 %v3293, %v359
  %v3300 = vmul.f32 %v3296, %v359
  %v3301 = vsub.f32 %v3281, %v3297
  %v3302 = vsub.f32 %v3282, %v3298
  %v3303 = vsub.f32 %v3283, %v3299
  %v3304 = vsub.f32 %v3284, %v3300
  %v3305 = vmul.f32 %v3301, %v3301
  %v3306 = vmul.f32 %v3302, %v3302
  %v3307 = vmul.f32 %v3303, %v3303
  %v3308 = vmul.f32 %v3304, %v3304
  %v3309 = vsel %vm346, %v3305, 0.0
  %3310 = vadd.xlane.f32.xlu0 %v3309
  %v3311 = vpop.xlane.xlu0 %3310
  %v3312 = vsel %vm346, %v3306, 0.0
  %3313 = vadd.xlane.f32.xlu0 %v3312
  %v3314 = vpop.xlane.xlu0 %3313
  %v3315 = vsel %vm346, %v3307, 0.0
  %3316 = vadd.xlane.f32.xlu0 %v3315
  %v3317 = vpop.xlane.xlu0 %3316
  %v3318 = vsel %vm346, %v3308, 0.0
  %3319 = vadd.xlane.f32.xlu0 %v3318
  %v3320 = vpop.xlane.xlu0 %3319
  %v3321 = vmul.f32 %v3311, %v359
  %v3322 = vmul.f32 %v3314, %v359
  %v3323 = vmul.f32 %v3317, %v359
  %v3324 = vmul.f32 %v3320, %v359
  %v3325 = vadd.f32 %v3321, 1e-12
  %v3326 = vadd.f32 %v3322, 1e-12
  %v3327 = vadd.f32 %v3323, 1e-12
  %v3328 = vadd.f32 %v3324, 1e-12
  %v3329 = vrsqrt.pop %v3325
  %v3330 = vrsqrt.pop %v3326
  %v3331 = vrsqrt.pop %v3327
  %v3332 = vrsqrt.pop %v3328
  %v3333 = vmul.f32 %v3301, %v3329
  %v3334 = vmul.f32 %v3302, %v3330
  %v3335 = vmul.f32 %v3303, %v3331
  %v3336 = vmul.f32 %v3304, %v3332
  %v3337 = vlaneseq
  %v3338 = vshrl.u32 %v3337, 7
  %v3339 = vsub.s32 6, %v3338
  %v3340 = vrot.slane %v2106, %v3339
  %v3341 = vmul.f32 %v3333, %v3340
  %v3342 = vmul.f32 %v3334, %v3340
  %v3343 = vmul.f32 %v3335, %v3340
  %v3344 = vmul.f32 %v3336, %v3340
  %v3345 = vlaneseq
  %v3346 = vshrl.u32 %v3345, 7
  %v3347 = vsub.s32 7, %v3346
  %v3348 = vrot.slane %v2106, %v3347
  %v3349 = vadd.f32 %v3341, %v3348
  %v3350 = vadd.f32 %v3342, %v3348
  %v3351 = vadd.f32 %v3343, %v3348
  %v3352 = vadd.f32 %v3344, %v3348
  %v3353 = vadd.f32 %v3349, %v222
  %v3354 = vadd.f32 %v3350, %v227
  %v3355 = vadd.f32 %v3351, %v232
  %v3356 = vadd.f32 %v3352, %v237
  %v3357 = vld [vmem:[%s1 + $0x5c] sm:$0x1]
  %v3358 = vld [vmem:[%s1 + $0x5d] sm:$0x1]
  %v3359 = vsel %vm346, %v3353, 0.0
  %3360 = vadd.xlane.f32.xlu0 %v3359
  %v3361 = vpop.xlane.xlu0 %3360
  %v3362 = vsel %vm346, %v3354, 0.0
  %3363 = vadd.xlane.f32.xlu0 %v3362
  %v3364 = vpop.xlane.xlu0 %3363
  %v3365 = vsel %vm346, %v3355, 0.0
  %3366 = vadd.xlane.f32.xlu0 %v3365
  %v3367 = vpop.xlane.xlu0 %3366
  %v3368 = vsel %vm346, %v3356, 0.0
  %3369 = vadd.xlane.f32.xlu0 %v3368
  %v3370 = vpop.xlane.xlu0 %3369
  %v3371 = vmul.f32 %v3361, %v359
  %v3372 = vmul.f32 %v3364, %v359
  %v3373 = vmul.f32 %v3367, %v359
  %v3374 = vmul.f32 %v3370, %v359
  %v3375 = vsub.f32 %v3353, %v3371
  %v3376 = vsub.f32 %v3354, %v3372
  %v3377 = vsub.f32 %v3355, %v3373
  %v3378 = vsub.f32 %v3356, %v3374
  %v3379 = vmul.f32 %v3375, %v3375
  %v3380 = vmul.f32 %v3376, %v3376
  %v3381 = vmul.f32 %v3377, %v3377
  %v3382 = vmul.f32 %v3378, %v3378
  %v3383 = vsel %vm346, %v3379, 0.0
  %3384 = vadd.xlane.f32.xlu0 %v3383
  %v3385 = vpop.xlane.xlu0 %3384
  %v3386 = vsel %vm346, %v3380, 0.0
  %3387 = vadd.xlane.f32.xlu0 %v3386
  %v3388 = vpop.xlane.xlu0 %3387
  %v3389 = vsel %vm346, %v3381, 0.0
  %3390 = vadd.xlane.f32.xlu0 %v3389
  %v3391 = vpop.xlane.xlu0 %3390
  %v3392 = vsel %vm346, %v3382, 0.0
  %3393 = vadd.xlane.f32.xlu0 %v3392
  %v3394 = vpop.xlane.xlu0 %3393
  %v3395 = vmul.f32 %v3385, %v359
  %v3396 = vmul.f32 %v3388, %v359
  %v3397 = vmul.f32 %v3391, %v359
  %v3398 = vmul.f32 %v3394, %v359
  %v3399 = vadd.f32 %v3395, 1e-06
  %v3400 = vadd.f32 %v3396, 1e-06
  %v3401 = vadd.f32 %v3397, 1e-06
  %v3402 = vadd.f32 %v3398, 1e-06
  %v3403 = vrsqrt.pop %v3399
  %v3404 = vrsqrt.pop %v3400
  %v3405 = vrsqrt.pop %v3401
  %v3406 = vrsqrt.pop %v3402
  %v3407 = vmul.f32 %v3375, %v3403
  %v3408 = vmul.f32 %v3376, %v3404
  %v3409 = vmul.f32 %v3377, %v3405
  %v3410 = vmul.f32 %v3378, %v3406
  %v3411 = vlaneseq
  %v3412 = vshrl.u32 %v3411, 7
  %v3413 = vsub.s32 0, %v3412
  %v3414 = vrot.slane %v3357, %v3413
  %v3415 = vmul.f32 %v3407, %v3414
  %v3416 = vmul.f32 %v3408, %v3414
  %v3417 = vmul.f32 %v3409, %v3414
  %v3418 = vmul.f32 %v3410, %v3414
  %v3419 = vlaneseq
  %v3420 = vshrl.u32 %v3419, 7
  %v3421 = vsub.s32 0, %v3420
  %v3422 = vrot.slane %v3358, %v3421
  %v3423 = vadd.f32 %v3415, %v3422
  %v3424 = vadd.f32 %v3416, %v3422
  %v3425 = vadd.f32 %v3417, %v3422
  %v3426 = vadd.f32 %v3418, %v3422
  %v3427 = vld [vmem:[%s0] sm:$0xff]
  %3428 = vset.pattern.permute.xlu0 3
  %3429 = vperm.xlu0 %3428, %v3427
  %v3430 = vpop.permute.xlu0 %3429
  %vm3431 = vcmp.eq.s32.totalorder %v3430, %v55
  %v3432 = vsel %vm3431, 1, 0
  %v3433 = vcvt.s32.f32 %v3432
  %v3435 = vsel %vm346, %v3433, 0
  %3437 = vmatprep.subr.mxu0 0.0
  %3438 = vmatpush1.msra.mxu0 0.0
  %3439 = vmatprep.subr.mxu0 0.0
  %3440 = vmatpush1.msra.mxu0 0.0
  %3441 = vmatprep.subr.mxu0 0.0
  %3442 = vmatpush1.msra.mxu0 0.0
  %3443 = vmatprep.subr.mxu0 0.0
  %3444 = vmatpush1.msra.mxu0 0.0
  %3445 = vmatprep.subr.mxu0 0.0
  %3446 = vmatpush1.msra.mxu0 0.0
  %3447 = vmatprep.subr.mxu0 0.0
  %3448 = vmatpush1.msra.mxu0 0.0
  %3449 = vmatprep.subr.mxu0 0.0
  %3450 = vmatpush1.msra.mxu0 0.0
  %3451 = vmatprep.subr.mxu0 0.0
  %3452 = vmatpush1.msra.mxu0 0.0
  %3453 = vmatprep.subr.mxu0 0.0
  %3454 = vmatpush1.msra.mxu0 0.0
  %3455 = vmatprep.subr.mxu0 0.0
  %3456 = vmatpush1.msra.mxu0 0.0
  %3457 = vmatprep.subr.mxu0 0.0
  %3458 = vmatpush1.msra.mxu0 0.0
  %3459 = vmatprep.subr.mxu0 0.0
  %3460 = vmatpush1.msra.mxu0 0.0
  %3461 = vmatprep.subr.mxu0 0.0
  %3462 = vmatpush1.msra.mxu0 %v3426
  %3463 = vmatprep.subr.mxu0 0.0
  %3464 = vmatpush1.msra.mxu0 %v3425
  %3465 = vmatprep.subr.mxu0 0.0
  %3466 = vmatpush1.msra.mxu0 %v3424
  %3467 = vmatprep.subr.mxu0 0.0
  %3468 = vmatpush1.msra.mxu0 %v3423
  %3469 = vmatprep.subr.mxu0 0.0
  %3470 = vmatpush2.msra.mxu0 0.0
  %3471 = vmatprep.subr.mxu0 0.0
  %3472 = vmatpush2.msra.mxu0 0.0
  %3473 = vmatprep.subr.mxu0 0.0
  %3474 = vmatpush2.msra.mxu0 0.0
  %3475 = vmatprep.subr.mxu0 0.0
  %3476 = vmatpush2.msra.mxu0 0.0
  %3477 = vmatprep.subr.mxu0 0.0
  %3478 = vmatpush2.msra.mxu0 0.0
  %3479 = vmatprep.subr.mxu0 0.0
  %3480 = vmatpush2.msra.mxu0 0.0
  %3481 = vmatprep.subr.mxu0 0.0
  %3482 = vmatpush2.msra.mxu0 0.0
  %3483 = vmatprep.subr.mxu0 0.0
  %3484 = vmatpush2.msra.mxu0 0.0
  %3485 = vmatprep.subr.mxu0 0.0
  %3486 = vmatpush2.msra.mxu0 0.0
  %3487 = vmatprep.subr.mxu0 0.0
  %3488 = vmatpush2.msra.mxu0 0.0
  %3489 = vmatprep.subr.mxu0 0.0
  %3490 = vmatpush2.msra.mxu0 0.0
  %3491 = vmatprep.subr.mxu0 0.0
  %3492 = vmatpush2.msra.mxu0 0.0
  %3493 = vmatprep.subr.mxu0 0.0
  %3494 = vmatpush2.msra.mxu0 0.0
  %3495 = vmatprep.subr.mxu0 0.0
  %3496 = vmatpush2.msra.mxu0 0.0
  %3497 = vmatprep.subr.mxu0 0.0
  %3498 = vmatpush2.msra.mxu0 0.0
  %3499 = vmatprep.subr.mxu0 0.0
  %3500 = vmatpush2.msra.mxu0 0.0
  %3501 = vmatprep.mubr.f32.mxu0 0.0
  %3502 = vmatmul.mubr.f32.gmra.mxu0 %v3435
  %v3503 = vpop.f32.mrf.mxu0
  %v3504 = vadd.f32 0.0, %v3503
  %v3505 = vpop.f32.mrf.mxu0
  %3506 = vdwg.mxu0
  %v3507 = vld [vmem:[%s4] sm:$0xff]
  %3509 = vset.pattern.permute.xlu0 0
  %3510 = vperm.xlu0 %3509, %v3507
  %v3511 = vpop.permute.xlu0 %3510
  %v3513 = vmul.f32 %v3504, %v3511
  %v3514 = vld [vmem:[%s1 + $0x56] sm:$0xf]
  %v3516 = vrot.slane %v3514, 4
  %v3518 = vsel %vm151, %v3514, %v3516
  %v3519 = vadd.f32 %v3513, %v3518
  %vm3520 = vcmp.lt.s32.totalorder %v417, 8
  %vm3521 = vcmp.lt.s32.totalorder %v418, 8
  %vm3522 = vcmp.lt.s32.totalorder %v419, 8
  %vm3523 = vcmp.lt.s32.totalorder %v420, 8
  %vm3524 = vmand %vm433, %vm3520
  %vm3525 = vmand %vm434, %vm3521
  %vm3526 = vmand %vm435, %vm3522
  %vm3527 = vmand %vm436, %vm3523
  %vm3528 = vmand %vm3524, %vm481
  %vm3529 = vmand %vm3525, %vm481
  %vm3530 = vmand %vm3526, %vm481
  %vm3531 = vmand %vm3527, %vm481
  %vm3532 = vmand %vm3528, %vm498
  %vm3533 = vmand %vm3529, %vm498
  %vm3534 = vmand %vm3530, %vm498
  %vm3535 = vmand %vm3531, %vm498
  %vm3536 = vcmp.ge.s32.totalorder %v417, 8
  %vm3537 = vcmp.ge.s32.totalorder %v418, 8
  %vm3538 = vcmp.ge.s32.totalorder %v419, 8
  %vm3539 = vcmp.ge.s32.totalorder %v420, 8
  %vm3540 = vcmp.lt.s32.totalorder %v417, 16
  %vm3541 = vcmp.lt.s32.totalorder %v418, 16
  %vm3542 = vcmp.lt.s32.totalorder %v419, 16
  %vm3543 = vcmp.lt.s32.totalorder %v420, 16
  %vm3544 = vmand %vm3536, %vm3540
  %vm3545 = vmand %vm3537, %vm3541
  %vm3546 = vmand %vm3538, %vm3542
  %vm3547 = vmand %vm3539, %vm3543
  %vm3548 = vmand %vm3544, %vm563
  %vm3549 = vmand %vm3545, %vm563
  %vm3550 = vmand %vm3546, %vm563
  %vm3551 = vmand %vm3547, %vm563
  %vm3552 = vmand %vm3548, %vm580
  %vm3553 = vmand %vm3549, %vm580
  %vm3554 = vmand %vm3550, %vm580
  %vm3555 = vmand %vm3551, %vm580
  %vm3556 = vmor %vm3532, %vm3552
  %vm3557 = vmor %vm3533, %vm3553
  %vm3558 = vmor %vm3534, %vm3554
  %vm3559 = vmor %vm3535, %vm3555
  %vm3560 = vcmp.ge.s32.totalorder %v417, 16
  %vm3561 = vcmp.ge.s32.totalorder %v418, 16
  %vm3562 = vcmp.ge.s32.totalorder %v419, 16
  %vm3563 = vcmp.ge.s32.totalorder %v420, 16
  %vm3564 = vcmp.lt.s32.totalorder %v417, 24
  %vm3565 = vcmp.lt.s32.totalorder %v418, 24
  %vm3566 = vcmp.lt.s32.totalorder %v419, 24
  %vm3567 = vcmp.lt.s32.totalorder %v420, 24
  %vm3568 = vmand %vm3560, %vm3564
  %vm3569 = vmand %vm3561, %vm3565
  %vm3570 = vmand %vm3562, %vm3566
  %vm3571 = vmand %vm3563, %vm3567
  %vm3572 = vmand %vm3568, %vm661
  %vm3573 = vmand %vm3569, %vm661
  %vm3574 = vmand %vm3570, %vm661
  %vm3575 = vmand %vm3571, %vm661
  %vm3576 = vmand %vm3572, %vm678
  %vm3577 = vmand %vm3573, %vm678
  %vm3578 = vmand %vm3574, %vm678
  %vm3579 = vmand %vm3575, %vm678
  %vm3580 = vmor %vm3556, %vm3576
  %vm3581 = vmor %vm3557, %vm3577
  %vm3582 = vmor %vm3558, %vm3578
  %vm3583 = vmor %vm3559, %vm3579
  %vm3584 = vcmp.ge.s32.totalorder %v417, 24
  %vm3585 = vcmp.ge.s32.totalorder %v418, 24
  %vm3586 = vcmp.ge.s32.totalorder %v419, 24
  %vm3587 = vcmp.ge.s32.totalorder %v420, 24
  %vm3588 = vmand %vm3584, %vm449
  %vm3589 = vmand %vm3585, %vm450
  %vm3590 = vmand %vm3586, %vm451
  %vm3591 = vmand %vm3587, %vm452
  %vm3592 = vmand %vm3588, %vm759
  %vm3593 = vmand %vm3589, %vm759
  %vm3594 = vmand %vm3590, %vm759
  %vm3595 = vmand %vm3591, %vm759
  %vm3596 = vmand %vm3592, %vm776
  %vm3597 = vmand %vm3593, %vm776
  %vm3598 = vmand %vm3594, %vm776
  %vm3599 = vmand %vm3595, %vm776
  %vm3600 = vmor %vm3580, %vm3596
  %vm3601 = vmor %vm3581, %vm3597
  %vm3602 = vmor %vm3582, %vm3598
  %vm3603 = vmor %vm3583, %vm3599
  %v3604 = vsel %vm3600, 1, 0
  %v3605 = vsel %vm3601, 1, 0
  %v3606 = vsel %vm3602, 1, 0
  %v3607 = vsel %vm3603, 1, 0
  %v3608 = vcvt.s32.f32 %v3604
  %v3609 = vcvt.s32.f32 %v3605
  %v3610 = vcvt.s32.f32 %v3606
  %v3611 = vcvt.s32.f32 %v3607
  %v3612 = vmul.f32 %v3608, 0.35355338
  %v3613 = vmul.f32 %v3609, 0.35355338
  %v3614 = vmul.f32 %v3610, 0.35355338
  %v3615 = vmul.f32 %v3611, 0.35355338
  %v3616 = vld [vmem:[%s3] sm:$0xff]
  %v3617 = vld [vmem:[%s14] sm:$0xff]
  %v3618 = vld [vmem:[%s10] sm:$0xff]
  %v3619 = vld [vmem:[%s10 + $0x8] sm:$0xff]
  %v3620 = vld [vmem:[%s10 + $0x10] sm:$0xff]
  %v3621 = vld [vmem:[%s10 + $0x18] sm:$0xff]
  %v3622 = vld [vmem:[%s11] sm:$0xff]
  %v3623 = vld [vmem:[%s11 + $0x8] sm:$0xff]
  %v3624 = vld [vmem:[%s11 + $0x10] sm:$0xff]
  %v3625 = vld [vmem:[%s11 + $0x18] sm:$0xff]
  %v3626 = vlaneseq
  %v3627 = vshrl.u32 %v3626, 7
  %v3628 = vsub.s32 0, %v3627
  %v3629 = vrot.slane %v3617, %v3628
  %v3631 = vsel %vm346, %v3519, 0
  %3633 = vmatprep.subr.mxu0 0.0
  %3634 = vmatpush1.msra.mxu0 0.0
  %3635 = vmatprep.subr.mxu0 0.0
  %3636 = vmatpush1.msra.mxu0 0.0
  %3637 = vmatprep.subr.mxu0 0.0
  %3638 = vmatpush1.msra.mxu0 0.0
  %3639 = vmatprep.subr.mxu0 0.0
  %3640 = vmatpush1.msra.mxu0 0.0
  %3641 = vmatprep.subr.mxu0 0.0
  %3642 = vmatpush1.msra.mxu0 0.0
  %3643 = vmatprep.subr.mxu0 0.0
  %3644 = vmatpush1.msra.mxu0 0.0
  %3645 = vmatprep.subr.mxu0 0.0
  %3646 = vmatpush1.msra.mxu0 0.0
  %3647 = vmatprep.subr.mxu0 0.0
  %3648 = vmatpush1.msra.mxu0 0.0
  %3649 = vmatprep.subr.mxu0 0.0
  %3650 = vmatpush1.msra.mxu0 0.0
  %3651 = vmatprep.subr.mxu0 0.0
  %3652 = vmatpush1.msra.mxu0 0.0
  %3653 = vmatprep.subr.mxu0 0.0
  %3654 = vmatpush1.msra.mxu0 0.0
  %3655 = vmatprep.subr.mxu0 0.0
  %3656 = vmatpush1.msra.mxu0 0.0
  %3657 = vmatprep.subr.mxu0 0.0
  %3658 = vmatpush1.msra.mxu0 %v3621
  %3659 = vmatprep.subr.mxu0 0.0
  %3660 = vmatpush1.msra.mxu0 %v3620
  %3661 = vmatprep.subr.mxu0 0.0
  %3662 = vmatpush1.msra.mxu0 %v3619
  %3663 = vmatprep.subr.mxu0 0.0
  %3664 = vmatpush1.msra.mxu0 %v3618
  %3665 = vmatprep.subr.mxu0 0.0
  %3666 = vmatpush2.msra.mxu0 0.0
  %3667 = vmatprep.subr.mxu0 0.0
  %3668 = vmatpush2.msra.mxu0 0.0
  %3669 = vmatprep.subr.mxu0 0.0
  %3670 = vmatpush2.msra.mxu0 0.0
  %3671 = vmatprep.subr.mxu0 0.0
  %3672 = vmatpush2.msra.mxu0 0.0
  %3673 = vmatprep.subr.mxu0 0.0
  %3674 = vmatpush2.msra.mxu0 0.0
  %3675 = vmatprep.subr.mxu0 0.0
  %3676 = vmatpush2.msra.mxu0 0.0
  %3677 = vmatprep.subr.mxu0 0.0
  %3678 = vmatpush2.msra.mxu0 0.0
  %3679 = vmatprep.subr.mxu0 0.0
  %3680 = vmatpush2.msra.mxu0 0.0
  %3681 = vmatprep.subr.mxu0 0.0
  %3682 = vmatpush2.msra.mxu0 0.0
  %3683 = vmatprep.subr.mxu0 0.0
  %3684 = vmatpush2.msra.mxu0 0.0
  %3685 = vmatprep.subr.mxu0 0.0
  %3686 = vmatpush2.msra.mxu0 0.0
  %3687 = vmatprep.subr.mxu0 0.0
  %3688 = vmatpush2.msra.mxu0 0.0
  %3689 = vmatprep.subr.mxu0 0.0
  %3690 = vmatpush2.msra.mxu0 0.0
  %3691 = vmatprep.subr.mxu0 0.0
  %3692 = vmatpush2.msra.mxu0 0.0
  %3693 = vmatprep.subr.mxu0 0.0
  %3694 = vmatpush2.msra.mxu0 0.0
  %3695 = vmatprep.subr.mxu0 0.0
  %3696 = vmatpush2.msra.mxu0 0.0
  %3697 = vmatprep.mubr.f32.mxu0 0.0
  %3698 = vmatmul.mubr.f32.gmra.mxu0 %v3631
  %v3699 = vpop.f32.mrf.mxu0
  %v3700 = vadd.f32 %v3629, %v3699
  %v3701 = vpop.f32.mrf.mxu0
  %3702 = vdwg.mxu0
  %v3703 = vmul.f32 %v3700, %v3612
  %v3704 = vmul.f32 %v3700, %v3613
  %v3705 = vmul.f32 %v3700, %v3614
  %v3706 = vmul.f32 %v3700, %v3615
  %3708 = vrot.lane.b32.xlu0 %v3700, 96
  %v3709 = vpop.permute.xlu0 %3708
  %v3711 = vsel %vm346, %v3703, 0
  %v3714 = vsel %vm346, %v3704, 0
  %v3717 = vsel %vm346, %v3705, 0
  %v3720 = vsel %vm346, %v3706, 0
  %v3722 = vsel %vm346, %v3709, 0
  %3724 = vmatprep.subr.mxu0 0.0
  %3725 = vmatpush1.xpose.msra.mxu0 0.0
  %3726 = vmatprep.subr.mxu0 0.0
  %3727 = vmatpush1.xpose.msra.mxu0 0.0
  %3728 = vmatprep.subr.mxu0 0.0
  %3729 = vmatpush1.xpose.msra.mxu0 0.0
  %3730 = vmatprep.subr.mxu0 0.0
  %3731 = vmatpush1.xpose.msra.mxu0 0.0
  %3732 = vmatprep.subr.mxu0 0.0
  %3733 = vmatpush1.xpose.msra.mxu0 0.0
  %3734 = vmatprep.subr.mxu0 0.0
  %3735 = vmatpush1.xpose.msra.mxu0 0.0
  %3736 = vmatprep.subr.mxu0 0.0
  %3737 = vmatpush1.xpose.msra.mxu0 0.0
  %3738 = vmatprep.subr.mxu0 0.0
  %3739 = vmatpush1.xpose.msra.mxu0 0.0
  %3740 = vmatprep.subr.mxu0 0.0
  %3741 = vmatpush1.xpose.msra.mxu0 0.0
  %3742 = vmatprep.subr.mxu0 0.0
  %3743 = vmatpush1.xpose.msra.mxu0 0.0
  %3744 = vmatprep.subr.mxu0 0.0
  %3745 = vmatpush1.xpose.msra.mxu0 0.0
  %3746 = vmatprep.subr.mxu0 0.0
  %3747 = vmatpush1.xpose.msra.mxu0 0.0
  %3748 = vmatprep.subr.mxu0 0.0
  %3749 = vmatpush1.xpose.msra.mxu0 0.0
  %3750 = vmatprep.subr.mxu0 0.0
  %3751 = vmatpush1.xpose.msra.mxu0 0.0
  %3752 = vmatprep.subr.mxu0 0.0
  %3753 = vmatpush1.xpose.msra.mxu0 0.0
  %3754 = vmatprep.subr.mxu0 0.0
  %3755 = vmatpush1.xpose.msra.mxu0 %v3722
  %3756 = vmatprep.subr.mxu0 0.0
  %3757 = vmatpush2.xpose.msra.mxu0 0.0
  %3758 = vmatprep.subr.mxu0 0.0
  %3759 = vmatpush2.xpose.msra.mxu0 0.0
  %3760 = vmatprep.subr.mxu0 0.0
  %3761 = vmatpush2.xpose.msra.mxu0 0.0
  %3762 = vmatprep.subr.mxu0 0.0
  %3763 = vmatpush2.xpose.msra.mxu0 0.0
  %3764 = vmatprep.subr.mxu0 0.0
  %3765 = vmatpush2.xpose.msra.mxu0 0.0
  %3766 = vmatprep.subr.mxu0 0.0
  %3767 = vmatpush2.xpose.msra.mxu0 0.0
  %3768 = vmatprep.subr.mxu0 0.0
  %3769 = vmatpush2.xpose.msra.mxu0 0.0
  %3770 = vmatprep.subr.mxu0 0.0
  %3771 = vmatpush2.xpose.msra.mxu0 0.0
  %3772 = vmatprep.subr.mxu0 0.0
  %3773 = vmatpush2.xpose.msra.mxu0 0.0
  %3774 = vmatprep.subr.mxu0 0.0
  %3775 = vmatpush2.xpose.msra.mxu0 0.0
  %3776 = vmatprep.subr.mxu0 0.0
  %3777 = vmatpush2.xpose.msra.mxu0 0.0
  %3778 = vmatprep.subr.mxu0 0.0
  %3779 = vmatpush2.xpose.msra.mxu0 0.0
  %3780 = vmatprep.subr.mxu0 0.0
  %3781 = vmatpush2.xpose.msra.mxu0 0.0
  %3782 = vmatprep.subr.mxu0 0.0
  %3783 = vmatpush2.xpose.msra.mxu0 0.0
  %3784 = vmatprep.subr.mxu0 0.0
  %3785 = vmatpush2.xpose.msra.mxu0 0.0
  %3786 = vmatprep.subr.mxu0 0.0
  %3787 = vmatpush2.xpose.msra.mxu0 0.0
  %3788 = vmatprep.mubr.f32.mxu0 0.0
  %3789 = vmatmul.mubr.f32.gmra.mxu0 %v3711
  %v3790 = vpop.f32.mrf.mxu0
  %v3791 = vadd.f32 %v3616, %v3790
  %v3792 = vpop.f32.mrf.mxu0
  %3793 = vmatprep.mubr.f32.mxu0 0.0
  %3794 = vmatmul.mubr.f32.gmra.mxu0 %v3714
  %v3795 = vpop.f32.mrf.mxu0
  %v3796 = vadd.f32 %v3616, %v3795
  %v3797 = vpop.f32.mrf.mxu0
  %3798 = vmatprep.mubr.f32.mxu0 0.0
  %3799 = vmatmul.mubr.f32.gmra.mxu0 %v3717
  %v3800 = vpop.f32.mrf.mxu0
  %v3801 = vadd.f32 %v3616, %v3800
  %v3802 = vpop.f32.mrf.mxu0
  %3803 = vmatprep.mubr.f32.mxu0 0.0
  %3804 = vmatmul.mubr.f32.gmra.mxu0 %v3720
  %v3805 = vpop.f32.mrf.mxu0
  %v3806 = vadd.f32 %v3616, %v3805
  %v3807 = vpop.f32.mrf.mxu0
  %3808 = vdwg.mxu0
  %vm3809 = vcmask 64512
  %v3810 = vsel %vm3809, %v3791, -inf
  %3811 = vmax.xlane.f32.xlu0 %v3810
  %v3812 = vpop.xlane.xlu0 %3811
  %v3813 = vsel %vm3809, %v3796, -inf
  %3814 = vmax.xlane.f32.xlu0 %v3813
  %v3815 = vpop.xlane.xlu0 %3814
  %v3816 = vsel %vm3809, %v3801, -inf
  %3817 = vmax.xlane.f32.xlu0 %v3816
  %v3818 = vpop.xlane.xlu0 %3817
  %v3819 = vsel %vm3809, %v3806, -inf
  %3820 = vmax.xlane.f32.xlu0 %v3819
  %v3821 = vpop.xlane.xlu0 %3820
  %v3822 = vsub.f32 %v3791, %v3812
  %v3823 = vsub.f32 %v3796, %v3815
  %v3824 = vsub.f32 %v3801, %v3818
  %v3825 = vsub.f32 %v3806, %v3821
  %v3826 = vmul.f32 %v3822, 1.442695
  %v3827 = vpow.pop %v3826
  %v3828 = vmul.f32 %v3823, 1.442695
  %v3829 = vpow.pop %v3828
  %v3830 = vmul.f32 %v3824, 1.442695
  %v3831 = vpow.pop %v3830
  %v3832 = vmul.f32 %v3825, 1.442695
  %v3833 = vpow.pop %v3832
  %v3834 = vsel %vm3809, %v3827, 0.0
  %3835 = vadd.xlane.f32.xlu0 %v3834
  %v3836 = vpop.xlane.xlu0 %3835
  %v3837 = vsel %vm3809, %v3829, 0.0
  %3838 = vadd.xlane.f32.xlu0 %v3837
  %v3839 = vpop.xlane.xlu0 %3838
  %v3840 = vsel %vm3809, %v3831, 0.0
  %3841 = vadd.xlane.f32.xlu0 %v3840
  %v3842 = vpop.xlane.xlu0 %3841
  %v3843 = vsel %vm3809, %v3833, 0.0
  %3844 = vadd.xlane.f32.xlu0 %v3843
  %v3845 = vpop.xlane.xlu0 %3844
  %v3846 = vrcp.pop %v3836
  %v3847 = vrcp.pop %v3839
  %v3848 = vrcp.pop %v3842
  %v3849 = vrcp.pop %v3845
  %v3850 = vmul.f32 %v3827, %v3846
  %v3851 = vmul.f32 %v3829, %v3847
  %v3852 = vmul.f32 %v3831, %v3848
  %v3853 = vmul.f32 %v3833, %v3849
  %3854 = vrot.lane.b32.xlu0 %v3700, 64
  %v3855 = vpop.permute.xlu0 %3854
  %v3858 = vsel %vm3809, %v3850, 0
  %v3861 = vsel %vm3809, %v3851, 0
  %v3864 = vsel %vm3809, %v3852, 0
  %v3867 = vsel %vm3809, %v3853, 0
  %3869 = vmatprep.subr.mxu0 0.0
  %3870 = vmatpush1.msra.mxu0 0.0
  %3871 = vmatprep.subr.mxu0 0.0
  %3872 = vmatpush1.msra.mxu0 0.0
  %3873 = vmatprep.subr.mxu0 0.0
  %3874 = vmatpush1.msra.mxu0 0.0
  %3875 = vmatprep.subr.mxu0 0.0
  %3876 = vmatpush1.msra.mxu0 0.0
  %3877 = vmatprep.subr.mxu0 0.0
  %3878 = vmatpush1.msra.mxu0 0.0
  %3879 = vmatprep.subr.mxu0 0.0
  %3880 = vmatpush1.msra.mxu0 0.0
  %3881 = vmatprep.subr.mxu0 0.0
  %3882 = vmatpush1.msra.mxu0 0.0
  %3883 = vmatprep.subr.mxu0 0.0
  %3884 = vmatpush1.msra.mxu0 0.0
  %3885 = vmatprep.subr.mxu0 0.0
  %3886 = vmatpush1.msra.mxu0 0.0
  %3887 = vmatprep.subr.mxu0 0.0
  %3888 = vmatpush1.msra.mxu0 0.0
  %3889 = vmatprep.subr.mxu0 0.0
  %3890 = vmatpush1.msra.mxu0 0.0
  %3891 = vmatprep.subr.mxu0 0.0
  %3892 = vmatpush1.msra.mxu0 0.0
  %3893 = vmatprep.subr.mxu0 0.0
  %3894 = vmatpush1.msra.mxu0 0.0
  %3895 = vmatprep.subr.mxu0 0.0
  %3896 = vmatpush1.msra.mxu0 0.0
  %3897 = vmatprep.subr.mxu0 0.0
  %3898 = vmatpush1.msra.mxu0 0.0
  %3899 = vmatprep.subr.mxu0 0.0
  %3900 = vmatpush1.msra.mxu0 %v3855
  %3901 = vmatprep.subr.mxu0 0.0
  %3902 = vmatpush2.msra.mxu0 0.0
  %3903 = vmatprep.subr.mxu0 0.0
  %3904 = vmatpush2.msra.mxu0 0.0
  %3905 = vmatprep.subr.mxu0 0.0
  %3906 = vmatpush2.msra.mxu0 0.0
  %3907 = vmatprep.subr.mxu0 0.0
  %3908 = vmatpush2.msra.mxu0 0.0
  %3909 = vmatprep.subr.mxu0 0.0
  %3910 = vmatpush2.msra.mxu0 0.0
  %3911 = vmatprep.subr.mxu0 0.0
  %3912 = vmatpush2.msra.mxu0 0.0
  %3913 = vmatprep.subr.mxu0 0.0
  %3914 = vmatpush2.msra.mxu0 0.0
  %3915 = vmatprep.subr.mxu0 0.0
  %3916 = vmatpush2.msra.mxu0 0.0
  %3917 = vmatprep.subr.mxu0 0.0
  %3918 = vmatpush2.msra.mxu0 0.0
  %3919 = vmatprep.subr.mxu0 0.0
  %3920 = vmatpush2.msra.mxu0 0.0
  %3921 = vmatprep.subr.mxu0 0.0
  %3922 = vmatpush2.msra.mxu0 0.0
  %3923 = vmatprep.subr.mxu0 0.0
  %3924 = vmatpush2.msra.mxu0 0.0
  %3925 = vmatprep.subr.mxu0 0.0
  %3926 = vmatpush2.msra.mxu0 0.0
  %3927 = vmatprep.subr.mxu0 0.0
  %3928 = vmatpush2.msra.mxu0 0.0
  %3929 = vmatprep.subr.mxu0 0.0
  %3930 = vmatpush2.msra.mxu0 0.0
  %3931 = vmatprep.subr.mxu0 0.0
  %3932 = vmatpush2.msra.mxu0 0.0
  %3933 = vmatprep.mubr.f32.mxu0 0.0
  %3934 = vmatmul.mubr.f32.gmra.mxu0 %v3858
  %v3935 = vpop.f32.mrf.mxu0
  %v3936 = vadd.f32 0.0, %v3935
  %v3937 = vpop.f32.mrf.mxu0
  %3938 = vmatprep.mubr.f32.mxu0 0.0
  %3939 = vmatmul.mubr.f32.gmra.mxu0 %v3861
  %v3940 = vpop.f32.mrf.mxu0
  %v3941 = vadd.f32 0.0, %v3940
  %v3942 = vpop.f32.mrf.mxu0
  %3943 = vmatprep.mubr.f32.mxu0 0.0
  %3944 = vmatmul.mubr.f32.gmra.mxu0 %v3864
  %v3945 = vpop.f32.mrf.mxu0
  %v3946 = vadd.f32 0.0, %v3945
  %v3947 = vpop.f32.mrf.mxu0
  %3948 = vmatprep.mubr.f32.mxu0 0.0
  %3949 = vmatmul.mubr.f32.gmra.mxu0 %v3867
  %v3950 = vpop.f32.mrf.mxu0
  %v3951 = vadd.f32 0.0, %v3950
  %v3952 = vpop.f32.mrf.mxu0
  %3953 = vdwg.mxu0
  %v3954 = vmul.f32 %v3936, %v3608
  %v3955 = vmul.f32 %v3941, %v3609
  %v3956 = vmul.f32 %v3946, %v3610
  %v3957 = vmul.f32 %v3951, %v3611
  %v3958 = vadd.f32 %v3954, %v3955
  %v3959 = vadd.f32 %v3958, %v3956
  %v3960 = vadd.f32 %v3959, %v3957
  %v3961 = vlaneseq
  %v3962 = vshrl.u32 %v3961, 7
  %v3963 = vsub.s32 1, %v3962
  %v3964 = vrot.slane %v3617, %v3963
  %v3966 = vsel %vm346, %v3960, 0
  %3968 = vmatprep.subr.mxu0 0.0
  %3969 = vmatpush1.msra.mxu0 0.0
  %3970 = vmatprep.subr.mxu0 0.0
  %3971 = vmatpush1.msra.mxu0 0.0
  %3972 = vmatprep.subr.mxu0 0.0
  %3973 = vmatpush1.msra.mxu0 0.0
  %3974 = vmatprep.subr.mxu0 0.0
  %3975 = vmatpush1.msra.mxu0 0.0
  %3976 = vmatprep.subr.mxu0 0.0
  %3977 = vmatpush1.msra.mxu0 0.0
  %3978 = vmatprep.subr.mxu0 0.0
  %3979 = vmatpush1.msra.mxu0 0.0
  %3980 = vmatprep.subr.mxu0 0.0
  %3981 = vmatpush1.msra.mxu0 0.0
  %3982 = vmatprep.subr.mxu0 0.0
  %3983 = vmatpush1.msra.mxu0 0.0
  %3984 = vmatprep.subr.mxu0 0.0
  %3985 = vmatpush1.msra.mxu0 0.0
  %3986 = vmatprep.subr.mxu0 0.0
  %3987 = vmatpush1.msra.mxu0 0.0
  %3988 = vmatprep.subr.mxu0 0.0
  %3989 = vmatpush1.msra.mxu0 0.0
  %3990 = vmatprep.subr.mxu0 0.0
  %3991 = vmatpush1.msra.mxu0 0.0
  %3992 = vmatprep.subr.mxu0 0.0
  %3993 = vmatpush1.msra.mxu0 %v3625
  %3994 = vmatprep.subr.mxu0 0.0
  %3995 = vmatpush1.msra.mxu0 %v3624
  %3996 = vmatprep.subr.mxu0 0.0
  %3997 = vmatpush1.msra.mxu0 %v3623
  %3998 = vmatprep.subr.mxu0 0.0
  %3999 = vmatpush1.msra.mxu0 %v3622
  %4000 = vmatprep.subr.mxu0 0.0
  %4001 = vmatpush2.msra.mxu0 0.0
  %4002 = vmatprep.subr.mxu0 0.0
  %4003 = vmatpush2.msra.mxu0 0.0
  %4004 = vmatprep.subr.mxu0 0.0
  %4005 = vmatpush2.msra.mxu0 0.0
  %4006 = vmatprep.subr.mxu0 0.0
  %4007 = vmatpush2.msra.mxu0 0.0
  %4008 = vmatprep.subr.mxu0 0.0
  %4009 = vmatpush2.msra.mxu0 0.0
  %4010 = vmatprep.subr.mxu0 0.0
  %4011 = vmatpush2.msra.mxu0 0.0
  %4012 = vmatprep.subr.mxu0 0.0
  %4013 = vmatpush2.msra.mxu0 0.0
  %4014 = vmatprep.subr.mxu0 0.0
  %4015 = vmatpush2.msra.mxu0 0.0
  %4016 = vmatprep.subr.mxu0 0.0
  %4017 = vmatpush2.msra.mxu0 0.0
  %4018 = vmatprep.subr.mxu0 0.0
  %4019 = vmatpush2.msra.mxu0 0.0
  %4020 = vmatprep.subr.mxu0 0.0
  %4021 = vmatpush2.msra.mxu0 0.0
  %4022 = vmatprep.subr.mxu0 0.0
  %4023 = vmatpush2.msra.mxu0 0.0
  %4024 = vmatprep.subr.mxu0 0.0
  %4025 = vmatpush2.msra.mxu0 0.0
  %4026 = vmatprep.subr.mxu0 0.0
  %4027 = vmatpush2.msra.mxu0 0.0
  %4028 = vmatprep.subr.mxu0 0.0
  %4029 = vmatpush2.msra.mxu0 0.0
  %4030 = vmatprep.subr.mxu0 0.0
  %4031 = vmatpush2.msra.mxu0 0.0
  %4032 = vmatprep.mubr.f32.mxu0 0.0
  %4033 = vmatmul.mubr.f32.gmra.mxu0 %v3966
  %v4034 = vpop.f32.mrf.mxu0
  %v4035 = vadd.f32 %v3964, %v4034
  %v4036 = vpop.f32.mrf.mxu0
  %4037 = vdwg.mxu0
  %v4038 = vadd.f32 %v3519, %v4035
  %v4039 = vsel %vm346, %v4038, 0.0
  %4040 = vadd.xlane.f32.xlu0 %v4039
  %v4041 = vpop.xlane.xlu0 %4040
  %v4042 = vmul.f32 %v4041, %v359
  %v4043 = vsub.f32 %v4038, %v4042
  %v4044 = vmul.f32 %v4043, %v4043
  %v4045 = vsel %vm346, %v4044, 0.0
  %4046 = vadd.xlane.f32.xlu0 %v4045
  %v4047 = vpop.xlane.xlu0 %4046
  %v4048 = vmul.f32 %v4047, %v359
  %v4049 = vadd.f32 %v4048, 1e-05
  %v4050 = vrsqrt.pop %v4049
  %v4051 = vmul.f32 %v4043, %v4050
  %v4052 = vlaneseq
  %v4053 = vshrl.u32 %v4052, 7
  %v4054 = vsub.s32 2, %v4053
  %v4055 = vrot.slane %v3617, %v4054
  %v4056 = vmul.f32 %v4051, %v4055
  %v4057 = vlaneseq
  %v4058 = vshrl.u32 %v4057, 7
  %v4059 = vsub.s32 3, %v4058
  %v4060 = vrot.slane %v3617, %v4059
  %v4061 = vadd.f32 %v4056, %v4060
  %v4062 = vld [vmem:[%s12] sm:$0xff]
  %v4063 = vld [vmem:[%s12 + $0x8] sm:$0xff]
  %v4064 = vld [vmem:[%s12 + $0x10] sm:$0xff]
  %v4065 = vld [vmem:[%s12 + $0x18] sm:$0xff]
  %v4066 = vlaneseq
  %v4067 = vshrl.u32 %v4066, 7
  %v4068 = vsub.s32 4, %v4067
  %v4069 = vrot.slane %v3617, %v4068
  %v4071 = vsel %vm346, %v4061, 0
  %4073 = vmatprep.subr.mxu0 0.0
  %4074 = vmatpush1.msra.mxu0 0.0
  %4075 = vmatprep.subr.mxu0 0.0
  %4076 = vmatpush1.msra.mxu0 0.0
  %4077 = vmatprep.subr.mxu0 0.0
  %4078 = vmatpush1.msra.mxu0 0.0
  %4079 = vmatprep.subr.mxu0 0.0
  %4080 = vmatpush1.msra.mxu0 0.0
  %4081 = vmatprep.subr.mxu0 0.0
  %4082 = vmatpush1.msra.mxu0 0.0
  %4083 = vmatprep.subr.mxu0 0.0
  %4084 = vmatpush1.msra.mxu0 0.0
  %4085 = vmatprep.subr.mxu0 0.0
  %4086 = vmatpush1.msra.mxu0 0.0
  %4087 = vmatprep.subr.mxu0 0.0
  %4088 = vmatpush1.msra.mxu0 0.0
  %4089 = vmatprep.subr.mxu0 0.0
  %4090 = vmatpush1.msra.mxu0 0.0
  %4091 = vmatprep.subr.mxu0 0.0
  %4092 = vmatpush1.msra.mxu0 0.0
  %4093 = vmatprep.subr.mxu0 0.0
  %4094 = vmatpush1.msra.mxu0 0.0
  %4095 = vmatprep.subr.mxu0 0.0
  %4096 = vmatpush1.msra.mxu0 0.0
  %4097 = vmatprep.subr.mxu0 0.0
  %4098 = vmatpush1.msra.mxu0 %v4065
  %4099 = vmatprep.subr.mxu0 0.0
  %4100 = vmatpush1.msra.mxu0 %v4064
  %4101 = vmatprep.subr.mxu0 0.0
  %4102 = vmatpush1.msra.mxu0 %v4063
  %4103 = vmatprep.subr.mxu0 0.0
  %4104 = vmatpush1.msra.mxu0 %v4062
  %4105 = vmatprep.subr.mxu0 0.0
  %4106 = vmatpush2.msra.mxu0 0.0
  %4107 = vmatprep.subr.mxu0 0.0
  %4108 = vmatpush2.msra.mxu0 0.0
  %4109 = vmatprep.subr.mxu0 0.0
  %4110 = vmatpush2.msra.mxu0 0.0
  %4111 = vmatprep.subr.mxu0 0.0
  %4112 = vmatpush2.msra.mxu0 0.0
  %4113 = vmatprep.subr.mxu0 0.0
  %4114 = vmatpush2.msra.mxu0 0.0
  %4115 = vmatprep.subr.mxu0 0.0
  %4116 = vmatpush2.msra.mxu0 0.0
  %4117 = vmatprep.subr.mxu0 0.0
  %4118 = vmatpush2.msra.mxu0 0.0
  %4119 = vmatprep.subr.mxu0 0.0
  %4120 = vmatpush2.msra.mxu0 0.0
  %4121 = vmatprep.subr.mxu0 0.0
  %4122 = vmatpush2.msra.mxu0 0.0
  %4123 = vmatprep.subr.mxu0 0.0
  %4124 = vmatpush2.msra.mxu0 0.0
  %4125 = vmatprep.subr.mxu0 0.0
  %4126 = vmatpush2.msra.mxu0 0.0
  %4127 = vmatprep.subr.mxu0 0.0
  %4128 = vmatpush2.msra.mxu0 0.0
  %4129 = vmatprep.subr.mxu0 0.0
  %4130 = vmatpush2.msra.mxu0 0.0
  %4131 = vmatprep.subr.mxu0 0.0
  %4132 = vmatpush2.msra.mxu0 0.0
  %4133 = vmatprep.subr.mxu0 0.0
  %4134 = vmatpush2.msra.mxu0 0.0
  %4135 = vmatprep.subr.mxu0 0.0
  %4136 = vmatpush2.msra.mxu0 0.0
  %4137 = vmatprep.mubr.f32.mxu0 0.0
  %4138 = vmatmul.mubr.f32.gmra.mxu0 %v4071
  %v4139 = vpop.f32.mrf.mxu0
  %v4140 = vadd.f32 %v4069, %v4139
  %v4141 = vpop.f32.mrf.mxu0
  %4142 = vdwg.mxu0
  %v4143 = vmax.f32 %v4140, 0.0
  %v4144 = vld [vmem:[%s13] sm:$0xff]
  %v4145 = vld [vmem:[%s13 + $0x8] sm:$0xff]
  %v4146 = vld [vmem:[%s13 + $0x10] sm:$0xff]
  %v4147 = vld [vmem:[%s13 + $0x18] sm:$0xff]
  %v4148 = vld [vmem:[%s13 + $0x20] sm:$0xff]
  %v4149 = vld [vmem:[%s13 + $0x28] sm:$0xff]
  %v4150 = vld [vmem:[%s13 + $0x30] sm:$0xff]
  %v4151 = vld [vmem:[%s13 + $0x38] sm:$0xff]
  %v4152 = vlaneseq
  %v4153 = vshrl.u32 %v4152, 7
  %v4154 = vsub.s32 5, %v4153
  %v4155 = vrot.slane %v3617, %v4154
  %v4157 = vsel %vm1935, %v4143, 0
  %4159 = vmatprep.subr.mxu0 0.0
  %4160 = vmatpush1.msra.mxu0 0.0
  %4161 = vmatprep.subr.mxu0 0.0
  %4162 = vmatpush1.msra.mxu0 0.0
  %4163 = vmatprep.subr.mxu0 0.0
  %4164 = vmatpush1.msra.mxu0 0.0
  %4165 = vmatprep.subr.mxu0 0.0
  %4166 = vmatpush1.msra.mxu0 0.0
  %4167 = vmatprep.subr.mxu0 0.0
  %4168 = vmatpush1.msra.mxu0 0.0
  %4169 = vmatprep.subr.mxu0 0.0
  %4170 = vmatpush1.msra.mxu0 0.0
  %4171 = vmatprep.subr.mxu0 0.0
  %4172 = vmatpush1.msra.mxu0 0.0
  %4173 = vmatprep.subr.mxu0 0.0
  %4174 = vmatpush1.msra.mxu0 0.0
  %4175 = vmatprep.subr.mxu0 0.0
  %4176 = vmatpush1.msra.mxu0 %v4151
  %4177 = vmatprep.subr.mxu0 0.0
  %4178 = vmatpush1.msra.mxu0 %v4150
  %4179 = vmatprep.subr.mxu0 0.0
  %4180 = vmatpush1.msra.mxu0 %v4149
  %4181 = vmatprep.subr.mxu0 0.0
  %4182 = vmatpush1.msra.mxu0 %v4148
  %4183 = vmatprep.subr.mxu0 0.0
  %4184 = vmatpush1.msra.mxu0 %v4147
  %4185 = vmatprep.subr.mxu0 0.0
  %4186 = vmatpush1.msra.mxu0 %v4146
  %4187 = vmatprep.subr.mxu0 0.0
  %4188 = vmatpush1.msra.mxu0 %v4145
  %4189 = vmatprep.subr.mxu0 0.0
  %4190 = vmatpush1.msra.mxu0 %v4144
  %4191 = vmatprep.subr.mxu0 0.0
  %4192 = vmatpush2.msra.mxu0 0.0
  %4193 = vmatprep.subr.mxu0 0.0
  %4194 = vmatpush2.msra.mxu0 0.0
  %4195 = vmatprep.subr.mxu0 0.0
  %4196 = vmatpush2.msra.mxu0 0.0
  %4197 = vmatprep.subr.mxu0 0.0
  %4198 = vmatpush2.msra.mxu0 0.0
  %4199 = vmatprep.subr.mxu0 0.0
  %4200 = vmatpush2.msra.mxu0 0.0
  %4201 = vmatprep.subr.mxu0 0.0
  %4202 = vmatpush2.msra.mxu0 0.0
  %4203 = vmatprep.subr.mxu0 0.0
  %4204 = vmatpush2.msra.mxu0 0.0
  %4205 = vmatprep.subr.mxu0 0.0
  %4206 = vmatpush2.msra.mxu0 0.0
  %4207 = vmatprep.subr.mxu0 0.0
  %4208 = vmatpush2.msra.mxu0 0.0
  %4209 = vmatprep.subr.mxu0 0.0
  %4210 = vmatpush2.msra.mxu0 0.0
  %4211 = vmatprep.subr.mxu0 0.0
  %4212 = vmatpush2.msra.mxu0 0.0
  %4213 = vmatprep.subr.mxu0 0.0
  %4214 = vmatpush2.msra.mxu0 0.0
  %4215 = vmatprep.subr.mxu0 0.0
  %4216 = vmatpush2.msra.mxu0 0.0
  %4217 = vmatprep.subr.mxu0 0.0
  %4218 = vmatpush2.msra.mxu0 0.0
  %4219 = vmatprep.subr.mxu0 0.0
  %4220 = vmatpush2.msra.mxu0 0.0
  %4221 = vmatprep.subr.mxu0 0.0
  %4222 = vmatpush2.msra.mxu0 0.0
  %4223 = vmatprep.mubr.f32.mxu0 0.0
  %4224 = vmatmul.mubr.f32.gmra.mxu0 %v4157
  %v4225 = vpop.f32.mrf.mxu0
  %v4226 = vadd.f32 %v4155, %v4225
  %v4227 = vpop.f32.mrf.mxu0
  %4228 = vdwg.mxu0
  %v4229 = vadd.f32 %v4061, %v4226
  %v4230 = vsel %vm346, %v4229, 0.0
  %4231 = vadd.xlane.f32.xlu0 %v4230
  %v4232 = vpop.xlane.xlu0 %4231
  %v4233 = vmul.f32 %v4232, %v359
  %v4234 = vsub.f32 %v4229, %v4233
  %v4235 = vmul.f32 %v4234, %v4234
  %v4236 = vsel %vm346, %v4235, 0.0
  %4237 = vadd.xlane.f32.xlu0 %v4236
  %v4238 = vpop.xlane.xlu0 %4237
  %v4239 = vmul.f32 %v4238, %v359
  %v4240 = vadd.f32 %v4239, 1e-05
  %v4241 = vrsqrt.pop %v4240
  %v4242 = vmul.f32 %v4234, %v4241
  %v4243 = vlaneseq
  %v4244 = vshrl.u32 %v4243, 7
  %v4245 = vsub.s32 6, %v4244
  %v4246 = vrot.slane %v3617, %v4245
  %v4247 = vmul.f32 %v4242, %v4246
  %v4248 = vlaneseq
  %v4249 = vshrl.u32 %v4248, 7
  %v4250 = vsub.s32 7, %v4249
  %v4251 = vrot.slane %v3617, %v4250
  %v4252 = vadd.f32 %v4247, %v4251
  %s4253 = scalar_lea.vmem %s14, 8
  %v4254 = vld [vmem:[%s4253] sm:$0xff]
  %s4255 = scalar_lea.vmem %s10, 32
  %v4256 = vld [vmem:[%s4255] sm:$0xff]
  %v4257 = vld [vmem:[%s4255 + $0x8] sm:$0xff]
  %v4258 = vld [vmem:[%s4255 + $0x10] sm:$0xff]
  %v4259 = vld [vmem:[%s4255 + $0x18] sm:$0xff]
  %s4260 = scalar_lea.vmem %s11, 32
  %v4261 = vld [vmem:[%s4260] sm:$0xff]
  %v4262 = vld [vmem:[%s4260 + $0x8] sm:$0xff]
  %v4263 = vld [vmem:[%s4260 + $0x10] sm:$0xff]
  %v4264 = vld [vmem:[%s4260 + $0x18] sm:$0xff]
  %v4265 = vlaneseq
  %v4266 = vshrl.u32 %v4265, 7
  %v4267 = vsub.s32 0, %v4266
  %v4268 = vrot.slane %v4254, %v4267
  %v4270 = vsel %vm346, %v4252, 0
  %4272 = vmatprep.subr.mxu0 0.0
  %4273 = vmatpush1.msra.mxu0 0.0
  %4274 = vmatprep.subr.mxu0 0.0
  %4275 = vmatpush1.msra.mxu0 0.0
  %4276 = vmatprep.subr.mxu0 0.0
  %4277 = vmatpush1.msra.mxu0 0.0
  %4278 = vmatprep.subr.mxu0 0.0
  %4279 = vmatpush1.msra.mxu0 0.0
  %4280 = vmatprep.subr.mxu0 0.0
  %4281 = vmatpush1.msra.mxu0 0.0
  %4282 = vmatprep.subr.mxu0 0.0
  %4283 = vmatpush1.msra.mxu0 0.0
  %4284 = vmatprep.subr.mxu0 0.0
  %4285 = vmatpush1.msra.mxu0 0.0
  %4286 = vmatprep.subr.mxu0 0.0
  %4287 = vmatpush1.msra.mxu0 0.0
  %4288 = vmatprep.subr.mxu0 0.0
  %4289 = vmatpush1.msra.mxu0 0.0
  %4290 = vmatprep.subr.mxu0 0.0
  %4291 = vmatpush1.msra.mxu0 0.0
  %4292 = vmatprep.subr.mxu0 0.0
  %4293 = vmatpush1.msra.mxu0 0.0
  %4294 = vmatprep.subr.mxu0 0.0
  %4295 = vmatpush1.msra.mxu0 0.0
  %4296 = vmatprep.subr.mxu0 0.0
  %4297 = vmatpush1.msra.mxu0 %v4259
  %4298 = vmatprep.subr.mxu0 0.0
  %4299 = vmatpush1.msra.mxu0 %v4258
  %4300 = vmatprep.subr.mxu0 0.0
  %4301 = vmatpush1.msra.mxu0 %v4257
  %4302 = vmatprep.subr.mxu0 0.0
  %4303 = vmatpush1.msra.mxu0 %v4256
  %4304 = vmatprep.subr.mxu0 0.0
  %4305 = vmatpush2.msra.mxu0 0.0
  %4306 = vmatprep.subr.mxu0 0.0
  %4307 = vmatpush2.msra.mxu0 0.0
  %4308 = vmatprep.subr.mxu0 0.0
  %4309 = vmatpush2.msra.mxu0 0.0
  %4310 = vmatprep.subr.mxu0 0.0
  %4311 = vmatpush2.msra.mxu0 0.0
  %4312 = vmatprep.subr.mxu0 0.0
  %4313 = vmatpush2.msra.mxu0 0.0
  %4314 = vmatprep.subr.mxu0 0.0
  %4315 = vmatpush2.msra.mxu0 0.0
  %4316 = vmatprep.subr.mxu0 0.0
  %4317 = vmatpush2.msra.mxu0 0.0
  %4318 = vmatprep.subr.mxu0 0.0
  %4319 = vmatpush2.msra.mxu0 0.0
  %4320 = vmatprep.subr.mxu0 0.0
  %4321 = vmatpush2.msra.mxu0 0.0
  %4322 = vmatprep.subr.mxu0 0.0
  %4323 = vmatpush2.msra.mxu0 0.0
  %4324 = vmatprep.subr.mxu0 0.0
  %4325 = vmatpush2.msra.mxu0 0.0
  %4326 = vmatprep.subr.mxu0 0.0
  %4327 = vmatpush2.msra.mxu0 0.0
  %4328 = vmatprep.subr.mxu0 0.0
  %4329 = vmatpush2.msra.mxu0 0.0
  %4330 = vmatprep.subr.mxu0 0.0
  %4331 = vmatpush2.msra.mxu0 0.0
  %4332 = vmatprep.subr.mxu0 0.0
  %4333 = vmatpush2.msra.mxu0 0.0
  %4334 = vmatprep.subr.mxu0 0.0
  %4335 = vmatpush2.msra.mxu0 0.0
  %4336 = vmatprep.mubr.f32.mxu0 0.0
  %4337 = vmatmul.mubr.f32.gmra.mxu0 %v4270
  %v4338 = vpop.f32.mrf.mxu0
  %v4339 = vadd.f32 %v4268, %v4338
  %v4340 = vpop.f32.mrf.mxu0
  %4341 = vdwg.mxu0
  %v4342 = vmul.f32 %v4339, %v3612
  %v4343 = vmul.f32 %v4339, %v3613
  %v4344 = vmul.f32 %v4339, %v3614
  %v4345 = vmul.f32 %v4339, %v3615
  %4347 = vrot.lane.b32.xlu0 %v4339, 96
  %v4348 = vpop.permute.xlu0 %4347
  %v4350 = vsel %vm346, %v4342, 0
  %v4353 = vsel %vm346, %v4343, 0
  %v4356 = vsel %vm346, %v4344, 0
  %v4359 = vsel %vm346, %v4345, 0
  %v4361 = vsel %vm346, %v4348, 0
  %4363 = vmatprep.subr.mxu0 0.0
  %4364 = vmatpush1.xpose.msra.mxu0 0.0
  %4365 = vmatprep.subr.mxu0 0.0
  %4366 = vmatpush1.xpose.msra.mxu0 0.0
  %4367 = vmatprep.subr.mxu0 0.0
  %4368 = vmatpush1.xpose.msra.mxu0 0.0
  %4369 = vmatprep.subr.mxu0 0.0
  %4370 = vmatpush1.xpose.msra.mxu0 0.0
  %4371 = vmatprep.subr.mxu0 0.0
  %4372 = vmatpush1.xpose.msra.mxu0 0.0
  %4373 = vmatprep.subr.mxu0 0.0
  %4374 = vmatpush1.xpose.msra.mxu0 0.0
  %4375 = vmatprep.subr.mxu0 0.0
  %4376 = vmatpush1.xpose.msra.mxu0 0.0
  %4377 = vmatprep.subr.mxu0 0.0
  %4378 = vmatpush1.xpose.msra.mxu0 0.0
  %4379 = vmatprep.subr.mxu0 0.0
  %4380 = vmatpush1.xpose.msra.mxu0 0.0
  %4381 = vmatprep.subr.mxu0 0.0
  %4382 = vmatpush1.xpose.msra.mxu0 0.0
  %4383 = vmatprep.subr.mxu0 0.0
  %4384 = vmatpush1.xpose.msra.mxu0 0.0
  %4385 = vmatprep.subr.mxu0 0.0
  %4386 = vmatpush1.xpose.msra.mxu0 0.0
  %4387 = vmatprep.subr.mxu0 0.0
  %4388 = vmatpush1.xpose.msra.mxu0 0.0
  %4389 = vmatprep.subr.mxu0 0.0
  %4390 = vmatpush1.xpose.msra.mxu0 0.0
  %4391 = vmatprep.subr.mxu0 0.0
  %4392 = vmatpush1.xpose.msra.mxu0 0.0
  %4393 = vmatprep.subr.mxu0 0.0
  %4394 = vmatpush1.xpose.msra.mxu0 %v4361
  %4395 = vmatprep.subr.mxu0 0.0
  %4396 = vmatpush2.xpose.msra.mxu0 0.0
  %4397 = vmatprep.subr.mxu0 0.0
  %4398 = vmatpush2.xpose.msra.mxu0 0.0
  %4399 = vmatprep.subr.mxu0 0.0
  %4400 = vmatpush2.xpose.msra.mxu0 0.0
  %4401 = vmatprep.subr.mxu0 0.0
  %4402 = vmatpush2.xpose.msra.mxu0 0.0
  %4403 = vmatprep.subr.mxu0 0.0
  %4404 = vmatpush2.xpose.msra.mxu0 0.0
  %4405 = vmatprep.subr.mxu0 0.0
  %4406 = vmatpush2.xpose.msra.mxu0 0.0
  %4407 = vmatprep.subr.mxu0 0.0
  %4408 = vmatpush2.xpose.msra.mxu0 0.0
  %4409 = vmatprep.subr.mxu0 0.0
  %4410 = vmatpush2.xpose.msra.mxu0 0.0
  %4411 = vmatprep.subr.mxu0 0.0
  %4412 = vmatpush2.xpose.msra.mxu0 0.0
  %4413 = vmatprep.subr.mxu0 0.0
  %4414 = vmatpush2.xpose.msra.mxu0 0.0
  %4415 = vmatprep.subr.mxu0 0.0
  %4416 = vmatpush2.xpose.msra.mxu0 0.0
  %4417 = vmatprep.subr.mxu0 0.0
  %4418 = vmatpush2.xpose.msra.mxu0 0.0
  %4419 = vmatprep.subr.mxu0 0.0
  %4420 = vmatpush2.xpose.msra.mxu0 0.0
  %4421 = vmatprep.subr.mxu0 0.0
  %4422 = vmatpush2.xpose.msra.mxu0 0.0
  %4423 = vmatprep.subr.mxu0 0.0
  %4424 = vmatpush2.xpose.msra.mxu0 0.0
  %4425 = vmatprep.subr.mxu0 0.0
  %4426 = vmatpush2.xpose.msra.mxu0 0.0
  %4427 = vmatprep.mubr.f32.mxu0 0.0
  %4428 = vmatmul.mubr.f32.gmra.mxu0 %v4350
  %v4429 = vpop.f32.mrf.mxu0
  %v4430 = vadd.f32 %v3616, %v4429
  %v4431 = vpop.f32.mrf.mxu0
  %4432 = vmatprep.mubr.f32.mxu0 0.0
  %4433 = vmatmul.mubr.f32.gmra.mxu0 %v4353
  %v4434 = vpop.f32.mrf.mxu0
  %v4435 = vadd.f32 %v3616, %v4434
  %v4436 = vpop.f32.mrf.mxu0
  %4437 = vmatprep.mubr.f32.mxu0 0.0
  %4438 = vmatmul.mubr.f32.gmra.mxu0 %v4356
  %v4439 = vpop.f32.mrf.mxu0
  %v4440 = vadd.f32 %v3616, %v4439
  %v4441 = vpop.f32.mrf.mxu0
  %4442 = vmatprep.mubr.f32.mxu0 0.0
  %4443 = vmatmul.mubr.f32.gmra.mxu0 %v4359
  %v4444 = vpop.f32.mrf.mxu0
  %v4445 = vadd.f32 %v3616, %v4444
  %v4446 = vpop.f32.mrf.mxu0
  %4447 = vdwg.mxu0
  %v4448 = vsel %vm3809, %v4430, -inf
  %4449 = vmax.xlane.f32.xlu0 %v4448
  %v4450 = vpop.xlane.xlu0 %4449
  %v4451 = vsel %vm3809, %v4435, -inf
  %4452 = vmax.xlane.f32.xlu0 %v4451
  %v4453 = vpop.xlane.xlu0 %4452
  %v4454 = vsel %vm3809, %v4440, -inf
  %4455 = vmax.xlane.f32.xlu0 %v4454
  %v4456 = vpop.xlane.xlu0 %4455
  %v4457 = vsel %vm3809, %v4445, -inf
  %4458 = vmax.xlane.f32.xlu0 %v4457
  %v4459 = vpop.xlane.xlu0 %4458
  %v4460 = vsub.f32 %v4430, %v4450
  %v4461 = vsub.f32 %v4435, %v4453
  %v4462 = vsub.f32 %v4440, %v4456
  %v4463 = vsub.f32 %v4445, %v4459
  %v4464 = vmul.f32 %v4460, 1.442695
  %v4465 = vpow.pop %v4464
  %v4466 = vmul.f32 %v4461, 1.442695
  %v4467 = vpow.pop %v4466
  %v4468 = vmul.f32 %v4462, 1.442695
  %v4469 = vpow.pop %v4468
  %v4470 = vmul.f32 %v4463, 1.442695
  %v4471 = vpow.pop %v4470
  %v4472 = vsel %vm3809, %v4465, 0.0
  %4473 = vadd.xlane.f32.xlu0 %v4472
  %v4474 = vpop.xlane.xlu0 %4473
  %v4475 = vsel %vm3809, %v4467, 0.0
  %4476 = vadd.xlane.f32.xlu0 %v4475
  %v4477 = vpop.xlane.xlu0 %4476
  %v4478 = vsel %vm3809, %v4469, 0.0
  %4479 = vadd.xlane.f32.xlu0 %v4478
  %v4480 = vpop.xlane.xlu0 %4479
  %v4481 = vsel %vm3809, %v4471, 0.0
  %4482 = vadd.xlane.f32.xlu0 %v4481
  %v4483 = vpop.xlane.xlu0 %4482
  %v4484 = vrcp.pop %v4474
  %v4485 = vrcp.pop %v4477
  %v4486 = vrcp.pop %v4480
  %v4487 = vrcp.pop %v4483
  %v4488 = vmul.f32 %v4465, %v4484
  %v4489 = vmul.f32 %v4467, %v4485
  %v4490 = vmul.f32 %v4469, %v4486
  %v4491 = vmul.f32 %v4471, %v4487
  %4492 = vrot.lane.b32.xlu0 %v4339, 64
  %v4493 = vpop.permute.xlu0 %4492
  %v4496 = vsel %vm3809, %v4488, 0
  %v4499 = vsel %vm3809, %v4489, 0
  %v4502 = vsel %vm3809, %v4490, 0
  %v4505 = vsel %vm3809, %v4491, 0
  %4507 = vmatprep.subr.mxu0 0.0
  %4508 = vmatpush1.msra.mxu0 0.0
  %4509 = vmatprep.subr.mxu0 0.0
  %4510 = vmatpush1.msra.mxu0 0.0
  %4511 = vmatprep.subr.mxu0 0.0
  %4512 = vmatpush1.msra.mxu0 0.0
  %4513 = vmatprep.subr.mxu0 0.0
  %4514 = vmatpush1.msra.mxu0 0.0
  %4515 = vmatprep.subr.mxu0 0.0
  %4516 = vmatpush1.msra.mxu0 0.0
  %4517 = vmatprep.subr.mxu0 0.0
  %4518 = vmatpush1.msra.mxu0 0.0
  %4519 = vmatprep.subr.mxu0 0.0
  %4520 = vmatpush1.msra.mxu0 0.0
  %4521 = vmatprep.subr.mxu0 0.0
  %4522 = vmatpush1.msra.mxu0 0.0
  %4523 = vmatprep.subr.mxu0 0.0
  %4524 = vmatpush1.msra.mxu0 0.0
  %4525 = vmatprep.subr.mxu0 0.0
  %4526 = vmatpush1.msra.mxu0 0.0
  %4527 = vmatprep.subr.mxu0 0.0
  %4528 = vmatpush1.msra.mxu0 0.0
  %4529 = vmatprep.subr.mxu0 0.0
  %4530 = vmatpush1.msra.mxu0 0.0
  %4531 = vmatprep.subr.mxu0 0.0
  %4532 = vmatpush1.msra.mxu0 0.0
  %4533 = vmatprep.subr.mxu0 0.0
  %4534 = vmatpush1.msra.mxu0 0.0
  %4535 = vmatprep.subr.mxu0 0.0
  %4536 = vmatpush1.msra.mxu0 0.0
  %4537 = vmatprep.subr.mxu0 0.0
  %4538 = vmatpush1.msra.mxu0 %v4493
  %4539 = vmatprep.subr.mxu0 0.0
  %4540 = vmatpush2.msra.mxu0 0.0
  %4541 = vmatprep.subr.mxu0 0.0
  %4542 = vmatpush2.msra.mxu0 0.0
  %4543 = vmatprep.subr.mxu0 0.0
  %4544 = vmatpush2.msra.mxu0 0.0
  %4545 = vmatprep.subr.mxu0 0.0
  %4546 = vmatpush2.msra.mxu0 0.0
  %4547 = vmatprep.subr.mxu0 0.0
  %4548 = vmatpush2.msra.mxu0 0.0
  %4549 = vmatprep.subr.mxu0 0.0
  %4550 = vmatpush2.msra.mxu0 0.0
  %4551 = vmatprep.subr.mxu0 0.0
  %4552 = vmatpush2.msra.mxu0 0.0
  %4553 = vmatprep.subr.mxu0 0.0
  %4554 = vmatpush2.msra.mxu0 0.0
  %4555 = vmatprep.subr.mxu0 0.0
  %4556 = vmatpush2.msra.mxu0 0.0
  %4557 = vmatprep.subr.mxu0 0.0
  %4558 = vmatpush2.msra.mxu0 0.0
  %4559 = vmatprep.subr.mxu0 0.0
  %4560 = vmatpush2.msra.mxu0 0.0
  %4561 = vmatprep.subr.mxu0 0.0
  %4562 = vmatpush2.msra.mxu0 0.0
  %4563 = vmatprep.subr.mxu0 0.0
  %4564 = vmatpush2.msra.mxu0 0.0
  %4565 = vmatprep.subr.mxu0 0.0
  %4566 = vmatpush2.msra.mxu0 0.0
  %4567 = vmatprep.subr.mxu0 0.0
  %4568 = vmatpush2.msra.mxu0 0.0
  %4569 = vmatprep.subr.mxu0 0.0
  %4570 = vmatpush2.msra.mxu0 0.0
  %4571 = vmatprep.mubr.f32.mxu0 0.0
  %4572 = vmatmul.mubr.f32.gmra.mxu0 %v4496
  %v4573 = vpop.f32.mrf.mxu0
  %v4574 = vadd.f32 0.0, %v4573
  %v4575 = vpop.f32.mrf.mxu0
  %4576 = vmatprep.mubr.f32.mxu0 0.0
  %4577 = vmatmul.mubr.f32.gmra.mxu0 %v4499
  %v4578 = vpop.f32.mrf.mxu0
  %v4579 = vadd.f32 0.0, %v4578
  %v4580 = vpop.f32.mrf.mxu0
  %4581 = vmatprep.mubr.f32.mxu0 0.0
  %4582 = vmatmul.mubr.f32.gmra.mxu0 %v4502
  %v4583 = vpop.f32.mrf.mxu0
  %v4584 = vadd.f32 0.0, %v4583
  %v4585 = vpop.f32.mrf.mxu0
  %4586 = vmatprep.mubr.f32.mxu0 0.0
  %4587 = vmatmul.mubr.f32.gmra.mxu0 %v4505
  %v4588 = vpop.f32.mrf.mxu0
  %v4589 = vadd.f32 0.0, %v4588
  %v4590 = vpop.f32.mrf.mxu0
  %4591 = vdwg.mxu0
  %v4592 = vmul.f32 %v4574, %v3608
  %v4593 = vmul.f32 %v4579, %v3609
  %v4594 = vmul.f32 %v4584, %v3610
  %v4595 = vmul.f32 %v4589, %v3611
  %v4596 = vadd.f32 %v4592, %v4593
  %v4597 = vadd.f32 %v4596, %v4594
  %v4598 = vadd.f32 %v4597, %v4595
  %v4599 = vlaneseq
  %v4600 = vshrl.u32 %v4599, 7
  %v4601 = vsub.s32 1, %v4600
  %v4602 = vrot.slane %v4254, %v4601
  %v4604 = vsel %vm346, %v4598, 0
  %4606 = vmatprep.subr.mxu0 0.0
  %4607 = vmatpush1.msra.mxu0 0.0
  %4608 = vmatprep.subr.mxu0 0.0
  %4609 = vmatpush1.msra.mxu0 0.0
  %4610 = vmatprep.subr.mxu0 0.0
  %4611 = vmatpush1.msra.mxu0 0.0
  %4612 = vmatprep.subr.mxu0 0.0
  %4613 = vmatpush1.msra.mxu0 0.0
  %4614 = vmatprep.subr.mxu0 0.0
  %4615 = vmatpush1.msra.mxu0 0.0
  %4616 = vmatprep.subr.mxu0 0.0
  %4617 = vmatpush1.msra.mxu0 0.0
  %4618 = vmatprep.subr.mxu0 0.0
  %4619 = vmatpush1.msra.mxu0 0.0
  %4620 = vmatprep.subr.mxu0 0.0
  %4621 = vmatpush1.msra.mxu0 0.0
  %4622 = vmatprep.subr.mxu0 0.0
  %4623 = vmatpush1.msra.mxu0 0.0
  %4624 = vmatprep.subr.mxu0 0.0
  %4625 = vmatpush1.msra.mxu0 0.0
  %4626 = vmatprep.subr.mxu0 0.0
  %4627 = vmatpush1.msra.mxu0 0.0
  %4628 = vmatprep.subr.mxu0 0.0
  %4629 = vmatpush1.msra.mxu0 0.0
  %4630 = vmatprep.subr.mxu0 0.0
  %4631 = vmatpush1.msra.mxu0 %v4264
  %4632 = vmatprep.subr.mxu0 0.0
  %4633 = vmatpush1.msra.mxu0 %v4263
  %4634 = vmatprep.subr.mxu0 0.0
  %4635 = vmatpush1.msra.mxu0 %v4262
  %4636 = vmatprep.subr.mxu0 0.0
  %4637 = vmatpush1.msra.mxu0 %v4261
  %4638 = vmatprep.subr.mxu0 0.0
  %4639 = vmatpush2.msra.mxu0 0.0
  %4640 = vmatprep.subr.mxu0 0.0
  %4641 = vmatpush2.msra.mxu0 0.0
  %4642 = vmatprep.subr.mxu0 0.0
  %4643 = vmatpush2.msra.mxu0 0.0
  %4644 = vmatprep.subr.mxu0 0.0
  %4645 = vmatpush2.msra.mxu0 0.0
  %4646 = vmatprep.subr.mxu0 0.0
  %4647 = vmatpush2.msra.mxu0 0.0
  %4648 = vmatprep.subr.mxu0 0.0
  %4649 = vmatpush2.msra.mxu0 0.0
  %4650 = vmatprep.subr.mxu0 0.0
  %4651 = vmatpush2.msra.mxu0 0.0
  %4652 = vmatprep.subr.mxu0 0.0
  %4653 = vmatpush2.msra.mxu0 0.0
  %4654 = vmatprep.subr.mxu0 0.0
  %4655 = vmatpush2.msra.mxu0 0.0
  %4656 = vmatprep.subr.mxu0 0.0
  %4657 = vmatpush2.msra.mxu0 0.0
  %4658 = vmatprep.subr.mxu0 0.0
  %4659 = vmatpush2.msra.mxu0 0.0
  %4660 = vmatprep.subr.mxu0 0.0
  %4661 = vmatpush2.msra.mxu0 0.0
  %4662 = vmatprep.subr.mxu0 0.0
  %4663 = vmatpush2.msra.mxu0 0.0
  %4664 = vmatprep.subr.mxu0 0.0
  %4665 = vmatpush2.msra.mxu0 0.0
  %4666 = vmatprep.subr.mxu0 0.0
  %4667 = vmatpush2.msra.mxu0 0.0
  %4668 = vmatprep.subr.mxu0 0.0
  %4669 = vmatpush2.msra.mxu0 0.0
  %4670 = vmatprep.mubr.f32.mxu0 0.0
  %4671 = vmatmul.mubr.f32.gmra.mxu0 %v4604
  %v4672 = vpop.f32.mrf.mxu0
  %v4673 = vadd.f32 %v4602, %v4672
  %v4674 = vpop.f32.mrf.mxu0
  %4675 = vdwg.mxu0
  %v4676 = vadd.f32 %v4252, %v4673
  %v4677 = vsel %vm346, %v4676, 0.0
  %4678 = vadd.xlane.f32.xlu0 %v4677
  %v4679 = vpop.xlane.xlu0 %4678
  %v4680 = vmul.f32 %v4679, %v359
  %v4681 = vsub.f32 %v4676, %v4680
  %v4682 = vmul.f32 %v4681, %v4681
  %v4683 = vsel %vm346, %v4682, 0.0
  %4684 = vadd.xlane.f32.xlu0 %v4683
  %v4685 = vpop.xlane.xlu0 %4684
  %v4686 = vmul.f32 %v4685, %v359
  %v4687 = vadd.f32 %v4686, 1e-05
  %v4688 = vrsqrt.pop %v4687
  %v4689 = vmul.f32 %v4681, %v4688
  %v4690 = vlaneseq
  %v4691 = vshrl.u32 %v4690, 7
  %v4692 = vsub.s32 2, %v4691
  %v4693 = vrot.slane %v4254, %v4692
  %v4694 = vmul.f32 %v4689, %v4693
  %v4695 = vlaneseq
  %v4696 = vshrl.u32 %v4695, 7
  %v4697 = vsub.s32 3, %v4696
  %v4698 = vrot.slane %v4254, %v4697
  %v4699 = vadd.f32 %v4694, %v4698
  %s4700 = scalar_lea.vmem %s12, 32
  %v4701 = vld [vmem:[%s4700] sm:$0xff]
  %v4702 = vld [vmem:[%s4700 + $0x8] sm:$0xff]
  %v4703 = vld [vmem:[%s4700 + $0x10] sm:$0xff]
  %v4704 = vld [vmem:[%s4700 + $0x18] sm:$0xff]
  %v4705 = vlaneseq
  %v4706 = vshrl.u32 %v4705, 7
  %v4707 = vsub.s32 4, %v4706
  %v4708 = vrot.slane %v4254, %v4707
  %v4710 = vsel %vm346, %v4699, 0
  %4712 = vmatprep.subr.mxu0 0.0
  %4713 = vmatpush1.msra.mxu0 0.0
  %4714 = vmatprep.subr.mxu0 0.0
  %4715 = vmatpush1.msra.mxu0 0.0
  %4716 = vmatprep.subr.mxu0 0.0
  %4717 = vmatpush1.msra.mxu0 0.0
  %4718 = vmatprep.subr.mxu0 0.0
  %4719 = vmatpush1.msra.mxu0 0.0
  %4720 = vmatprep.subr.mxu0 0.0
  %4721 = vmatpush1.msra.mxu0 0.0
  %4722 = vmatprep.subr.mxu0 0.0
  %4723 = vmatpush1.msra.mxu0 0.0
  %4724 = vmatprep.subr.mxu0 0.0
  %4725 = vmatpush1.msra.mxu0 0.0
  %4726 = vmatprep.subr.mxu0 0.0
  %4727 = vmatpush1.msra.mxu0 0.0
  %4728 = vmatprep.subr.mxu0 0.0
  %4729 = vmatpush1.msra.mxu0 0.0
  %4730 = vmatprep.subr.mxu0 0.0
  %4731 = vmatpush1.msra.mxu0 0.0
  %4732 = vmatprep.subr.mxu0 0.0
  %4733 = vmatpush1.msra.mxu0 0.0
  %4734 = vmatprep.subr.mxu0 0.0
  %4735 = vmatpush1.msra.mxu0 0.0
  %4736 = vmatprep.subr.mxu0 0.0
  %4737 = vmatpush1.msra.mxu0 %v4704
  %4738 = vmatprep.subr.mxu0 0.0
  %4739 = vmatpush1.msra.mxu0 %v4703
  %4740 = vmatprep.subr.mxu0 0.0
  %4741 = vmatpush1.msra.mxu0 %v4702
  %4742 = vmatprep.subr.mxu0 0.0
  %4743 = vmatpush1.msra.mxu0 %v4701
  %4744 = vmatprep.subr.mxu0 0.0
  %4745 = vmatpush2.msra.mxu0 0.0
  %4746 = vmatprep.subr.mxu0 0.0
  %4747 = vmatpush2.msra.mxu0 0.0
  %4748 = vmatprep.subr.mxu0 0.0
  %4749 = vmatpush2.msra.mxu0 0.0
  %4750 = vmatprep.subr.mxu0 0.0
  %4751 = vmatpush2.msra.mxu0 0.0
  %4752 = vmatprep.subr.mxu0 0.0
  %4753 = vmatpush2.msra.mxu0 0.0
  %4754 = vmatprep.subr.mxu0 0.0
  %4755 = vmatpush2.msra.mxu0 0.0
  %4756 = vmatprep.subr.mxu0 0.0
  %4757 = vmatpush2.msra.mxu0 0.0
  %4758 = vmatprep.subr.mxu0 0.0
  %4759 = vmatpush2.msra.mxu0 0.0
  %4760 = vmatprep.subr.mxu0 0.0
  %4761 = vmatpush2.msra.mxu0 0.0
  %4762 = vmatprep.subr.mxu0 0.0
  %4763 = vmatpush2.msra.mxu0 0.0
  %4764 = vmatprep.subr.mxu0 0.0
  %4765 = vmatpush2.msra.mxu0 0.0
  %4766 = vmatprep.subr.mxu0 0.0
  %4767 = vmatpush2.msra.mxu0 0.0
  %4768 = vmatprep.subr.mxu0 0.0
  %4769 = vmatpush2.msra.mxu0 0.0
  %4770 = vmatprep.subr.mxu0 0.0
  %4771 = vmatpush2.msra.mxu0 0.0
  %4772 = vmatprep.subr.mxu0 0.0
  %4773 = vmatpush2.msra.mxu0 0.0
  %4774 = vmatprep.subr.mxu0 0.0
  %4775 = vmatpush2.msra.mxu0 0.0
  %4776 = vmatprep.mubr.f32.mxu0 0.0
  %4777 = vmatmul.mubr.f32.gmra.mxu0 %v4710
  %v4778 = vpop.f32.mrf.mxu0
  %v4779 = vadd.f32 %v4708, %v4778
  %v4780 = vpop.f32.mrf.mxu0
  %4781 = vdwg.mxu0
  %v4782 = vmax.f32 %v4779, 0.0
  %s4783 = scalar_lea.vmem %s13, 64
  %v4784 = vld [vmem:[%s4783] sm:$0xff]
  %v4785 = vld [vmem:[%s4783 + $0x8] sm:$0xff]
  %v4786 = vld [vmem:[%s4783 + $0x10] sm:$0xff]
  %v4787 = vld [vmem:[%s4783 + $0x18] sm:$0xff]
  %v4788 = vld [vmem:[%s4783 + $0x20] sm:$0xff]
  %v4789 = vld [vmem:[%s4783 + $0x28] sm:$0xff]
  %v4790 = vld [vmem:[%s4783 + $0x30] sm:$0xff]
  %v4791 = vld [vmem:[%s4783 + $0x38] sm:$0xff]
  %v4792 = vlaneseq
  %v4793 = vshrl.u32 %v4792, 7
  %v4794 = vsub.s32 5, %v4793
  %v4795 = vrot.slane %v4254, %v4794
  %v4797 = vsel %vm1935, %v4782, 0
  %4799 = vmatprep.subr.mxu0 0.0
  %4800 = vmatpush1.msra.mxu0 0.0
  %4801 = vmatprep.subr.mxu0 0.0
  %4802 = vmatpush1.msra.mxu0 0.0
  %4803 = vmatprep.subr.mxu0 0.0
  %4804 = vmatpush1.msra.mxu0 0.0
  %4805 = vmatprep.subr.mxu0 0.0
  %4806 = vmatpush1.msra.mxu0 0.0
  %4807 = vmatprep.subr.mxu0 0.0
  %4808 = vmatpush1.msra.mxu0 0.0
  %4809 = vmatprep.subr.mxu0 0.0
  %4810 = vmatpush1.msra.mxu0 0.0
  %4811 = vmatprep.subr.mxu0 0.0
  %4812 = vmatpush1.msra.mxu0 0.0
  %4813 = vmatprep.subr.mxu0 0.0
  %4814 = vmatpush1.msra.mxu0 0.0
  %4815 = vmatprep.subr.mxu0 0.0
  %4816 = vmatpush1.msra.mxu0 %v4791
  %4817 = vmatprep.subr.mxu0 0.0
  %4818 = vmatpush1.msra.mxu0 %v4790
  %4819 = vmatprep.subr.mxu0 0.0
  %4820 = vmatpush1.msra.mxu0 %v4789
  %4821 = vmatprep.subr.mxu0 0.0
  %4822 = vmatpush1.msra.mxu0 %v4788
  %4823 = vmatprep.subr.mxu0 0.0
  %4824 = vmatpush1.msra.mxu0 %v4787
  %4825 = vmatprep.subr.mxu0 0.0
  %4826 = vmatpush1.msra.mxu0 %v4786
  %4827 = vmatprep.subr.mxu0 0.0
  %4828 = vmatpush1.msra.mxu0 %v4785
  %4829 = vmatprep.subr.mxu0 0.0
  %4830 = vmatpush1.msra.mxu0 %v4784
  %4831 = vmatprep.subr.mxu0 0.0
  %4832 = vmatpush2.msra.mxu0 0.0
  %4833 = vmatprep.subr.mxu0 0.0
  %4834 = vmatpush2.msra.mxu0 0.0
  %4835 = vmatprep.subr.mxu0 0.0
  %4836 = vmatpush2.msra.mxu0 0.0
  %4837 = vmatprep.subr.mxu0 0.0
  %4838 = vmatpush2.msra.mxu0 0.0
  %4839 = vmatprep.subr.mxu0 0.0
  %4840 = vmatpush2.msra.mxu0 0.0
  %4841 = vmatprep.subr.mxu0 0.0
  %4842 = vmatpush2.msra.mxu0 0.0
  %4843 = vmatprep.subr.mxu0 0.0
  %4844 = vmatpush2.msra.mxu0 0.0
  %4845 = vmatprep.subr.mxu0 0.0
  %4846 = vmatpush2.msra.mxu0 0.0
  %4847 = vmatprep.subr.mxu0 0.0
  %4848 = vmatpush2.msra.mxu0 0.0
  %4849 = vmatprep.subr.mxu0 0.0
  %4850 = vmatpush2.msra.mxu0 0.0
  %4851 = vmatprep.subr.mxu0 0.0
  %4852 = vmatpush2.msra.mxu0 0.0
  %4853 = vmatprep.subr.mxu0 0.0
  %4854 = vmatpush2.msra.mxu0 0.0
  %4855 = vmatprep.subr.mxu0 0.0
  %4856 = vmatpush2.msra.mxu0 0.0
  %4857 = vmatprep.subr.mxu0 0.0
  %4858 = vmatpush2.msra.mxu0 0.0
  %4859 = vmatprep.subr.mxu0 0.0
  %4860 = vmatpush2.msra.mxu0 0.0
  %4861 = vmatprep.subr.mxu0 0.0
  %4862 = vmatpush2.msra.mxu0 0.0
  %4863 = vmatprep.mubr.f32.mxu0 0.0
  %4864 = vmatmul.mubr.f32.gmra.mxu0 %v4797
  %v4865 = vpop.f32.mrf.mxu0
  %v4866 = vadd.f32 %v4795, %v4865
  %v4867 = vpop.f32.mrf.mxu0
  %4868 = vdwg.mxu0
  %v4869 = vadd.f32 %v4699, %v4866
  %v4870 = vsel %vm346, %v4869, 0.0
  %4871 = vadd.xlane.f32.xlu0 %v4870
  %v4872 = vpop.xlane.xlu0 %4871
  %v4873 = vmul.f32 %v4872, %v359
  %v4874 = vsub.f32 %v4869, %v4873
  %v4875 = vmul.f32 %v4874, %v4874
  %v4876 = vsel %vm346, %v4875, 0.0
  %4877 = vadd.xlane.f32.xlu0 %v4876
  %v4878 = vpop.xlane.xlu0 %4877
  %v4879 = vmul.f32 %v4878, %v359
  %v4880 = vadd.f32 %v4879, 1e-05
  %v4881 = vrsqrt.pop %v4880
  %v4882 = vmul.f32 %v4874, %v4881
  %v4883 = vlaneseq
  %v4884 = vshrl.u32 %v4883, 7
  %v4885 = vsub.s32 6, %v4884
  %v4886 = vrot.slane %v4254, %v4885
  %v4887 = vmul.f32 %v4882, %v4886
  %v4888 = vlaneseq
  %v4889 = vshrl.u32 %v4888, 7
  %v4890 = vsub.s32 7, %v4889
  %v4891 = vrot.slane %v4254, %v4890
  %v4892 = vadd.f32 %v4887, %v4891
  %v4893 = vld [vmem:[%s1 + $0x5e] sm:$0x1]
  %v4894 = vld [vmem:[%s1 + $0x5f] sm:$0x1]
  %v4895 = vsel %vm346, %v4892, 0.0
  %4896 = vadd.xlane.f32.xlu0 %v4895
  %v4897 = vpop.xlane.xlu0 %4896
  %v4898 = vmul.f32 %v4897, %v359
  %v4899 = vsub.f32 %v4892, %v4898
  %v4900 = vmul.f32 %v4899, %v4899
  %v4901 = vsel %vm346, %v4900, 0.0
  %4902 = vadd.xlane.f32.xlu0 %v4901
  %v4903 = vpop.xlane.xlu0 %4902
  %v4904 = vmul.f32 %v4903, %v359
  %v4905 = vadd.f32 %v4904, 1e-06
  %v4906 = vrsqrt.pop %v4905
  %v4907 = vmul.f32 %v4899, %v4906
  %v4908 = vlaneseq
  %v4909 = vshrl.u32 %v4908, 7
  %v4910 = vsub.s32 0, %v4909
  %v4911 = vrot.slane %v4893, %v4910
  %v4912 = vmul.f32 %v4907, %v4911
  %v4913 = vlaneseq
  %v4914 = vshrl.u32 %v4913, 7
  %v4915 = vsub.s32 0, %v4914
  %v4916 = vrot.slane %v4894, %v4915
  %v4917 = vadd.f32 %v4912, %v4916
  %v4918 = vld [vmem:[%s1 + $0x60] sm:$0x1]
  %v4919 = vld [vmem:[%s1 + $0x61] sm:$0x1]
  %v4920 = vlaneseq
  %v4921 = vshrl.u32 %v4920, 7
  %v4922 = vsub.s32 0, %v4921
  %v4923 = vrot.slane %v4918, %v4922
  %v4924 = vmul.f32 %v4917, %v4923
  %v4925 = vsel %vm346, %v4924, 0.0
  %4926 = vadd.xlane.f32.xlu0 %v4925
  %v4927 = vpop.xlane.xlu0 %4926
  %v4928 = vlaneseq
  %v4929 = vshrl.u32 %v4928, 7
  %v4930 = vsub.s32 0, %v4929
  %v4931 = vrot.slane %v4919, %v4930
  %v4932 = vadd.f32 %v4927, %v4931
  %v4933 = vxor.u32 %v4932, 2147483648
  %v4934 = vmul.f32 %v4933, 1.442695
  %v4935 = vpow.pop %v4934
  %v4936 = vadd.f32 %v4935, 1.0
  %v4937 = vrcp.pop %v4936
  %v4938 = vmul.f32 1.0, %v4937
  %v4939 = vmul.f32 %v4938, %v3507
  %vm4940 = vcmask 7168
  %4941 = vst.msk [vmem:[%s15] sm:$0xff] %vm4940, %v4939
  // Predicated region
  $region62: #{forward.1} parent=0 // pred_check
    _
  $region63: #{forward.1} parent=0 // pred_check_branch
    %4943 = sbr.rel (0) target = $region65
  $region64: #{forward.1} parent=0 // pred_region
    _
  $region65: #{forward.1} parent=0 // pred_fallthru
    _
  // Predicated region
  $region66: #{forward.1} parent=0 // pred_check
    _
  $region67: #{forward.1} parent=0 // pred_check_branch
    %4945 = sbr.rel (0) target = $region69
  $region68: #{forward.1} parent=0 // pred_region
    _
  $region69: #{forward.1} parent=0 // pred_fallthru
    _

</llo_original>
